<compile_context>
chip_gen: v7x
topology: tpu7x:2x2x1
jax: 0.10.0
libtpu: 0.0.40
codegen_flags: <defaults>
</compile_context>

<pallas_src>
import jax
import jax.numpy as jnp
import numpy as np
from jax.experimental import pallas as pl
from jax.experimental.pallas import tpu as pltpu


def _round_up(a, m):
    return (a + m - 1) // m * m


# ------------------------------ Pallas kernel ------------------------------ #

def _encoder_kernel(x_ref, a1_ref, b1t_ref, a2_ref, b2t_ref,
                    wf1_ref, bf1_ref, wf2_ref, bf2_ref, o_ref):
    """Whole MNIST_encoder forward for one batch tile of TB images.

    x_ref  : (TB, 28, 28) f32   input images
    a1_ref : (5, 28, 256) bf16  conv1 band matrices, lane = a*128 + jj*10 + c (j=2jj+a)
    b1t_ref: (1, 128) f32       conv1 bias tiled over 12 pooled cols (lanes 120..127 = 0)
    a2_ref : (5, 128, 256) bf16 conv2 band matrices, lane = a*128 + tt*20 + d (t=2tt+a)
    b2t_ref: (1, 128) f32       conv2 bias tiled over 4 pooled cols (lanes 80..127 = 0)
    wf1_ref: (4, 128, 256) bf16 fc1 weight with the torch NCHW flatten folded in
    bf1_ref: (1, 256) f32, wf2_ref: (256, HP) bf16, bf2_ref: (1, HP) f32
    o_ref  : (TB, HP) f32       HP = h_dim padded to a multiple of 128 lanes
    """
    TB = x_ref.shape[0]
    f32 = jnp.float32
    bf16 = jnp.bfloat16

    # ---- conv1 (1->10, 5x5, valid): 5 banded MXU matmuls over the column axis.
    # N packs (col-parity | pooled-col | channel) with the parity blocks 128-lane
    # aligned, so the column pool below is a pure VPU max of two vreg blocks.
    def conv1_slab(di):
        return x_ref[:, di:di + 24, :].reshape(TB * 24, 28).astype(bf16)

    acc1 = jnp.dot(conv1_slab(0), a1_ref[0], preferred_element_type=f32)
    for di in range(1, 5):
        acc1 = acc1 + jnp.dot(conv1_slab(di), a1_ref[di], preferred_element_type=f32)
    m1 = jnp.maximum(acc1[:, :128], acc1[:, 128:])          # 2x1 column pool (VPU)
    y1 = jnp.max(m1.reshape(TB, 12, 2, 128), axis=2)        # 1x2 row pool
    y1 = jnp.maximum(y1 + b1t_ref[...], 0.0)                # bias/relu commute w/ pool

    # ---- conv2 (10->20, 5x5, valid); Dropout2d is identity at inference ----
    # TODO(synk): training-mode nn.Dropout2d (per-channel masking) not implemented.
    def conv2_slab(di):
        return y1[:, di:di + 8, :].reshape(TB * 8, 128).astype(bf16)

    acc2 = jnp.dot(conv2_slab(0), a2_ref[0], preferred_element_type=f32)
    for di in range(1, 5):
        acc2 = acc2 + jnp.dot(conv2_slab(di), a2_ref[di], preferred_element_type=f32)
    m2 = jnp.maximum(acc2[:, :128], acc2[:, 128:])          # 2x1 column pool (VPU)
    y2 = jnp.max(m2.reshape(TB, 4, 2, 128), axis=2)         # 1x2 row pool
    y2 = jnp.maximum(y2 + b2t_ref[...], 0.0)                # (TB, 4, 128)

    # ---- fc1 -> relu -> (dropout: identity at eval) -> fc2 ----
    # torch view(-1, 320) on NCHW is folded into wf1 (one slab per pooled row sp).
    # TODO(synk): training-mode F.dropout (stochastic, pltpu.prng_*) not implemented.
    h = jnp.dot(y2[:, 0, :].astype(bf16), wf1_ref[0], preferred_element_type=f32)
    for sp in range(1, 4):
        h = h + jnp.dot(y2[:, sp, :].astype(bf16), wf1_ref[sp],
                        preferred_element_type=f32)
    h = jnp.maximum(h + bf1_ref[...], 0.0)                  # (TB, 256)
    o_ref[...] = (jnp.dot(h.astype(bf16), wf2_ref[...], preferred_element_type=f32)
                  + bf2_ref[...]).astype(o_ref.dtype)


# ------------------------ one-time weight repacking ------------------------ #

def prepare_params(params):
    """Repack torch-layout weights into MXU-friendly, 128-lane-aligned band/permuted
    matrices (bf16).  Called ONCE outside the forward."""
    w1 = np.asarray(params['w1'], np.float32)      # (10, 1, 5, 5)
    b1 = np.asarray(params['b1'], np.float32)      # (10,)
    w2 = np.asarray(params['w2'], np.float32)      # (20, 10, 5, 5)
    b2 = np.asarray(params['b2'], np.float32)      # (20,)
    wf1 = np.asarray(params['w_fc1'], np.float32)  # (256, 320)
    bf1 = np.asarray(params['b_fc1'], np.float32)  # (256,)
    wf2 = np.asarray(params['w_fc2'], np.float32)  # (h, 256)
    bf2 = np.asarray(params['b_fc2'], np.float32)  # (h,)
    h_dim = wf2.shape[0]
    hd_pad = _round_up(max(h_dim, 1), 128)

    # conv1 band matrices: A1[di, j', a*128 + jj*10 + c] = w1[c, 0, di, j'-j],
    # with conv output column j = 2*jj + a and 0 <= j'-j < 5.  Lanes 120..127 and
    # 248..255 stay zero (parity blocks padded to full vregs).
    a1 = np.zeros((5, 28, 256), np.float32)
    for di in range(5):
        for jj in range(12):
            for a in range(2):
                j = 2 * jj + a
                base = a * 128 + jj * 10
                for dj in range(5):
                    a1[di, j + dj, base:base + 10] = w1[:, 0, di, dj]
    b1t = np.zeros((1, 128), np.float32)
    b1t[0, :120] = np.tile(b1, 12)

    # conv2 band matrices: input lane = q*10 + c, output lane = a*128 + tt*20 + d,
    # with conv output column t = 2*tt + a and q = t + dj.  Rows 120..127 zero.
    a2 = np.zeros((5, 128, 256), np.float32)
    for di in range(5):
        for tt in range(4):
            for a in range(2):
                t = 2 * tt + a
                base = a * 128 + tt * 20
                for dj in range(5):
                    q = t + dj
                    for c in range(10):
                        a2[di, q * 10 + c, base:base + 20] = w2[:, c, di, dj]
    b2t = np.zeros((1, 128), np.float32)
    b2t[0, :80] = np.tile(b2, 4)

    # fc1 with the torch NCHW flatten (k = d*16 + sp*4 + tp) folded in; rows 80..127
    # are zero so the padded y2 lanes contribute nothing.
    wf1p = np.zeros((4, 128, 256), np.float32)
    for sp in range(4):
        for tp in range(4):
            for d in range(20):
                wf1p[sp, tp * 20 + d, :] = wf1[:, d * 16 + sp * 4 + tp]

    # fc2 zero-padded to a lane-dense (multiple of 128) output width.
    wf2p = np.zeros((256, hd_pad), np.float32)
    wf2p[:, :h_dim] = wf2.T
    bf2p = np.zeros((1, hd_pad), np.float32)
    bf2p[0, :h_dim] = bf2

    return {
        'a1': jnp.asarray(a1).astype(jnp.bfloat16),
        'b1t': jnp.asarray(b1t),
        'a2': jnp.asarray(a2).astype(jnp.bfloat16),
        'b2t': jnp.asarray(b2t),
        'wf1p': jnp.asarray(wf1p).astype(jnp.bfloat16),
        'bf1': jnp.asarray(bf1.reshape(1, 256)),
        'wf2': jnp.asarray(wf2p).astype(jnp.bfloat16),
        'bf2': jnp.asarray(bf2p),
        'h_dim': h_dim,
    }


# ------------------------------- forward ----------------------------------- #

def mnist_encoder_forward(x, prepped, *, block_b=128):
    """x: (B, 28, 28) float32 -> (B, h_dim) float32 (inference mode)."""
    B = x.shape[0]
    hd_pad = prepped['wf2'].shape[1]
    h_dim = prepped['h_dim']

    # Batch tile: multiple of 8 (full sublanes), <= block_b, and reduced so the grid
    # has at least two steps whenever the batch allows it (v7x megacore: both
    # TensorCores must get a grid step to benefit from "parallel").
    b8 = _round_up(B, 8)
    tb = max(8, (min(block_b, b8) // 8) * 8)
    if b8 >= 16 and tb > b8 // 2:
        tb = _round_up(b8 // 2, 8)
    Bp = _round_up(B, tb)
    if Bp != B:  # pad batch; padded rows produce garbage and are sliced off below
        x = jnp.concatenate([x, jnp.zeros((Bp - B, 28, 28), x.dtype)], axis=0)

    out = pl.pallas_call(
        _encoder_kernel,
        out_shape=jax.ShapeDtypeStruct((Bp, hd_pad), jnp.float32),
        grid=(Bp // tb,),
        in_specs=[
            pl.BlockSpec((tb, 28, 28), lambda b: (b, 0, 0)),     # x (batch-tiled)
            pl.BlockSpec((5, 28, 256), lambda b: (0, 0, 0)),     # a1   (bf16)
            pl.BlockSpec((1, 128), lambda b: (0, 0)),            # b1t
            pl.BlockSpec((5, 128, 256), lambda b: (0, 0, 0)),    # a2   (bf16)
            pl.BlockSpec((1, 128), lambda b: (0, 0)),            # b2t
            pl.BlockSpec((4, 128, 256), lambda b: (0, 0, 0)),    # wf1p (bf16)
            pl.BlockSpec((1, 256), lambda b: (0, 0)),            # bf1
            pl.BlockSpec((256, hd_pad), lambda b: (0, 0)),       # wf2  (bf16)
            pl.BlockSpec((1, hd_pad), lambda b: (0, 0)),         # bf2
        ],
        out_specs=pl.BlockSpec((tb, hd_pad), lambda b: (b, 0)),
        compiler_params=pltpu.CompilerParams(
            dimension_semantics=("parallel",),        # megacore split over batch
            vmem_limit_bytes=48 * 1024 * 1024,        # <= v7x 64 MiB physical VMEM
        ),
    )(x, prepped['a1'], prepped['b1t'], prepped['a2'], prepped['b2t'],
      prepped['wf1p'], prepped['bf1'], prepped['wf2'], prepped['bf2'])

    return out[:B, :h_dim]


# --------------------------- pure-JAX reference ----------------------------- #

def reference_forward(x, params):
    hi = jax.lax.Precision.HIGHEST
    xi = x[:, None, :, :]
    y = jax.lax.conv_general_dilated(
        xi, params['w1'], (1, 1), 'VALID',
        dimension_numbers=('NCHW', 'OIHW', 'NCHW'), precision=hi)
    y = y + params['b1'][None, :, None, None]
    y = jax.lax.reduce_window(y, -jnp.inf, jax.lax.max,
                              (1, 1, 2, 2), (1, 1, 2, 2), 'VALID')
    y = jnp.maximum(y, 0.0)
    y = jax.lax.conv_general_dilated(
        y, params['w2'], (1, 1), 'VALID',
        dimension_numbers=('NCHW', 'OIHW', 'NCHW'), precision=hi)
    y = y + params['b2'][None, :, None, None]
    y = jax.lax.reduce_window(y, -jnp.inf, jax.lax.max,
                              (1, 1, 2, 2), (1, 1, 2, 2), 'VALID')
    y = jnp.maximum(y, 0.0)
    y = y.reshape(y.shape[0], -1)
    y = jnp.maximum(jnp.dot(y, params['w_fc1'].T, precision=hi) + params['b_fc1'], 0.0)
    y = jnp.dot(y, params['w_fc2'].T, precision=hi) + params['b_fc2']
    return y


# --------------------------------- main ------------------------------------ #

if __name__ == "__main__":
    h_dim = 32
    B = 16  # "B * N" flattened batch; small demo -> 2 grid steps (exercises megacore)

    key = jax.random.PRNGKey(0)
    ks = jax.random.split(key, 9)
    params = {
        'w1':    0.10 * jax.random.normal(ks[0], (10, 1, 5, 5), jnp.float32),
        'b1':    0.10 * jax.random.normal(ks[1], (10,), jnp.float32),
        'w2':    0.10 * jax.random.normal(ks[2], (20, 10, 5, 5), jnp.float32),
        'b2':    0.10 * jax.random.normal(ks[3], (20,), jnp.float32),
        'w_fc1': 0.05 * jax.random.normal(ks[4], (256, 320), jnp.float32),
        'b_fc1': 0.05 * jax.random.normal(ks[5], (256,), jnp.float32),
        'w_fc2': 0.05 * jax.random.normal(ks[6], (h_dim, 256), jnp.float32),
        'b_fc2': 0.05 * jax.random.normal(ks[7], (h_dim,), jnp.float32),
    }
    x = jax.random.normal(ks[8], (B, 28, 28), jnp.float32)

    prepped = prepare_params(params)   # one-time host-side weight repack

    out = jax.block_until_ready(mnist_encoder_forward(x, prepped))
    ref = jax.block_until_ready(reference_forward(x, params))

    assert out.shape == (B, h_dim)
    np.testing.assert_allclose(np.asarray(out), np.asarray(ref), rtol=2e-2, atol=2e-2)
    print("KERNEL_OK")
</pallas_src>

<mosaic_0001>
module attributes {stable_mosaic.version = 11 : i64} {
  func.func @_encoder_kernel(%arg0: i32, %arg1: memref<8x28x28xf32, #tpu.memory_space<vmem>>, %arg2: memref<5x28x256xbf16, #tpu.memory_space<vmem>>, %arg3: memref<1x128xf32, #tpu.memory_space<vmem>>, %arg4: memref<5x128x256xbf16, #tpu.memory_space<vmem>>, %arg5: memref<1x128xf32, #tpu.memory_space<vmem>>, %arg6: memref<4x128x256xbf16, #tpu.memory_space<vmem>>, %arg7: memref<1x256xf32, #tpu.memory_space<vmem>>, %arg8: memref<256x128xbf16, #tpu.memory_space<vmem>>, %arg9: memref<1x128xf32, #tpu.memory_space<vmem>>, %arg10: memref<8x128xf32, #tpu.memory_space<vmem>>) attributes {dimension_semantics = [#tpu.dimension_semantics<parallel>], iteration_bounds = array<i64: 2>, scalar_prefetch = 0 : i64, scratch_operands = 0 : i64, tpu.core_type = #tpu.core_type<tc>, window_params = [{transform_indices = @transform_0, window_bounds = array<i64: 8, 28, 28>}, {pipeline_mode = #tpu.pipeline_mode<synchronous>, transform_indices = @transform_1, window_bounds = array<i64: 5, 28, 256>}, {pipeline_mode = #tpu.pipeline_mode<synchronous>, transform_indices = @transform_2, window_bounds = array<i64: 1, 128>}, {pipeline_mode = #tpu.pipeline_mode<synchronous>, transform_indices = @transform_3, window_bounds = array<i64: 5, 128, 256>}, {pipeline_mode = #tpu.pipeline_mode<synchronous>, transform_indices = @transform_4, window_bounds = array<i64: 1, 128>}, {pipeline_mode = #tpu.pipeline_mode<synchronous>, transform_indices = @transform_5, window_bounds = array<i64: 4, 128, 256>}, {pipeline_mode = #tpu.pipeline_mode<synchronous>, transform_indices = @transform_6, window_bounds = array<i64: 1, 256>}, {pipeline_mode = #tpu.pipeline_mode<synchronous>, transform_indices = @transform_7, window_bounds = array<i64: 256, 128>}, {pipeline_mode = #tpu.pipeline_mode<synchronous>, transform_indices = @transform_8, window_bounds = array<i64: 1, 128>}, {transform_indices = @transform_9, window_bounds = array<i64: 8, 128>}]} {
    %c0 = arith.constant 0 : index
    %c0_0 = arith.constant 0 : index
    %c0_1 = arith.constant 0 : index
    %0 = vector.load %arg1[%c0, %c0_0, %c0_1] : memref<8x28x28xf32, #tpu.memory_space<vmem>>, vector<8x24x28xf32>
    %1 = vector.shape_cast %0 : vector<8x24x28xf32> to vector<192x28xf32>
    %2 = arith.truncf %1 : vector<192x28xf32> to vector<192x28xbf16>
    %c0_2 = arith.constant 0 : index
    %c0_3 = arith.constant 0 : index
    %c0_4 = arith.constant 0 : index
    %3 = vector.load %arg2[%c0_2, %c0_3, %c0_4] : memref<5x28x256xbf16, #tpu.memory_space<vmem>>, vector<1x28x256xbf16>
    %4 = vector.shape_cast %3 : vector<1x28x256xbf16> to vector<28x256xbf16>
    %cst = arith.constant dense<0.000000e+00> : vector<192x256xf32>
    %5 = tpu.matmul %2, %4, %cst {dimension_numbers = #tpu.dot_dimension_numbers<[1], [0], [0], [1], [0, 0, 1, 1], [], []>} : vector<192x28xbf16>, vector<28x256xbf16>, vector<192x256xf32> -> vector<192x256xf32>
    %c0_5 = arith.constant 0 : index
    %c1 = arith.constant 1 : index
    %c0_6 = arith.constant 0 : index
    %6 = vector.load %arg1[%c0_5, %c1, %c0_6] : memref<8x28x28xf32, #tpu.memory_space<vmem>>, vector<8x24x28xf32>
    %7 = vector.shape_cast %6 : vector<8x24x28xf32> to vector<192x28xf32>
    %8 = arith.truncf %7 : vector<192x28xf32> to vector<192x28xbf16>
    %c1_7 = arith.constant 1 : index
    %c0_8 = arith.constant 0 : index
    %c0_9 = arith.constant 0 : index
    %9 = vector.load %arg2[%c1_7, %c0_8, %c0_9] : memref<5x28x256xbf16, #tpu.memory_space<vmem>>, vector<1x28x256xbf16>
    %10 = vector.shape_cast %9 : vector<1x28x256xbf16> to vector<28x256xbf16>
    %cst_10 = arith.constant dense<0.000000e+00> : vector<192x256xf32>
    %11 = tpu.matmul %8, %10, %cst_10 {dimension_numbers = #tpu.dot_dimension_numbers<[1], [0], [0], [1], [0, 0, 1, 1], [], []>} : vector<192x28xbf16>, vector<28x256xbf16>, vector<192x256xf32> -> vector<192x256xf32>
    %12 = arith.addf %5, %11 : vector<192x256xf32>
    %c0_11 = arith.constant 0 : index
    %c2 = arith.constant 2 : index
    %c0_12 = arith.constant 0 : index
    %13 = vector.load %arg1[%c0_11, %c2, %c0_12] : memref<8x28x28xf32, #tpu.memory_space<vmem>>, vector<8x24x28xf32>
    %14 = vector.shape_cast %13 : vector<8x24x28xf32> to vector<192x28xf32>
    %15 = arith.truncf %14 : vector<192x28xf32> to vector<192x28xbf16>
    %c2_13 = arith.constant 2 : index
    %c0_14 = arith.constant 0 : index
    %c0_15 = arith.constant 0 : index
    %16 = vector.load %arg2[%c2_13, %c0_14, %c0_15] : memref<5x28x256xbf16, #tpu.memory_space<vmem>>, vector<1x28x256xbf16>
    %17 = vector.shape_cast %16 : vector<1x28x256xbf16> to vector<28x256xbf16>
    %cst_16 = arith.constant dense<0.000000e+00> : vector<192x256xf32>
    %18 = tpu.matmul %15, %17, %cst_16 {dimension_numbers = #tpu.dot_dimension_numbers<[1], [0], [0], [1], [0, 0, 1, 1], [], []>} : vector<192x28xbf16>, vector<28x256xbf16>, vector<192x256xf32> -> vector<192x256xf32>
    %19 = arith.addf %12, %18 : vector<192x256xf32>
    %c0_17 = arith.constant 0 : index
    %c3 = arith.constant 3 : index
    %c0_18 = arith.constant 0 : index
    %20 = vector.load %arg1[%c0_17, %c3, %c0_18] : memref<8x28x28xf32, #tpu.memory_space<vmem>>, vector<8x24x28xf32>
    %21 = vector.shape_cast %20 : vector<8x24x28xf32> to vector<192x28xf32>
    %22 = arith.truncf %21 : vector<192x28xf32> to vector<192x28xbf16>
    %c3_19 = arith.constant 3 : index
    %c0_20 = arith.constant 0 : index
    %c0_21 = arith.constant 0 : index
    %23 = vector.load %arg2[%c3_19, %c0_20, %c0_21] : memref<5x28x256xbf16, #tpu.memory_space<vmem>>, vector<1x28x256xbf16>
    %24 = vector.shape_cast %23 : vector<1x28x256xbf16> to vector<28x256xbf16>
    %cst_22 = arith.constant dense<0.000000e+00> : vector<192x256xf32>
    %25 = tpu.matmul %22, %24, %cst_22 {dimension_numbers = #tpu.dot_dimension_numbers<[1], [0], [0], [1], [0, 0, 1, 1], [], []>} : vector<192x28xbf16>, vector<28x256xbf16>, vector<192x256xf32> -> vector<192x256xf32>
    %26 = arith.addf %19, %25 : vector<192x256xf32>
    %c0_23 = arith.constant 0 : index
    %c4 = arith.constant 4 : index
    %c0_24 = arith.constant 0 : index
    %27 = vector.load %arg1[%c0_23, %c4, %c0_24] : memref<8x28x28xf32, #tpu.memory_space<vmem>>, vector<8x24x28xf32>
    %28 = vector.shape_cast %27 : vector<8x24x28xf32> to vector<192x28xf32>
    %29 = arith.truncf %28 : vector<192x28xf32> to vector<192x28xbf16>
    %c4_25 = arith.constant 4 : index
    %c0_26 = arith.constant 0 : index
    %c0_27 = arith.constant 0 : index
    %30 = vector.load %arg2[%c4_25, %c0_26, %c0_27] : memref<5x28x256xbf16, #tpu.memory_space<vmem>>, vector<1x28x256xbf16>
    %31 = vector.shape_cast %30 : vector<1x28x256xbf16> to vector<28x256xbf16>
    %cst_28 = arith.constant dense<0.000000e+00> : vector<192x256xf32>
    %32 = tpu.matmul %29, %31, %cst_28 {dimension_numbers = #tpu.dot_dimension_numbers<[1], [0], [0], [1], [0, 0, 1, 1], [], []>} : vector<192x28xbf16>, vector<28x256xbf16>, vector<192x256xf32> -> vector<192x256xf32>
    %33 = arith.addf %26, %32 : vector<192x256xf32>
    %34 = vector.extract_strided_slice %33 {offsets = [0, 0], sizes = [192, 128], strides = [1, 1]} : vector<192x256xf32> to vector<192x128xf32>
    %35 = vector.extract_strided_slice %33 {offsets = [0, 128], sizes = [192, 128], strides = [1, 1]} : vector<192x256xf32> to vector<192x128xf32>
    %36 = arith.maximumf %34, %35 : vector<192x128xf32>
    %37 = vector.shape_cast %36 : vector<192x128xf32> to vector<8x12x2x128xf32>
    %cst_29 = arith.constant dense<0xFF800000> : vector<8x12x128xf32>
    %38 = vector.multi_reduction <maximumf>, %37, %cst_29 [2] : vector<8x12x2x128xf32> to vector<8x12x128xf32>
    %c0_30 = arith.constant 0 : index
    %c0_31 = arith.constant 0 : index
    %39 = vector.load %arg3[%c0_30, %c0_31] : memref<1x128xf32, #tpu.memory_space<vmem>>, vector<1x128xf32>
    %40 = vector.shape_cast %39 : vector<1x128xf32> to vector<1x1x128xf32>
    %41 = vector.broadcast %40 : vector<1x1x128xf32> to vector<8x12x128xf32>
    %42 = arith.addf %38, %41 : vector<8x12x128xf32>
    %cst_32 = arith.constant 0.000000e+00 : f32
    %43 = vector.broadcast %cst_32 : f32 to vector<8x12x128xf32>
    %44 = arith.maximumf %42, %43 : vector<8x12x128xf32>
    %45 = vector.extract_strided_slice %44 {offsets = [0, 0, 0], sizes = [8, 8, 128], strides = [1, 1, 1]} : vector<8x12x128xf32> to vector<8x8x128xf32>
    %46 = vector.shape_cast %45 : vector<8x8x128xf32> to vector<64x128xf32>
    %47 = arith.truncf %46 : vector<64x128xf32> to vector<64x128xbf16>
    %c0_33 = arith.constant 0 : index
    %c0_34 = arith.constant 0 : index
    %c0_35 = arith.constant 0 : index
    %48 = vector.load %arg4[%c0_33, %c0_34, %c0_35] : memref<5x128x256xbf16, #tpu.memory_space<vmem>>, vector<1x128x256xbf16>
    %49 = vector.shape_cast %48 : vector<1x128x256xbf16> to vector<128x256xbf16>
    %cst_36 = arith.constant dense<0.000000e+00> : vector<64x256xf32>
    %50 = tpu.matmul %47, %49, %cst_36 {dimension_numbers = #tpu.dot_dimension_numbers<[1], [0], [0], [1], [0, 0, 1, 1], [], []>} : vector<64x128xbf16>, vector<128x256xbf16>, vector<64x256xf32> -> vector<64x256xf32>
    %51 = vector.extract_strided_slice %44 {offsets = [0, 1, 0], sizes = [8, 8, 128], strides = [1, 1, 1]} : vector<8x12x128xf32> to vector<8x8x128xf32>
    %52 = vector.shape_cast %51 : vector<8x8x128xf32> to vector<64x128xf32>
    %53 = arith.truncf %52 : vector<64x128xf32> to vector<64x128xbf16>
    %c1_37 = arith.constant 1 : index
    %c0_38 = arith.constant 0 : index
    %c0_39 = arith.constant 0 : index
    %54 = vector.load %arg4[%c1_37, %c0_38, %c0_39] : memref<5x128x256xbf16, #tpu.memory_space<vmem>>, vector<1x128x256xbf16>
    %55 = vector.shape_cast %54 : vector<1x128x256xbf16> to vector<128x256xbf16>
    %cst_40 = arith.constant dense<0.000000e+00> : vector<64x256xf32>
    %56 = tpu.matmul %53, %55, %cst_40 {dimension_numbers = #tpu.dot_dimension_numbers<[1], [0], [0], [1], [0, 0, 1, 1], [], []>} : vector<64x128xbf16>, vector<128x256xbf16>, vector<64x256xf32> -> vector<64x256xf32>
    %57 = arith.addf %50, %56 : vector<64x256xf32>
    %58 = vector.extract_strided_slice %44 {offsets = [0, 2, 0], sizes = [8, 8, 128], strides = [1, 1, 1]} : vector<8x12x128xf32> to vector<8x8x128xf32>
    %59 = vector.shape_cast %58 : vector<8x8x128xf32> to vector<64x128xf32>
    %60 = arith.truncf %59 : vector<64x128xf32> to vector<64x128xbf16>
    %c2_41 = arith.constant 2 : index
    %c0_42 = arith.constant 0 : index
    %c0_43 = arith.constant 0 : index
    %61 = vector.load %arg4[%c2_41, %c0_42, %c0_43] : memref<5x128x256xbf16, #tpu.memory_space<vmem>>, vector<1x128x256xbf16>
    %62 = vector.shape_cast %61 : vector<1x128x256xbf16> to vector<128x256xbf16>
    %cst_44 = arith.constant dense<0.000000e+00> : vector<64x256xf32>
    %63 = tpu.matmul %60, %62, %cst_44 {dimension_numbers = #tpu.dot_dimension_numbers<[1], [0], [0], [1], [0, 0, 1, 1], [], []>} : vector<64x128xbf16>, vector<128x256xbf16>, vector<64x256xf32> -> vector<64x256xf32>
    %64 = arith.addf %57, %63 : vector<64x256xf32>
    %65 = vector.extract_strided_slice %44 {offsets = [0, 3, 0], sizes = [8, 8, 128], strides = [1, 1, 1]} : vector<8x12x128xf32> to vector<8x8x128xf32>
    %66 = vector.shape_cast %65 : vector<8x8x128xf32> to vector<64x128xf32>
    %67 = arith.truncf %66 : vector<64x128xf32> to vector<64x128xbf16>
    %c3_45 = arith.constant 3 : index
    %c0_46 = arith.constant 0 : index
    %c0_47 = arith.constant 0 : index
    %68 = vector.load %arg4[%c3_45, %c0_46, %c0_47] : memref<5x128x256xbf16, #tpu.memory_space<vmem>>, vector<1x128x256xbf16>
    %69 = vector.shape_cast %68 : vector<1x128x256xbf16> to vector<128x256xbf16>
    %cst_48 = arith.constant dense<0.000000e+00> : vector<64x256xf32>
    %70 = tpu.matmul %67, %69, %cst_48 {dimension_numbers = #tpu.dot_dimension_numbers<[1], [0], [0], [1], [0, 0, 1, 1], [], []>} : vector<64x128xbf16>, vector<128x256xbf16>, vector<64x256xf32> -> vector<64x256xf32>
    %71 = arith.addf %64, %70 : vector<64x256xf32>
    %72 = vector.extract_strided_slice %44 {offsets = [0, 4, 0], sizes = [8, 8, 128], strides = [1, 1, 1]} : vector<8x12x128xf32> to vector<8x8x128xf32>
    %73 = vector.shape_cast %72 : vector<8x8x128xf32> to vector<64x128xf32>
    %74 = arith.truncf %73 : vector<64x128xf32> to vector<64x128xbf16>
    %c4_49 = arith.constant 4 : index
    %c0_50 = arith.constant 0 : index
    %c0_51 = arith.constant 0 : index
    %75 = vector.load %arg4[%c4_49, %c0_50, %c0_51] : memref<5x128x256xbf16, #tpu.memory_space<vmem>>, vector<1x128x256xbf16>
    %76 = vector.shape_cast %75 : vector<1x128x256xbf16> to vector<128x256xbf16>
    %cst_52 = arith.constant dense<0.000000e+00> : vector<64x256xf32>
    %77 = tpu.matmul %74, %76, %cst_52 {dimension_numbers = #tpu.dot_dimension_numbers<[1], [0], [0], [1], [0, 0, 1, 1], [], []>} : vector<64x128xbf16>, vector<128x256xbf16>, vector<64x256xf32> -> vector<64x256xf32>
    %78 = arith.addf %71, %77 : vector<64x256xf32>
    %79 = vector.extract_strided_slice %78 {offsets = [0, 0], sizes = [64, 128], strides = [1, 1]} : vector<64x256xf32> to vector<64x128xf32>
    %80 = vector.extract_strided_slice %78 {offsets = [0, 128], sizes = [64, 128], strides = [1, 1]} : vector<64x256xf32> to vector<64x128xf32>
    %81 = arith.maximumf %79, %80 : vector<64x128xf32>
    %82 = vector.shape_cast %81 : vector<64x128xf32> to vector<8x4x2x128xf32>
    %cst_53 = arith.constant dense<0xFF800000> : vector<8x4x128xf32>
    %83 = vector.multi_reduction <maximumf>, %82, %cst_53 [2] : vector<8x4x2x128xf32> to vector<8x4x128xf32>
    %c0_54 = arith.constant 0 : index
    %c0_55 = arith.constant 0 : index
    %84 = vector.load %arg5[%c0_54, %c0_55] : memref<1x128xf32, #tpu.memory_space<vmem>>, vector<1x128xf32>
    %85 = vector.shape_cast %84 : vector<1x128xf32> to vector<1x1x128xf32>
    %86 = vector.broadcast %85 : vector<1x1x128xf32> to vector<8x4x128xf32>
    %87 = arith.addf %83, %86 : vector<8x4x128xf32>
    %cst_56 = arith.constant 0.000000e+00 : f32
    %88 = vector.broadcast %cst_56 : f32 to vector<8x4x128xf32>
    %89 = arith.maximumf %87, %88 : vector<8x4x128xf32>
    %90 = vector.extract_strided_slice %89 {offsets = [0, 0, 0], sizes = [8, 1, 128], strides = [1, 1, 1]} : vector<8x4x128xf32> to vector<8x1x128xf32>
    %91 = vector.shape_cast %90 : vector<8x1x128xf32> to vector<8x128xf32>
    %92 = arith.truncf %91 : vector<8x128xf32> to vector<8x128xbf16>
    %c0_57 = arith.constant 0 : index
    %c0_58 = arith.constant 0 : index
    %c0_59 = arith.constant 0 : index
    %93 = vector.load %arg6[%c0_57, %c0_58, %c0_59] : memref<4x128x256xbf16, #tpu.memory_space<vmem>>, vector<1x128x256xbf16>
    %94 = vector.shape_cast %93 : vector<1x128x256xbf16> to vector<128x256xbf16>
    %cst_60 = arith.constant dense<0.000000e+00> : vector<8x256xf32>
    %95 = tpu.matmul %92, %94, %cst_60 {dimension_numbers = #tpu.dot_dimension_numbers<[1], [0], [0], [1], [0, 0, 1, 1], [], []>} : vector<8x128xbf16>, vector<128x256xbf16>, vector<8x256xf32> -> vector<8x256xf32>
    %96 = vector.extract_strided_slice %89 {offsets = [0, 1, 0], sizes = [8, 1, 128], strides = [1, 1, 1]} : vector<8x4x128xf32> to vector<8x1x128xf32>
    %97 = vector.shape_cast %96 : vector<8x1x128xf32> to vector<8x128xf32>
    %98 = arith.truncf %97 : vector<8x128xf32> to vector<8x128xbf16>
    %c1_61 = arith.constant 1 : index
    %c0_62 = arith.constant 0 : index
    %c0_63 = arith.constant 0 : index
    %99 = vector.load %arg6[%c1_61, %c0_62, %c0_63] : memref<4x128x256xbf16, #tpu.memory_space<vmem>>, vector<1x128x256xbf16>
    %100 = vector.shape_cast %99 : vector<1x128x256xbf16> to vector<128x256xbf16>
    %cst_64 = arith.constant dense<0.000000e+00> : vector<8x256xf32>
    %101 = tpu.matmul %98, %100, %cst_64 {dimension_numbers = #tpu.dot_dimension_numbers<[1], [0], [0], [1], [0, 0, 1, 1], [], []>} : vector<8x128xbf16>, vector<128x256xbf16>, vector<8x256xf32> -> vector<8x256xf32>
    %102 = arith.addf %95, %101 : vector<8x256xf32>
    %103 = vector.extract_strided_slice %89 {offsets = [0, 2, 0], sizes = [8, 1, 128], strides = [1, 1, 1]} : vector<8x4x128xf32> to vector<8x1x128xf32>
    %104 = vector.shape_cast %103 : vector<8x1x128xf32> to vector<8x128xf32>
    %105 = arith.truncf %104 : vector<8x128xf32> to vector<8x128xbf16>
    %c2_65 = arith.constant 2 : index
    %c0_66 = arith.constant 0 : index
    %c0_67 = arith.constant 0 : index
    %106 = vector.load %arg6[%c2_65, %c0_66, %c0_67] : memref<4x128x256xbf16, #tpu.memory_space<vmem>>, vector<1x128x256xbf16>
    %107 = vector.shape_cast %106 : vector<1x128x256xbf16> to vector<128x256xbf16>
    %cst_68 = arith.constant dense<0.000000e+00> : vector<8x256xf32>
    %108 = tpu.matmul %105, %107, %cst_68 {dimension_numbers = #tpu.dot_dimension_numbers<[1], [0], [0], [1], [0, 0, 1, 1], [], []>} : vector<8x128xbf16>, vector<128x256xbf16>, vector<8x256xf32> -> vector<8x256xf32>
    %109 = arith.addf %102, %108 : vector<8x256xf32>
    %110 = vector.extract_strided_slice %89 {offsets = [0, 3, 0], sizes = [8, 1, 128], strides = [1, 1, 1]} : vector<8x4x128xf32> to vector<8x1x128xf32>
    %111 = vector.shape_cast %110 : vector<8x1x128xf32> to vector<8x128xf32>
    %112 = arith.truncf %111 : vector<8x128xf32> to vector<8x128xbf16>
    %c3_69 = arith.constant 3 : index
    %c0_70 = arith.constant 0 : index
    %c0_71 = arith.constant 0 : index
    %113 = vector.load %arg6[%c3_69, %c0_70, %c0_71] : memref<4x128x256xbf16, #tpu.memory_space<vmem>>, vector<1x128x256xbf16>
    %114 = vector.shape_cast %113 : vector<1x128x256xbf16> to vector<128x256xbf16>
    %cst_72 = arith.constant dense<0.000000e+00> : vector<8x256xf32>
    %115 = tpu.matmul %112, %114, %cst_72 {dimension_numbers = #tpu.dot_dimension_numbers<[1], [0], [0], [1], [0, 0, 1, 1], [], []>} : vector<8x128xbf16>, vector<128x256xbf16>, vector<8x256xf32> -> vector<8x256xf32>
    %116 = arith.addf %109, %115 : vector<8x256xf32>
    %c0_73 = arith.constant 0 : index
    %c0_74 = arith.constant 0 : index
    %117 = vector.load %arg7[%c0_73, %c0_74] : memref<1x256xf32, #tpu.memory_space<vmem>>, vector<1x256xf32>
    %118 = vector.broadcast %117 : vector<1x256xf32> to vector<8x256xf32>
    %119 = arith.addf %116, %118 : vector<8x256xf32>
    %cst_75 = arith.constant 0.000000e+00 : f32
    %120 = vector.broadcast %cst_75 : f32 to vector<8x256xf32>
    %121 = arith.maximumf %119, %120 : vector<8x256xf32>
    %122 = arith.truncf %121 : vector<8x256xf32> to vector<8x256xbf16>
    %c0_76 = arith.constant 0 : index
    %c0_77 = arith.constant 0 : index
    %123 = vector.load %arg8[%c0_76, %c0_77] : memref<256x128xbf16, #tpu.memory_space<vmem>>, vector<256x128xbf16>
    %cst_78 = arith.constant dense<0.000000e+00> : vector<8x128xf32>
    %124 = tpu.matmul %122, %123, %cst_78 {dimension_numbers = #tpu.dot_dimension_numbers<[1], [0], [0], [1], [0, 0, 1, 1], [], []>} : vector<8x256xbf16>, vector<256x128xbf16>, vector<8x128xf32> -> vector<8x128xf32>
    %c0_79 = arith.constant 0 : index
    %c0_80 = arith.constant 0 : index
    %125 = vector.load %arg9[%c0_79, %c0_80] : memref<1x128xf32, #tpu.memory_space<vmem>>, vector<1x128xf32>
    %126 = vector.broadcast %125 : vector<1x128xf32> to vector<8x128xf32>
    %127 = arith.addf %124, %126 : vector<8x128xf32>
    %c0_81 = arith.constant 0 : index
    %c0_82 = arith.constant 0 : index
    %128 = vector.load %arg10[%c0_81, %c0_82] : memref<8x128xf32, #tpu.memory_space<vmem>>, vector<8x128xf32>
    tpu.vector_store %arg10[%c0_81, %c0_82], %127 {strides = array<i32>} : memref<8x128xf32, #tpu.memory_space<vmem>>, vector<8x128xf32>,
    return
  }
  func.func @transform_0(%arg0: i32) -> (i32, i32, i32) {
    %c0_i32 = arith.constant 0 : i32
    %c0_i32_0 = arith.constant 0 : i32
    %c0_i32_1 = arith.constant 0 : i32
    return %arg0, %c0_i32, %c0_i32_0 : i32, i32, i32
  }
  func.func @transform_1(%arg0: i32) -> (i32, i32, i32) {
    %c0_i32 = arith.constant 0 : i32
    %c0_i32_0 = arith.constant 0 : i32
    %c0_i32_1 = arith.constant 0 : i32
    %c0_i32_2 = arith.constant 0 : i32
    return %c0_i32, %c0_i32_0, %c0_i32_1 : i32, i32, i32
  }
  func.func @transform_2(%arg0: i32) -> (i32, i32) {
    %c0_i32 = arith.constant 0 : i32
    %c0_i32_0 = arith.constant 0 : i32
    %c0_i32_1 = arith.constant 0 : i32
    return %c0_i32, %c0_i32_0 : i32, i32
  }
  func.func @transform_3(%arg0: i32) -> (i32, i32, i32) {
    %c0_i32 = arith.constant 0 : i32
    %c0_i32_0 = arith.constant 0 : i32
    %c0_i32_1 = arith.constant 0 : i32
    %c0_i32_2 = arith.constant 0 : i32
    return %c0_i32, %c0_i32_0, %c0_i32_1 : i32, i32, i32
  }
  func.func @transform_4(%arg0: i32) -> (i32, i32) {
    %c0_i32 = arith.constant 0 : i32
    %c0_i32_0 = arith.constant 0 : i32
    %c0_i32_1 = arith.constant 0 : i32
    return %c0_i32, %c0_i32_0 : i32, i32
  }
  func.func @transform_5(%arg0: i32) -> (i32, i32, i32) {
    %c0_i32 = arith.constant 0 : i32
    %c0_i32_0 = arith.constant 0 : i32
    %c0_i32_1 = arith.constant 0 : i32
    %c0_i32_2 = arith.constant 0 : i32
    return %c0_i32, %c0_i32_0, %c0_i32_1 : i32, i32, i32
  }
  func.func @transform_6(%arg0: i32) -> (i32, i32) {
    %c0_i32 = arith.constant 0 : i32
    %c0_i32_0 = arith.constant 0 : i32
    %c0_i32_1 = arith.constant 0 : i32
    return %c0_i32, %c0_i32_0 : i32, i32
  }
  func.func @transform_7(%arg0: i32) -> (i32, i32) {
    %c0_i32 = arith.constant 0 : i32
    %c0_i32_0 = arith.constant 0 : i32
    %c0_i32_1 = arith.constant 0 : i32
    return %c0_i32, %c0_i32_0 : i32, i32
  }
  func.func @transform_8(%arg0: i32) -> (i32, i32) {
    %c0_i32 = arith.constant 0 : i32
    %c0_i32_0 = arith.constant 0 : i32
    %c0_i32_1 = arith.constant 0 : i32
    return %c0_i32, %c0_i32_0 : i32, i32
  }
  func.func @transform_9(%arg0: i32) -> (i32, i32) {
    %c0_i32 = arith.constant 0 : i32
    %c0_i32_0 = arith.constant 0 : i32
    return %arg0, %c0_i32 : i32, i32
  }
}

</mosaic_0001>

<llo_original>
// kernel: tpu_custom_call.1
$region0: #{tpu_custom_call.1}
  #allocation0 [shape = 'u32[]', space=smem, size = 0x4, offset = 0x4, fixed_abs, tag = 'smem constant byte address 0x4 - core index']
  #allocation1 [shape = 'u32[144,128]{1,0:T(1,128)}', space=vmem, size = 0x12000, scoped, tag = 'internal scratch']
  %s0 = inlined_call_operand.vmem [shape: f32[16,28,28], index: 0, kind: input, shape index: {}]
  %s1 = inlined_call_operand.vmem [shape: bf16[5,28,256], index: 1, kind: input, shape index: {}]
  %s2 = inlined_call_operand.vmem [shape: f32[1,128], index: 2, kind: input, shape index: {}]
  %s3 = inlined_call_operand.vmem [shape: bf16[5,128,256], index: 3, kind: input, shape index: {}]
  %s4 = inlined_call_operand.vmem [shape: f32[1,128], index: 4, kind: input, shape index: {}]
  %s5 = inlined_call_operand.hbm [shape: bf16[4,128,256], index: 5, kind: input, shape index: {}]
  %s6 = inlined_call_operand.vmem [shape: f32[1,256], index: 6, kind: input, shape index: {}]
  %s7 = inlined_call_operand.vmem [shape: bf16[256,128], index: 7, kind: input, shape index: {}]
  %s8 = inlined_call_operand.vmem [shape: f32[1,128], index: 8, kind: input, shape index: {}]
  %s9 = inlined_call_operand.hbm [shape: f32[16,128], index: 9, kind: output, shape index: {}]
  %s10 = sld [smem:[#allocation0]]
  $region73: #{tpu_custom_call.1} parent=0
    _
  %s12 = ssub.s32 1, %s10
  %s13 = scalar_select 0, %s12, %s10
  $region1: #{tpu_custom_call.1} parent=0
    #allocation2 [shape = 'u8[262144]{0}', space=vmem, size = 0x40000, scoped, tag = 'input window, operand 5, single buffered']
    #allocation3 [shape = 's32[2]{0}', space=sflag, size = 0x8, scoped, tag = 'scoped memory for tpu_custom_call.1']
    #allocation4 [shape = 's32[2]{0}', space=sflag, size = 0x8, scoped, tag = 'scoped memory for tpu_custom_call.1']
    #allocation5 [shape = 'u8[8192]{0}', space=vmem, size = 0x2000, scoped, tag = 'output window, operand 0']
    %14 = vsyncpa [#allocation3], 0
    %15 = vsyncpa [#allocation4], 0
    %s16 = scalar_lea.sflag [#allocation4], 1
    %17 = vsyncpa %s16, 0
    loop: start=0, step=1, limit=4
    $region2: #{tpu_custom_call.1} parent=1 // loop_pre_header
      _
    $region3: #{tpu_custom_call.1} parent=1 // loop_header
      %s19 = sphi 0, %s23
      %p20 = scmp.ge.s32.totalorder %s19, 4
      %s29 = sphi 0, %s31
      %s32 = sphi 0, %s29
      %s33 = sphi 0, %s32
      %s49 = sphi 0, %s33
      %s53 = sphi 0, %s53
      %s55 = sphi 0, %s53
      %s56 = sphi 0, %s55
      %s70 = sphi 0, %s56
      %s74 = sphi 0, %s74
      %s76 = sphi 0, %s74
      %s77 = sphi 0, %s76
      %s91 = sphi 0, %s77
      %s95 = sphi 0, %s95
      %s97 = sphi 0, %s95
      %s98 = sphi 0, %s97
      %s112 = sphi 0, %s98
      %s116 = sphi 0, %s116
      %s118 = sphi 0, %s116
      %s119 = sphi 0, %s118
      %s133 = sphi 0, %s119
      %s137 = sphi 0, %s137
      %s139 = sphi 0, %s137
      %s140 = sphi 0, %s139
      %s154 = sphi 0, %s140
      %s158 = sphi 0, %s158
      %s160 = sphi 0, %s158
      %s161 = sphi 0, %s160
      %s175 = sphi 0, %s161
      %s179 = sphi 0, %s179
      %s181 = sphi 0, %s179
      %s182 = sphi 0, %s181
      %s196 = sphi 0, %s182
      %s200 = sphi 0, %s200
      %s202 = sphi 0, %s200
      %s203 = sphi 0, %s202
      %s217 = sphi 0, %s203
      %s223 = sphi 0, %s225
      %s226 = sphi 0, %s223
      %s227 = sphi 0, %s226
      %s243 = sphi 0, %s227
    $region4: #{tpu_custom_call.1} parent=1 // loop_header_branch
      %22 = sbr.rel (%p20) target = $region8
    $region5: #{tpu_custom_call.1} parent=1 // loop_body
      %s24 = ssub.s32 %s19, 1
      %s25 = ssub.s32 %s19, 2
      %s26 = sadd.s32 %s19, 1
      %s27 = ssub.s32 %s19, %s26
      %p28 = scmp.eq.s32.totalorder %s27, 0
      %s30 = sadd.s32 %s29, 1
      %s31 = scalar_select %p28, %s29, %s30
      %p34 = pneg %p28
      %p35 = scmp.eq.s32.totalorder %s19, 1
      %p36 = por %p34, %p35
      %p37 = scmp.ne.s32.totalorder %s29, %s32
      %p38 = scmp.eq.s32.totalorder %s19, 0
      %p39 = por %p37, %p38
      %p40 = scmp.ne.s32.totalorder %s29, %s32
      %p41 = scmp.eq.s32.totalorder %s24, 1
      %p42 = por %p40, %p41
      %p43 = scmp.ne.s32.totalorder %s32, %s33
      %p44 = scmp.eq.s32.totalorder %s24, 0
      %p45 = por %p43, %p44
      %p46 = scmp.ne.s32.totalorder %s32, %s33
      %p47 = scmp.eq.s32.totalorder %s25, 1
      %p48 = por %p46, %p47
      %p50 = scmp.ne.s32.totalorder %s33, %s49
      %p51 = scmp.eq.s32.totalorder %s25, 0
      %p52 = por %p50, %p51
      %s54 = sadd.s32 %s53, 1
      %p57 = scmp.eq.s32.totalorder %s19, 1
      %p58 = scmp.ne.s32.totalorder %s53, %s55
      %p59 = scmp.eq.s32.totalorder %s19, 0
      %p60 = por %p58, %p59
      %p61 = scmp.ne.s32.totalorder %s53, %s55
      %p62 = scmp.eq.s32.totalorder %s24, 1
      %p63 = por %p61, %p62
      %p64 = scmp.ne.s32.totalorder %s55, %s56
      %p65 = scmp.eq.s32.totalorder %s24, 0
      %p66 = por %p64, %p65
      %p67 = scmp.ne.s32.totalorder %s55, %s56
      %p68 = scmp.eq.s32.totalorder %s25, 1
      %p69 = por %p67, %p68
      %p71 = scmp.ne.s32.totalorder %s56, %s70
      %p72 = scmp.eq.s32.totalorder %s25, 0
      %p73 = por %p71, %p72
      %s75 = sadd.s32 %s74, 1
      %p78 = scmp.eq.s32.totalorder %s19, 1
      %p79 = scmp.ne.s32.totalorder %s74, %s76
      %p80 = scmp.eq.s32.totalorder %s19, 0
      %p81 = por %p79, %p80
      %p82 = scmp.ne.s32.totalorder %s74, %s76
      %p83 = scmp.eq.s32.totalorder %s24, 1
      %p84 = por %p82, %p83
      %p85 = scmp.ne.s32.totalorder %s76, %s77
      %p86 = scmp.eq.s32.totalorder %s24, 0
      %p87 = por %p85, %p86
      %p88 = scmp.ne.s32.totalorder %s76, %s77
      %p89 = scmp.eq.s32.totalorder %s25, 1
      %p90 = por %p88, %p89
      %p92 = scmp.ne.s32.totalorder %s77, %s91
      %p93 = scmp.eq.s32.totalorder %s25, 0
      %p94 = por %p92, %p93
      %s96 = sadd.s32 %s95, 1
      %p99 = scmp.eq.s32.totalorder %s19, 1
      %p100 = scmp.ne.s32.totalorder %s95, %s97
      %p101 = scmp.eq.s32.totalorder %s19, 0
      %p102 = por %p100, %p101
      %p103 = scmp.ne.s32.totalorder %s95, %s97
      %p104 = scmp.eq.s32.totalorder %s24, 1
      %p105 = por %p103, %p104
      %p106 = scmp.ne.s32.totalorder %s97, %s98
      %p107 = scmp.eq.s32.totalorder %s24, 0
      %p108 = por %p106, %p107
      %p109 = scmp.ne.s32.totalorder %s97, %s98
      %p110 = scmp.eq.s32.totalorder %s25, 1
      %p111 = por %p109, %p110
      %p113 = scmp.ne.s32.totalorder %s98, %s112
      %p114 = scmp.eq.s32.totalorder %s25, 0
      %p115 = por %p113, %p114
      %s117 = sadd.s32 %s116, 1
      %p120 = scmp.eq.s32.totalorder %s19, 1
      %p121 = scmp.ne.s32.totalorder %s116, %s118
      %p122 = scmp.eq.s32.totalorder %s19, 0
      %p123 = por %p121, %p122
      %p124 = scmp.ne.s32.totalorder %s116, %s118
      %p125 = scmp.eq.s32.totalorder %s24, 1
      %p126 = por %p124, %p125
      %p127 = scmp.ne.s32.totalorder %s118, %s119
      %p128 = scmp.eq.s32.totalorder %s24, 0
      %p129 = por %p127, %p128
      %p130 = scmp.ne.s32.totalorder %s118, %s119
      %p131 = scmp.eq.s32.totalorder %s25, 1
      %p132 = por %p130, %p131
      %p134 = scmp.ne.s32.totalorder %s119, %s133
      %p135 = scmp.eq.s32.totalorder %s25, 0
      %p136 = por %p134, %p135
      %s138 = sadd.s32 %s137, 1
      %p141 = scmp.eq.s32.totalorder %s19, 1
      %p142 = scmp.ne.s32.totalorder %s137, %s139
      %p143 = scmp.eq.s32.totalorder %s19, 0
      %p144 = por %p142, %p143
      %p145 = scmp.ne.s32.totalorder %s137, %s139
      %p146 = scmp.eq.s32.totalorder %s24, 1
      %p147 = por %p145, %p146
      %p148 = scmp.ne.s32.totalorder %s139, %s140
      %p149 = scmp.eq.s32.totalorder %s24, 0
      %p150 = por %p148, %p149
      %p151 = scmp.ne.s32.totalorder %s139, %s140
      %p152 = scmp.eq.s32.totalorder %s25, 1
      %p153 = por %p151, %p152
      %p155 = scmp.ne.s32.totalorder %s140, %s154
      %p156 = scmp.eq.s32.totalorder %s25, 0
      %p157 = por %p155, %p156
      %s159 = sadd.s32 %s158, 1
      %p162 = scmp.eq.s32.totalorder %s19, 1
      %p163 = scmp.ne.s32.totalorder %s158, %s160
      %p164 = scmp.eq.s32.totalorder %s19, 0
      %p165 = por %p163, %p164
      %p166 = scmp.ne.s32.totalorder %s158, %s160
      %p167 = scmp.eq.s32.totalorder %s24, 1
      %p168 = por %p166, %p167
      %p169 = scmp.ne.s32.totalorder %s160, %s161
      %p170 = scmp.eq.s32.totalorder %s24, 0
      %p171 = por %p169, %p170
      %p172 = scmp.ne.s32.totalorder %s160, %s161
      %p173 = scmp.eq.s32.totalorder %s25, 1
      %p174 = por %p172, %p173
      %p176 = scmp.ne.s32.totalorder %s161, %s175
      %p177 = scmp.eq.s32.totalorder %s25, 0
      %p178 = por %p176, %p177
      %s180 = sadd.s32 %s179, 1
      %p183 = scmp.eq.s32.totalorder %s19, 1
      %p184 = scmp.ne.s32.totalorder %s179, %s181
      %p185 = scmp.eq.s32.totalorder %s19, 0
      %p186 = por %p184, %p185
      %p187 = scmp.ne.s32.totalorder %s179, %s181
      %p188 = scmp.eq.s32.totalorder %s24, 1
      %p189 = por %p187, %p188
      %p190 = scmp.ne.s32.totalorder %s181, %s182
      %p191 = scmp.eq.s32.totalorder %s24, 0
      %p192 = por %p190, %p191
      %p193 = scmp.ne.s32.totalorder %s181, %s182
      %p194 = scmp.eq.s32.totalorder %s25, 1
      %p195 = por %p193, %p194
      %p197 = scmp.ne.s32.totalorder %s182, %s196
      %p198 = scmp.eq.s32.totalorder %s25, 0
      %p199 = por %p197, %p198
      %s201 = sadd.s32 %s200, 1
      %p204 = scmp.eq.s32.totalorder %s19, 1
      %p205 = scmp.ne.s32.totalorder %s200, %s202
      %p206 = scmp.eq.s32.totalorder %s19, 0
      %p207 = por %p205, %p206
      %p208 = scmp.ne.s32.totalorder %s200, %s202
      %p209 = scmp.eq.s32.totalorder %s24, 1
      %p210 = por %p208, %p209
      %p211 = scmp.ne.s32.totalorder %s202, %s203
      %p212 = scmp.eq.s32.totalorder %s24, 0
      %p213 = por %p211, %p212
      %p214 = scmp.ne.s32.totalorder %s202, %s203
      %p215 = scmp.eq.s32.totalorder %s25, 1
      %p216 = por %p214, %p215
      %p218 = scmp.ne.s32.totalorder %s203, %s217
      %p219 = scmp.eq.s32.totalorder %s25, 0
      %p220 = por %p218, %p219
      %s221 = ssub.s32 %s19, %s26
      %p222 = scmp.eq.s32.totalorder %s221, 0
      %s224 = sadd.s32 %s223, 1
      %s225 = scalar_select %p222, %s223, %s224
      %p228 = pneg %p222
      %p229 = scmp.eq.s32.totalorder %s19, 1
      %p230 = por %p228, %p229
      %p231 = scmp.ne.s32.totalorder %s223, %s226
      %p232 = scmp.eq.s32.totalorder %s19, 0
      %p233 = por %p231, %p232
      %p234 = scmp.ne.s32.totalorder %s223, %s226
      %p235 = scmp.eq.s32.totalorder %s24, 1
      %p236 = por %p234, %p235
      %p237 = scmp.ne.s32.totalorder %s226, %s227
      %p238 = scmp.eq.s32.totalorder %s24, 0
      %p239 = por %p237, %p238
      %p240 = scmp.ne.s32.totalorder %s226, %s227
      %p241 = scmp.eq.s32.totalorder %s25, 1
      %p242 = por %p240, %p241
      %p244 = scmp.ne.s32.totalorder %s227, %s243
      %p245 = scmp.eq.s32.totalorder %s25, 0
      %p246 = por %p244, %p245
      %p247 = scmp.le.s32.totalorder 1, %s19
      %p248 = scmp.lt.s32.totalorder %s19, 3
      %p249 = pnand %p247, %p248
      %p250 = pneg %p249
      // Predicated region
      $region9: #{tpu_custom_call.1} parent=5 // pred_check
        _
      $region10: #{tpu_custom_call.1} parent=5 // pred_check_branch
        %252 = sbr.rel (%p249) target = $region12
      $region11: #{tpu_custom_call.1} parent=5 // pred_region
        %s253 = ssub.s32 %s19, 1
        // Predicated region
        $region13: #{tpu_custom_call.1} parent=11 // pred_check
          %p254 = pneg %p66
        $region14: #{tpu_custom_call.1} parent=11 // pred_check_branch
          %256 = sbr.rel (%p254) target = $region16
        $region15: #{tpu_custom_call.1} parent=11 // pred_region
          _
        $region16: #{tpu_custom_call.1} parent=11 // pred_fallthru
          _
        // Predicated region
        $region17: #{tpu_custom_call.1} parent=11 // pred_check
          %p257 = pneg %p87
        $region18: #{tpu_custom_call.1} parent=11 // pred_check_branch
          %259 = sbr.rel (%p257) target = $region20
        $region19: #{tpu_custom_call.1} parent=11 // pred_region
          _
        $region20: #{tpu_custom_call.1} parent=11 // pred_fallthru
          _
        // Predicated region
        $region21: #{tpu_custom_call.1} parent=11 // pred_check
          %p260 = pneg %p108
        $region22: #{tpu_custom_call.1} parent=11 // pred_check_branch
          %262 = sbr.rel (%p260) target = $region24
        $region23: #{tpu_custom_call.1} parent=11 // pred_region
          _
        $region24: #{tpu_custom_call.1} parent=11 // pred_fallthru
          _
        // Predicated region
        $region25: #{tpu_custom_call.1} parent=11 // pred_check
          %p263 = pneg %p129
        $region26: #{tpu_custom_call.1} parent=11 // pred_check_branch
          %265 = sbr.rel (%p263) target = $region28
        $region27: #{tpu_custom_call.1} parent=11 // pred_region
          _
        $region28: #{tpu_custom_call.1} parent=11 // pred_fallthru
          _
        // Predicated region
        $region29: #{tpu_custom_call.1} parent=11 // pred_check
          %p266 = pneg %p150
        $region30: #{tpu_custom_call.1} parent=11 // pred_check_branch
          %268 = sbr.rel (%p266) target = $region32
        $region31: #{tpu_custom_call.1} parent=11 // pred_region
          %s270 = ssub.s32 8192, 8192
          %271 = vsyncadd [#allocation3], %s270
          %s272 = sshll.u32 [#allocation2], 4
          %s273 = int_to_ptr.vmem [resolvable:$true] %s272
          %278 = dma.hbm_to_vmem [thread:$0]  %s5, 8192, %s273, [#allocation3], 128, 128, 8
        $region32: #{tpu_custom_call.1} parent=11 // pred_fallthru
          _
        // Predicated region
        $region33: #{tpu_custom_call.1} parent=11 // pred_check
          %p279 = pneg %p171
        $region34: #{tpu_custom_call.1} parent=11 // pred_check_branch
          %281 = sbr.rel (%p279) target = $region36
        $region35: #{tpu_custom_call.1} parent=11 // pred_region
          _
        $region36: #{tpu_custom_call.1} parent=11 // pred_fallthru
          _
        // Predicated region
        $region37: #{tpu_custom_call.1} parent=11 // pred_check
          %p282 = pneg %p192
        $region38: #{tpu_custom_call.1} parent=11 // pred_check_branch
          %284 = sbr.rel (%p282) target = $region40
        $region39: #{tpu_custom_call.1} parent=11 // pred_region
          _
        $region40: #{tpu_custom_call.1} parent=11 // pred_fallthru
          _
        // Predicated region
        $region41: #{tpu_custom_call.1} parent=11 // pred_check
          %p285 = pneg %p213
        $region42: #{tpu_custom_call.1} parent=11 // pred_check_branch
          %287 = sbr.rel (%p285) target = $region44
        $region43: #{tpu_custom_call.1} parent=11 // pred_region
          _
        $region44: #{tpu_custom_call.1} parent=11 // pred_fallthru
          _
      $region12: #{tpu_custom_call.1} parent=5 // pred_fallthru
        _
      %p288 = scmp.lt.s32.totalorder %s19, 2
      // Predicated region
      $region45: #{tpu_custom_call.1} parent=5 // pred_check
        %p289 = pneg %p288
      $region46: #{tpu_custom_call.1} parent=5 // pred_check_branch
        %291 = sbr.rel (%p289) target = $region48
      $region47: #{tpu_custom_call.1} parent=5 // pred_region
        // Predicated region
        $region49: #{tpu_custom_call.1} parent=47 // pred_check
          %p292 = pneg %p39
        $region50: #{tpu_custom_call.1} parent=47 // pred_check_branch
          %294 = sbr.rel (%p292) target = $region52
        $region51: #{tpu_custom_call.1} parent=47 // pred_region
          %s295 = smul.u32 8, %s19
          %p296 = scmp.lt.s32.totalorder %s295, 15
          %s297 = scalar_select %p296, %s295, 15
          %s298 = smul.addr %s297, 4
          %s299 = smul.addr %s298, 8
          %s300 = scalar_lea.vmem %s0, %s299
          %s301 = smul.u32 8, %s19
        $region52: #{tpu_custom_call.1} parent=47 // pred_fallthru
          _
      $region48: #{tpu_custom_call.1} parent=5 // pred_fallthru
        _
      %p302 = scmp.le.s32.totalorder 1, %s19
      %p303 = scmp.lt.s32.totalorder %s19, 3
      %p304 = pnand %p302, %p303
      %p305 = pneg %p304
      // Predicated region
      $region53: #{tpu_custom_call.1} parent=5 // pred_check
        _
      $region54: #{tpu_custom_call.1} parent=5 // pred_check_branch
        %307 = sbr.rel (%p304) target = $region56
      $region55: #{tpu_custom_call.1} parent=5 // pred_region
        %s308 = ssub.s32 %s19, 1
        // Predicated region
        $region57: #{tpu_custom_call.1} parent=55 // pred_check
          %p309 = pneg %p150
        $region58: #{tpu_custom_call.1} parent=55 // pred_check_branch
          %311 = sbr.rel (%p309) target = $region60
        $region59: #{tpu_custom_call.1} parent=55 // pred_region
          %312 = dma.done [#allocation3], 8192
        $region60: #{tpu_custom_call.1} parent=55 // pred_fallthru
          _
        %s313 = smul.u32 8, %s24
        %p314 = scmp.lt.s32.totalorder %s313, 15
        %s315 = scalar_select %p314, %s313, 15
        %s316 = smul.addr %s315, 4
        %s317 = smul.addr %s316, 8
        %s318 = scalar_lea.vmem %s0, %s317
        %p319 = pneg %p45
        %p320 = pneg %p42
        %p321 = pneg %p66
        %p322 = pneg %p63
        %p323 = pneg %p87
        %p324 = pneg %p84
        %p325 = pneg %p108
        %p326 = pneg %p105
        %p327 = pneg %p129
        %p328 = pneg %p126
        %p329 = pneg %p150
        %p330 = pneg %p147
        %p331 = pneg %p171
        %p332 = pneg %p168
        %p333 = pneg %p192
        %p334 = pneg %p189
        %p335 = pneg %p213
        %p336 = pneg %p210
        %p337 = pneg %p239
        %p338 = pneg %p236
        %s339 = sand.u32 %s226, 1
        %s340 = scalar_lea.sflag [#allocation4], %s339
        %s341 = sand.u32 %s226, 1
        %s342 = smul.addr %s341, 8
        %s343 = scalar_lea.vmem [#allocation5], %s342
        %s344 = smul.u32 8, %s24
        %p345 = scmp.lt.s32.totalorder %s344, 15
        %s346 = scalar_select %p345, %s344, 15
        %s347 = smul.addr %s346, 4
        %s348 = smul.addr %s347, 8
        %s349 = scalar_lea.vmem %s0, %s348
        %s350 = smul.u32 8, %s24
        %v352 = vld [vmem:[%s349] sm:$0xff]
        %v353 = vld [vmem:[%s349 + $0x8] sm:$0xff]
        %v354 = vld [vmem:[%s349 + $0x10] sm:$0xff]
        %v355 = vld [vmem:[%s349 + $0x20] sm:$0xff]
        %v356 = vld [vmem:[%s349 + $0x28] sm:$0xff]
        %v357 = vld [vmem:[%s349 + $0x30] sm:$0xff]
        %v358 = vld [vmem:[%s349 + $0x40] sm:$0xff]
        %v359 = vld [vmem:[%s349 + $0x48] sm:$0xff]
        %v360 = vld [vmem:[%s349 + $0x50] sm:$0xff]
        %v361 = vld [vmem:[%s349 + $0x60] sm:$0xff]
        %v362 = vld [vmem:[%s349 + $0x68] sm:$0xff]
        %v363 = vld [vmem:[%s349 + $0x70] sm:$0xff]
        %v364 = vld [vmem:[%s349 + $0x80] sm:$0xff]
        %v365 = vld [vmem:[%s349 + $0x88] sm:$0xff]
        %v366 = vld [vmem:[%s349 + $0x90] sm:$0xff]
        %v367 = vld [vmem:[%s349 + $0xa0] sm:$0xff]
        %v368 = vld [vmem:[%s349 + $0xa8] sm:$0xff]
        %v369 = vld [vmem:[%s349 + $0xb0] sm:$0xff]
        %v370 = vld [vmem:[%s349 + $0xc0] sm:$0xff]
        %v371 = vld [vmem:[%s349 + $0xc8] sm:$0xff]
        %v372 = vld [vmem:[%s349 + $0xd0] sm:$0xff]
        %v373 = vld [vmem:[%s349 + $0xe0] sm:$0xff]
        %v374 = vld [vmem:[%s349 + $0xe8] sm:$0xff]
        %v375 = vld [vmem:[%s349 + $0xf0] sm:$0xff]
        %v376 = vpack.c.bf16 %v353, %v352
        %v377 = vpack.c.bf16 %v355, %v354
        %v378 = vpack.c.bf16 %v357, %v356
        %v379 = vpack.c.bf16 %v359, %v358
        %v380 = vpack.c.bf16 %v361, %v360
        %v381 = vpack.c.bf16 %v363, %v362
        %v382 = vpack.c.bf16 %v365, %v364
        %v383 = vpack.c.bf16 %v367, %v366
        %v384 = vpack.c.bf16 %v369, %v368
        %v385 = vpack.c.bf16 %v371, %v370
        %v386 = vpack.c.bf16 %v373, %v372
        %v387 = vpack.c.bf16 %v375, %v374
        %v388 = vld [vmem:[%s1] sm:$0xff]
        %v389 = vld [vmem:[%s1 + $0x8] sm:$0xff]
        %v390 = vld [vmem:[%s1 + $0x10] sm:$0xff]
        %v391 = vld [vmem:[%s1 + $0x18] sm:$0x33]
        %v392 = vld [vmem:[%s349 + $0x1] sm:$0xff]
        %v393 = vld [vmem:[%s349 + $0x9] sm:$0xff]
        %v394 = vld [vmem:[%s349 + $0x11] sm:$0xff]
        %v395 = vld [vmem:[%s349 + $0x21] sm:$0xff]
        %v396 = vld [vmem:[%s349 + $0x29] sm:$0xff]
        %v397 = vld [vmem:[%s349 + $0x31] sm:$0xff]
        %v398 = vld [vmem:[%s349 + $0x41] sm:$0xff]
        %v399 = vld [vmem:[%s349 + $0x49] sm:$0xff]
        %v400 = vld [vmem:[%s349 + $0x51] sm:$0xff]
        %v401 = vld [vmem:[%s349 + $0x61] sm:$0xff]
        %v402 = vld [vmem:[%s349 + $0x69] sm:$0xff]
        %v403 = vld [vmem:[%s349 + $0x71] sm:$0xff]
        %v404 = vld [vmem:[%s349 + $0x81] sm:$0xff]
        %v405 = vld [vmem:[%s349 + $0x89] sm:$0xff]
        %v406 = vld [vmem:[%s349 + $0x91] sm:$0xff]
        %v407 = vld [vmem:[%s349 + $0xa1] sm:$0xff]
        %v408 = vld [vmem:[%s349 + $0xa9] sm:$0xff]
        %v409 = vld [vmem:[%s349 + $0xb1] sm:$0xff]
        %v410 = vld [vmem:[%s349 + $0xc1] sm:$0xff]
        %v411 = vld [vmem:[%s349 + $0xc9] sm:$0xff]
        %v412 = vld [vmem:[%s349 + $0xd1] sm:$0xff]
        %v413 = vld [vmem:[%s349 + $0xe1] sm:$0xff]
        %v414 = vld [vmem:[%s349 + $0xe9] sm:$0xff]
        %v415 = vld [vmem:[%s349 + $0xf1] sm:$0xff]
        %v416 = vpack.c.bf16 %v393, %v392
        %v417 = vpack.c.bf16 %v395, %v394
        %v418 = vpack.c.bf16 %v397, %v396
        %v419 = vpack.c.bf16 %v399, %v398
        %v420 = vpack.c.bf16 %v401, %v400
        %v421 = vpack.c.bf16 %v403, %v402
        %v422 = vpack.c.bf16 %v405, %v404
        %v423 = vpack.c.bf16 %v407, %v406
        %v424 = vpack.c.bf16 %v409, %v408
        %v425 = vpack.c.bf16 %v411, %v410
        %v426 = vpack.c.bf16 %v413, %v412
        %v427 = vpack.c.bf16 %v415, %v414
        %s428 = scalar_lea.vmem %s1, 32
        %v429 = vld [vmem:[%s428] sm:$0xff]
        %v430 = vld [vmem:[%s428 + $0x8] sm:$0xff]
        %v431 = vld [vmem:[%s428 + $0x10] sm:$0xff]
        %v432 = vld [vmem:[%s428 + $0x18] sm:$0x33]
        %v437 = vunpack.c.l.b16 %v429
        %v438 = vunpack.c.h.b16 %v429
        %v439 = vunpack.c.l.b16 %v430
        %v440 = vunpack.c.h.b16 %v430
        %v441 = vunpack.c.l.b16 %v431
        %v442 = vunpack.c.h.b16 %v431
        %v443 = vunpack.c.l.b16 %v432
        %v444 = vunpack.c.h.b16 %v432
        %v445 = vpack.c.b16 %v439, %v437
        %v446 = vpack.c.b16 %v440, %v438
        %v447 = vpack.c.b16 %v443, %v441
        %v448 = vpack.c.b16 %v444, %v442
        %vm451 = vcmask 228352
        %v453 = vsel %vm451, %v416, 0
        %v456 = vsel %vm451, %v417, 0
        %v459 = vsel %vm451, %v418, 0
        %v462 = vsel %vm451, %v419, 0
        %v465 = vsel %vm451, %v420, 0
        %v468 = vsel %vm451, %v421, 0
        %v471 = vsel %vm451, %v422, 0
        %v474 = vsel %vm451, %v423, 0
        %v477 = vsel %vm451, %v424, 0
        %v480 = vsel %vm451, %v425, 0
        %v483 = vsel %vm451, %v426, 0
        %v486 = vsel %vm451, %v427, 0
        %vm488 = vcmask 1045504
        %v490 = vsel %vm488, %v447, 0
        %v493 = vsel %vm488, %v448, 0
        %495 = vmatprep.subr.bf16.mxu0 %v446
        %496 = vmatpush1.bf16.msra.mxu0 %v445
        %497 = vmatprep.subr.bf16.mxu0 %v493
        %498 = vmatpush1.bf16.msra.mxu0 %v490
        %499 = vmatprep.subr.bf16.mxu0 0
        %500 = vmatpush1.bf16.msra.mxu0 0
        %501 = vmatprep.subr.bf16.mxu0 0
        %502 = vmatpush1.bf16.msra.mxu0 0
        %503 = vmatprep.subr.bf16.mxu0 0
        %504 = vmatpush1.bf16.msra.mxu0 0
        %505 = vmatprep.subr.bf16.mxu0 0
        %506 = vmatpush1.bf16.msra.mxu0 0
        %507 = vmatprep.subr.bf16.mxu0 0
        %508 = vmatpush1.bf16.msra.mxu0 0
        %509 = vmatprep.subr.bf16.mxu0 0
        %510 = vmatpush1.bf16.msra.mxu0 0
        %511 = vmatprep.subr.bf16.mxu0 0
        %512 = vmatpush1.bf16.msra.mxu0 0
        %513 = vmatprep.subr.bf16.mxu0 0
        %514 = vmatpush1.bf16.msra.mxu0 0
        %515 = vmatprep.subr.bf16.mxu0 0
        %516 = vmatpush1.bf16.msra.mxu0 0
        %517 = vmatprep.subr.bf16.mxu0 0
        %518 = vmatpush1.bf16.msra.mxu0 0
        %519 = vmatprep.subr.bf16.mxu0 0
        %520 = vmatpush1.bf16.msra.mxu0 0
        %521 = vmatprep.subr.bf16.mxu0 0
        %522 = vmatpush1.bf16.msra.mxu0 0
        %523 = vmatprep.subr.bf16.mxu0 0
        %524 = vmatpush1.bf16.msra.mxu0 0
        %525 = vmatprep.subr.bf16.mxu0 0
        %526 = vmatpush1.bf16.msra.mxu0 0
        %527 = vmatprep.mubr.bf16.mxu0 0
        %528 = vmatmul.mubr.bf16.gmra.mrb[0].mxu0 %v453
        %v529 = vpop.f32.mrb[0].mxu0
        %v530 = vadd.f32 0.0, %v529
        %v531 = vpop.f32.mrb[0].mxu0
        %v532 = vadd.f32 0.0, %v531
        %v533 = vpop.f32.mrb[0].mxu0
        %v534 = vadd.f32 0.0, %v533
        %v535 = vpop.f32.mrb[0].mxu0
        %v536 = vadd.f32 0.0, %v535
        %537 = vmatprep.mubr.bf16.mxu0 0
        %538 = vmatmul.mubr.bf16.gmra.mrb[0].mxu0 %v456
        %v539 = vpop.f32.mrb[0].mxu0
        %v540 = vadd.f32 0.0, %v539
        %v541 = vpop.f32.mrb[0].mxu0
        %v542 = vadd.f32 0.0, %v541
        %v543 = vpop.f32.mrb[0].mxu0
        %v544 = vadd.f32 0.0, %v543
        %v545 = vpop.f32.mrb[0].mxu0
        %v546 = vadd.f32 0.0, %v545
        %547 = vmatprep.mubr.bf16.mxu0 0
        %548 = vmatmul.mubr.bf16.gmra.mrb[0].mxu0 %v459
        %v549 = vpop.f32.mrb[0].mxu0
        %v550 = vadd.f32 0.0, %v549
        %v551 = vpop.f32.mrb[0].mxu0
        %v552 = vadd.f32 0.0, %v551
        %v553 = vpop.f32.mrb[0].mxu0
        %v554 = vadd.f32 0.0, %v553
        %v555 = vpop.f32.mrb[0].mxu0
        %v556 = vadd.f32 0.0, %v555
        %557 = vmatprep.mubr.bf16.mxu0 0
        %558 = vmatmul.mubr.bf16.gmra.mrb[0].mxu0 %v462
        %v559 = vpop.f32.mrb[0].mxu0
        %v560 = vadd.f32 0.0, %v559
        %v561 = vpop.f32.mrb[0].mxu0
        %v562 = vadd.f32 0.0, %v561
        %v563 = vpop.f32.mrb[0].mxu0
        %v564 = vadd.f32 0.0, %v563
        %v565 = vpop.f32.mrb[0].mxu0
        %v566 = vadd.f32 0.0, %v565
        %567 = vmatprep.mubr.bf16.mxu0 0
        %568 = vmatmul.mubr.bf16.gmra.mrb[0].mxu0 %v465
        %v569 = vpop.f32.mrb[0].mxu0
        %v570 = vadd.f32 0.0, %v569
        %v571 = vpop.f32.mrb[0].mxu0
        %v572 = vadd.f32 0.0, %v571
        %v573 = vpop.f32.mrb[0].mxu0
        %v574 = vadd.f32 0.0, %v573
        %v575 = vpop.f32.mrb[0].mxu0
        %v576 = vadd.f32 0.0, %v575
        %577 = vmatprep.mubr.bf16.mxu0 0
        %578 = vmatmul.mubr.bf16.gmra.mrb[0].mxu0 %v468
        %v579 = vpop.f32.mrb[0].mxu0
        %v580 = vadd.f32 0.0, %v579
        %v581 = vpop.f32.mrb[0].mxu0
        %v582 = vadd.f32 0.0, %v581
        %v583 = vpop.f32.mrb[0].mxu0
        %v584 = vadd.f32 0.0, %v583
        %v585 = vpop.f32.mrb[0].mxu0
        %v586 = vadd.f32 0.0, %v585
        %587 = vmatprep.mubr.bf16.mxu0 0
        %588 = vmatmul.mubr.bf16.gmra.mrb[0].mxu0 %v471
        %v589 = vpop.f32.mrb[0].mxu0
        %v590 = vadd.f32 0.0, %v589
        %v591 = vpop.f32.mrb[0].mxu0
        %v592 = vadd.f32 0.0, %v591
        %v593 = vpop.f32.mrb[0].mxu0
        %v594 = vadd.f32 0.0, %v593
        %v595 = vpop.f32.mrb[0].mxu0
        %v596 = vadd.f32 0.0, %v595
        %597 = vmatprep.mubr.bf16.mxu0 0
        %598 = vmatmul.mubr.bf16.gmra.mrb[0].mxu0 %v474
        %v599 = vpop.f32.mrb[0].mxu0
        %v600 = vadd.f32 0.0, %v599
        %v601 = vpop.f32.mrb[0].mxu0
        %v602 = vadd.f32 0.0, %v601
        %v603 = vpop.f32.mrb[0].mxu0
        %v604 = vadd.f32 0.0, %v603
        %v605 = vpop.f32.mrb[0].mxu0
        %v606 = vadd.f32 0.0, %v605
        %607 = vmatprep.mubr.bf16.mxu0 0
        %608 = vmatmul.mubr.bf16.gmra.mrb[0].mxu0 %v477
        %v609 = vpop.f32.mrb[0].mxu0
        %v610 = vadd.f32 0.0, %v609
        %v611 = vpop.f32.mrb[0].mxu0
        %v612 = vadd.f32 0.0, %v611
        %v613 = vpop.f32.mrb[0].mxu0
        %v614 = vadd.f32 0.0, %v613
        %v615 = vpop.f32.mrb[0].mxu0
        %v616 = vadd.f32 0.0, %v615
        %617 = vmatprep.mubr.bf16.mxu0 0
        %618 = vmatmul.mubr.bf16.gmra.mrb[0].mxu0 %v480
        %v619 = vpop.f32.mrb[0].mxu0
        %v620 = vadd.f32 0.0, %v619
        %v621 = vpop.f32.mrb[0].mxu0
        %v622 = vadd.f32 0.0, %v621
        %v623 = vpop.f32.mrb[0].mxu0
        %v624 = vadd.f32 0.0, %v623
        %v625 = vpop.f32.mrb[0].mxu0
        %v626 = vadd.f32 0.0, %v625
        %627 = vmatprep.mubr.bf16.mxu0 0
        %628 = vmatmul.mubr.bf16.gmra.mrb[0].mxu0 %v483
        %v629 = vpop.f32.mrb[0].mxu0
        %v630 = vadd.f32 0.0, %v629
        %v631 = vpop.f32.mrb[0].mxu0
        %v632 = vadd.f32 0.0, %v631
        %v633 = vpop.f32.mrb[0].mxu0
        %v634 = vadd.f32 0.0, %v633
        %v635 = vpop.f32.mrb[0].mxu0
        %v636 = vadd.f32 0.0, %v635
        %637 = vmatprep.mubr.bf16.mxu0 0
        %638 = vmatmul.mubr.bf16.gmra.mrb[0].mxu0 %v486
        %v639 = vpop.f32.mrb[0].mxu0
        %v640 = vadd.f32 0.0, %v639
        %v641 = vpop.f32.mrb[0].mxu0
        %v642 = vadd.f32 0.0, %v641
        %v643 = vpop.f32.mrb[0].mxu0
        %v644 = vadd.f32 0.0, %v643
        %v645 = vpop.f32.mrb[0].mxu0
        %v646 = vadd.f32 0.0, %v645
        %647 = vdwg.mxu0
        %v652 = vunpack.c.l.b16 %v388
        %v653 = vunpack.c.h.b16 %v388
        %v654 = vunpack.c.l.b16 %v389
        %v655 = vunpack.c.h.b16 %v389
        %v656 = vunpack.c.l.b16 %v390
        %v657 = vunpack.c.h.b16 %v390
        %v658 = vunpack.c.l.b16 %v391
        %v659 = vunpack.c.h.b16 %v391
        %v660 = vpack.c.b16 %v654, %v652
        %v661 = vpack.c.b16 %v655, %v653
        %v662 = vpack.c.b16 %v658, %v656
        %v663 = vpack.c.b16 %v659, %v657
        %v667 = vsel %vm451, %v376, 0
        %v670 = vsel %vm451, %v377, 0
        %v673 = vsel %vm451, %v378, 0
        %v676 = vsel %vm451, %v379, 0
        %v679 = vsel %vm451, %v380, 0
        %v682 = vsel %vm451, %v381, 0
        %v685 = vsel %vm451, %v382, 0
        %v688 = vsel %vm451, %v383, 0
        %v691 = vsel %vm451, %v384, 0
        %v694 = vsel %vm451, %v385, 0
        %v697 = vsel %vm451, %v386, 0
        %v700 = vsel %vm451, %v387, 0
        %v703 = vsel %vm488, %v662, 0
        %v706 = vsel %vm488, %v663, 0
        %708 = vmatprep.subr.bf16.mxu0 %v661
        %709 = vmatpush1.bf16.msra.mxu0 %v660
        %710 = vmatprep.subr.bf16.mxu0 %v706
        %711 = vmatpush1.bf16.msra.mxu0 %v703
        %712 = vmatprep.subr.bf16.mxu0 0
        %713 = vmatpush1.bf16.msra.mxu0 0
        %714 = vmatprep.subr.bf16.mxu0 0
        %715 = vmatpush1.bf16.msra.mxu0 0
        %716 = vmatprep.subr.bf16.mxu0 0
        %717 = vmatpush1.bf16.msra.mxu0 0
        %718 = vmatprep.subr.bf16.mxu0 0
        %719 = vmatpush1.bf16.msra.mxu0 0
        %720 = vmatprep.subr.bf16.mxu0 0
        %721 = vmatpush1.bf16.msra.mxu0 0
        %722 = vmatprep.subr.bf16.mxu0 0
        %723 = vmatpush1.bf16.msra.mxu0 0
        %724 = vmatprep.subr.bf16.mxu0 0
        %725 = vmatpush1.bf16.msra.mxu0 0
        %726 = vmatprep.subr.bf16.mxu0 0
        %727 = vmatpush1.bf16.msra.mxu0 0
        %728 = vmatprep.subr.bf16.mxu0 0
        %729 = vmatpush1.bf16.msra.mxu0 0
        %730 = vmatprep.subr.bf16.mxu0 0
        %731 = vmatpush1.bf16.msra.mxu0 0
        %732 = vmatprep.subr.bf16.mxu0 0
        %733 = vmatpush1.bf16.msra.mxu0 0
        %734 = vmatprep.subr.bf16.mxu0 0
        %735 = vmatpush1.bf16.msra.mxu0 0
        %736 = vmatprep.subr.bf16.mxu0 0
        %737 = vmatpush1.bf16.msra.mxu0 0
        %738 = vmatprep.subr.bf16.mxu0 0
        %739 = vmatpush1.bf16.msra.mxu0 0
        %740 = vmatprep.mubr.bf16.mxu0 0
        %741 = vmatmul.mubr.bf16.gmra.mrb[0].mxu0 %v667
        %v742 = vpop.f32.mrb[0].mxu0
        %v743 = vadd.f32 %v530, %v742
        %v744 = vpop.f32.mrb[0].mxu0
        %v745 = vadd.f32 %v532, %v744
        %v746 = vpop.f32.mrb[0].mxu0
        %v747 = vadd.f32 %v534, %v746
        %v748 = vpop.f32.mrb[0].mxu0
        %v749 = vadd.f32 %v536, %v748
        %750 = vmatprep.mubr.bf16.mxu0 0
        %751 = vmatmul.mubr.bf16.gmra.mrb[0].mxu0 %v670
        %v752 = vpop.f32.mrb[0].mxu0
        %v753 = vadd.f32 %v540, %v752
        %v754 = vpop.f32.mrb[0].mxu0
        %v755 = vadd.f32 %v542, %v754
        %v756 = vpop.f32.mrb[0].mxu0
        %v757 = vadd.f32 %v544, %v756
        %v758 = vpop.f32.mrb[0].mxu0
        %v759 = vadd.f32 %v546, %v758
        %760 = vmatprep.mubr.bf16.mxu0 0
        %761 = vmatmul.mubr.bf16.gmra.mrb[0].mxu0 %v673
        %v762 = vpop.f32.mrb[0].mxu0
        %v763 = vadd.f32 %v550, %v762
        %v764 = vpop.f32.mrb[0].mxu0
        %v765 = vadd.f32 %v552, %v764
        %v766 = vpop.f32.mrb[0].mxu0
        %v767 = vadd.f32 %v554, %v766
        %v768 = vpop.f32.mrb[0].mxu0
        %v769 = vadd.f32 %v556, %v768
        %770 = vmatprep.mubr.bf16.mxu0 0
        %771 = vmatmul.mubr.bf16.gmra.mrb[0].mxu0 %v676
        %v772 = vpop.f32.mrb[0].mxu0
        %v773 = vadd.f32 %v560, %v772
        %v774 = vpop.f32.mrb[0].mxu0
        %v775 = vadd.f32 %v562, %v774
        %v776 = vpop.f32.mrb[0].mxu0
        %v777 = vadd.f32 %v564, %v776
        %v778 = vpop.f32.mrb[0].mxu0
        %v779 = vadd.f32 %v566, %v778
        %780 = vmatprep.mubr.bf16.mxu0 0
        %781 = vmatmul.mubr.bf16.gmra.mrb[0].mxu0 %v679
        %v782 = vpop.f32.mrb[0].mxu0
        %v783 = vadd.f32 %v570, %v782
        %v784 = vpop.f32.mrb[0].mxu0
        %v785 = vadd.f32 %v572, %v784
        %v786 = vpop.f32.mrb[0].mxu0
        %v787 = vadd.f32 %v574, %v786
        %v788 = vpop.f32.mrb[0].mxu0
        %v789 = vadd.f32 %v576, %v788
        %790 = vmatprep.mubr.bf16.mxu0 0
        %791 = vmatmul.mubr.bf16.gmra.mrb[0].mxu0 %v682
        %v792 = vpop.f32.mrb[0].mxu0
        %v793 = vadd.f32 %v580, %v792
        %v794 = vpop.f32.mrb[0].mxu0
        %v795 = vadd.f32 %v582, %v794
        %v796 = vpop.f32.mrb[0].mxu0
        %v797 = vadd.f32 %v584, %v796
        %v798 = vpop.f32.mrb[0].mxu0
        %v799 = vadd.f32 %v586, %v798
        %800 = vmatprep.mubr.bf16.mxu0 0
        %801 = vmatmul.mubr.bf16.gmra.mrb[0].mxu0 %v685
        %v802 = vpop.f32.mrb[0].mxu0
        %v803 = vadd.f32 %v590, %v802
        %v804 = vpop.f32.mrb[0].mxu0
        %v805 = vadd.f32 %v592, %v804
        %v806 = vpop.f32.mrb[0].mxu0
        %v807 = vadd.f32 %v594, %v806
        %v808 = vpop.f32.mrb[0].mxu0
        %v809 = vadd.f32 %v596, %v808
        %810 = vmatprep.mubr.bf16.mxu0 0
        %811 = vmatmul.mubr.bf16.gmra.mrb[0].mxu0 %v688
        %v812 = vpop.f32.mrb[0].mxu0
        %v813 = vadd.f32 %v600, %v812
        %v814 = vpop.f32.mrb[0].mxu0
        %v815 = vadd.f32 %v602, %v814
        %v816 = vpop.f32.mrb[0].mxu0
        %v817 = vadd.f32 %v604, %v816
        %v818 = vpop.f32.mrb[0].mxu0
        %v819 = vadd.f32 %v606, %v818
        %820 = vmatprep.mubr.bf16.mxu0 0
        %821 = vmatmul.mubr.bf16.gmra.mrb[0].mxu0 %v691
        %v822 = vpop.f32.mrb[0].mxu0
        %v823 = vadd.f32 %v610, %v822
        %v824 = vpop.f32.mrb[0].mxu0
        %v825 = vadd.f32 %v612, %v824
        %v826 = vpop.f32.mrb[0].mxu0
        %v827 = vadd.f32 %v614, %v826
        %v828 = vpop.f32.mrb[0].mxu0
        %v829 = vadd.f32 %v616, %v828
        %830 = vmatprep.mubr.bf16.mxu0 0
        %831 = vmatmul.mubr.bf16.gmra.mrb[0].mxu0 %v694
        %v832 = vpop.f32.mrb[0].mxu0
        %v833 = vadd.f32 %v620, %v832
        %v834 = vpop.f32.mrb[0].mxu0
        %v835 = vadd.f32 %v622, %v834
        %v836 = vpop.f32.mrb[0].mxu0
        %v837 = vadd.f32 %v624, %v836
        %v838 = vpop.f32.mrb[0].mxu0
        %v839 = vadd.f32 %v626, %v838
        %840 = vmatprep.mubr.bf16.mxu0 0
        %841 = vmatmul.mubr.bf16.gmra.mrb[0].mxu0 %v697
        %v842 = vpop.f32.mrb[0].mxu0
        %v843 = vadd.f32 %v630, %v842
        %v844 = vpop.f32.mrb[0].mxu0
        %v845 = vadd.f32 %v632, %v844
        %v846 = vpop.f32.mrb[0].mxu0
        %v847 = vadd.f32 %v634, %v846
        %v848 = vpop.f32.mrb[0].mxu0
        %v849 = vadd.f32 %v636, %v848
        %850 = vmatprep.mubr.bf16.mxu0 0
        %851 = vmatmul.mubr.bf16.gmra.mrb[0].mxu0 %v700
        %v852 = vpop.f32.mrb[0].mxu0
        %v853 = vadd.f32 %v640, %v852
        %v854 = vpop.f32.mrb[0].mxu0
        %v855 = vadd.f32 %v642, %v854
        %v856 = vpop.f32.mrb[0].mxu0
        %v857 = vadd.f32 %v644, %v856
        %v858 = vpop.f32.mrb[0].mxu0
        %v859 = vadd.f32 %v646, %v858
        %860 = vdwg.mxu0
        %v861 = vld [vmem:[%s349 + $0x2] sm:$0xff]
        %v862 = vld [vmem:[%s349 + $0xa] sm:$0xff]
        %v863 = vld [vmem:[%s349 + $0x12] sm:$0xff]
        %v864 = vld [vmem:[%s349 + $0x22] sm:$0xff]
        %v865 = vld [vmem:[%s349 + $0x2a] sm:$0xff]
        %v866 = vld [vmem:[%s349 + $0x32] sm:$0xff]
        %v867 = vld [vmem:[%s349 + $0x42] sm:$0xff]
        %v868 = vld [vmem:[%s349 + $0x4a] sm:$0xff]
        %v869 = vld [vmem:[%s349 + $0x52] sm:$0xff]
        %v870 = vld [vmem:[%s349 + $0x62] sm:$0xff]
        %v871 = vld [vmem:[%s349 + $0x6a] sm:$0xff]
        %v872 = vld [vmem:[%s349 + $0x72] sm:$0xff]
        %v873 = vld [vmem:[%s349 + $0x82] sm:$0xff]
        %v874 = vld [vmem:[%s349 + $0x8a] sm:$0xff]
        %v875 = vld [vmem:[%s349 + $0x92] sm:$0xff]
        %v876 = vld [vmem:[%s349 + $0xa2] sm:$0xff]
        %v877 = vld [vmem:[%s349 + $0xaa] sm:$0xff]
        %v878 = vld [vmem:[%s349 + $0xb2] sm:$0xff]
        %v879 = vld [vmem:[%s349 + $0xc2] sm:$0xff]
        %v880 = vld [vmem:[%s349 + $0xca] sm:$0xff]
        %v881 = vld [vmem:[%s349 + $0xd2] sm:$0xff]
        %v882 = vld [vmem:[%s349 + $0xe2] sm:$0xff]
        %v883 = vld [vmem:[%s349 + $0xea] sm:$0xff]
        %v884 = vld [vmem:[%s349 + $0xf2] sm:$0xff]
        %v885 = vpack.c.bf16 %v862, %v861
        %v886 = vpack.c.bf16 %v864, %v863
        %v887 = vpack.c.bf16 %v866, %v865
        %v888 = vpack.c.bf16 %v868, %v867
        %v889 = vpack.c.bf16 %v870, %v869
        %v890 = vpack.c.bf16 %v872, %v871
        %v891 = vpack.c.bf16 %v874, %v873
        %v892 = vpack.c.bf16 %v876, %v875
        %v893 = vpack.c.bf16 %v878, %v877
        %v894 = vpack.c.bf16 %v880, %v879
        %v895 = vpack.c.bf16 %v882, %v881
        %v896 = vpack.c.bf16 %v884, %v883
        %s897 = scalar_lea.vmem %s1, 64
        %v898 = vld [vmem:[%s897] sm:$0xff]
        %v899 = vld [vmem:[%s897 + $0x8] sm:$0xff]
        %v900 = vld [vmem:[%s897 + $0x10] sm:$0xff]
        %v901 = vld [vmem:[%s897 + $0x18] sm:$0x33]
        %v906 = vunpack.c.l.b16 %v898
        %v907 = vunpack.c.h.b16 %v898
        %v908 = vunpack.c.l.b16 %v899
        %v909 = vunpack.c.h.b16 %v899
        %v910 = vunpack.c.l.b16 %v900
        %v911 = vunpack.c.h.b16 %v900
        %v912 = vunpack.c.l.b16 %v901
        %v913 = vunpack.c.h.b16 %v901
        %v914 = vpack.c.b16 %v908, %v906
        %v915 = vpack.c.b16 %v909, %v907
        %v916 = vpack.c.b16 %v912, %v910
        %v917 = vpack.c.b16 %v913, %v911
        %v921 = vsel %vm451, %v885, 0
        %v924 = vsel %vm451, %v886, 0
        %v927 = vsel %vm451, %v887, 0
        %v930 = vsel %vm451, %v888, 0
        %v933 = vsel %vm451, %v889, 0
        %v936 = vsel %vm451, %v890, 0
        %v939 = vsel %vm451, %v891, 0
        %v942 = vsel %vm451, %v892, 0
        %v945 = vsel %vm451, %v893, 0
        %v948 = vsel %vm451, %v894, 0
        %v951 = vsel %vm451, %v895, 0
        %v954 = vsel %vm451, %v896, 0
        %v957 = vsel %vm488, %v916, 0
        %v960 = vsel %vm488, %v917, 0
        %962 = vmatprep.subr.bf16.mxu0 %v915
        %963 = vmatpush1.bf16.msra.mxu0 %v914
        %964 = vmatprep.subr.bf16.mxu0 %v960
        %965 = vmatpush1.bf16.msra.mxu0 %v957
        %966 = vmatprep.subr.bf16.mxu0 0
        %967 = vmatpush1.bf16.msra.mxu0 0
        %968 = vmatprep.subr.bf16.mxu0 0
        %969 = vmatpush1.bf16.msra.mxu0 0
        %970 = vmatprep.subr.bf16.mxu0 0
        %971 = vmatpush1.bf16.msra.mxu0 0
        %972 = vmatprep.subr.bf16.mxu0 0
        %973 = vmatpush1.bf16.msra.mxu0 0
        %974 = vmatprep.subr.bf16.mxu0 0
        %975 = vmatpush1.bf16.msra.mxu0 0
        %976 = vmatprep.subr.bf16.mxu0 0
        %977 = vmatpush1.bf16.msra.mxu0 0
        %978 = vmatprep.subr.bf16.mxu0 0
        %979 = vmatpush1.bf16.msra.mxu0 0
        %980 = vmatprep.subr.bf16.mxu0 0
        %981 = vmatpush1.bf16.msra.mxu0 0
        %982 = vmatprep.subr.bf16.mxu0 0
        %983 = vmatpush1.bf16.msra.mxu0 0
        %984 = vmatprep.subr.bf16.mxu0 0
        %985 = vmatpush1.bf16.msra.mxu0 0
        %986 = vmatprep.subr.bf16.mxu0 0
        %987 = vmatpush1.bf16.msra.mxu0 0
        %988 = vmatprep.subr.bf16.mxu0 0
        %989 = vmatpush1.bf16.msra.mxu0 0
        %990 = vmatprep.subr.bf16.mxu0 0
        %991 = vmatpush1.bf16.msra.mxu0 0
        %992 = vmatprep.subr.bf16.mxu0 0
        %993 = vmatpush1.bf16.msra.mxu0 0
        %994 = vmatprep.mubr.bf16.mxu0 0
        %995 = vmatmul.mubr.bf16.gmra.mrb[0].mxu0 %v921
        %v996 = vpop.f32.mrb[0].mxu0
        %v997 = vadd.f32 0.0, %v996
        %v998 = vpop.f32.mrb[0].mxu0
        %v999 = vadd.f32 0.0, %v998
        %v1000 = vpop.f32.mrb[0].mxu0
        %v1001 = vadd.f32 0.0, %v1000
        %v1002 = vpop.f32.mrb[0].mxu0
        %v1003 = vadd.f32 0.0, %v1002
        %1004 = vmatprep.mubr.bf16.mxu0 0
        %1005 = vmatmul.mubr.bf16.gmra.mrb[0].mxu0 %v924
        %v1006 = vpop.f32.mrb[0].mxu0
        %v1007 = vadd.f32 0.0, %v1006
        %v1008 = vpop.f32.mrb[0].mxu0
        %v1009 = vadd.f32 0.0, %v1008
        %v1010 = vpop.f32.mrb[0].mxu0
        %v1011 = vadd.f32 0.0, %v1010
        %v1012 = vpop.f32.mrb[0].mxu0
        %v1013 = vadd.f32 0.0, %v1012
        %1014 = vmatprep.mubr.bf16.mxu0 0
        %1015 = vmatmul.mubr.bf16.gmra.mrb[0].mxu0 %v927
        %v1016 = vpop.f32.mrb[0].mxu0
        %v1017 = vadd.f32 0.0, %v1016
        %v1018 = vpop.f32.mrb[0].mxu0
        %v1019 = vadd.f32 0.0, %v1018
        %v1020 = vpop.f32.mrb[0].mxu0
        %v1021 = vadd.f32 0.0, %v1020
        %v1022 = vpop.f32.mrb[0].mxu0
        %v1023 = vadd.f32 0.0, %v1022
        %1024 = vmatprep.mubr.bf16.mxu0 0
        %1025 = vmatmul.mubr.bf16.gmra.mrb[0].mxu0 %v930
        %v1026 = vpop.f32.mrb[0].mxu0
        %v1027 = vadd.f32 0.0, %v1026
        %v1028 = vpop.f32.mrb[0].mxu0
        %v1029 = vadd.f32 0.0, %v1028
        %v1030 = vpop.f32.mrb[0].mxu0
        %v1031 = vadd.f32 0.0, %v1030
        %v1032 = vpop.f32.mrb[0].mxu0
        %v1033 = vadd.f32 0.0, %v1032
        %1034 = vmatprep.mubr.bf16.mxu0 0
        %1035 = vmatmul.mubr.bf16.gmra.mrb[0].mxu0 %v933
        %v1036 = vpop.f32.mrb[0].mxu0
        %v1037 = vadd.f32 0.0, %v1036
        %v1038 = vpop.f32.mrb[0].mxu0
        %v1039 = vadd.f32 0.0, %v1038
        %v1040 = vpop.f32.mrb[0].mxu0
        %v1041 = vadd.f32 0.0, %v1040
        %v1042 = vpop.f32.mrb[0].mxu0
        %v1043 = vadd.f32 0.0, %v1042
        %1044 = vmatprep.mubr.bf16.mxu0 0
        %1045 = vmatmul.mubr.bf16.gmra.mrb[0].mxu0 %v936
        %v1046 = vpop.f32.mrb[0].mxu0
        %v1047 = vadd.f32 0.0, %v1046
        %v1048 = vpop.f32.mrb[0].mxu0
        %v1049 = vadd.f32 0.0, %v1048
        %v1050 = vpop.f32.mrb[0].mxu0
        %v1051 = vadd.f32 0.0, %v1050
        %v1052 = vpop.f32.mrb[0].mxu0
        %v1053 = vadd.f32 0.0, %v1052
        %1054 = vmatprep.mubr.bf16.mxu0 0
        %1055 = vmatmul.mubr.bf16.gmra.mrb[0].mxu0 %v939
        %v1056 = vpop.f32.mrb[0].mxu0
        %v1057 = vadd.f32 0.0, %v1056
        %v1058 = vpop.f32.mrb[0].mxu0
        %v1059 = vadd.f32 0.0, %v1058
        %v1060 = vpop.f32.mrb[0].mxu0
        %v1061 = vadd.f32 0.0, %v1060
        %v1062 = vpop.f32.mrb[0].mxu0
        %v1063 = vadd.f32 0.0, %v1062
        %1064 = vmatprep.mubr.bf16.mxu0 0
        %1065 = vmatmul.mubr.bf16.gmra.mrb[0].mxu0 %v942
        %v1066 = vpop.f32.mrb[0].mxu0
        %v1067 = vadd.f32 0.0, %v1066
        %v1068 = vpop.f32.mrb[0].mxu0
        %v1069 = vadd.f32 0.0, %v1068
        %v1070 = vpop.f32.mrb[0].mxu0
        %v1071 = vadd.f32 0.0, %v1070
        %v1072 = vpop.f32.mrb[0].mxu0
        %v1073 = vadd.f32 0.0, %v1072
        %1074 = vmatprep.mubr.bf16.mxu0 0
        %1075 = vmatmul.mubr.bf16.gmra.mrb[0].mxu0 %v945
        %v1076 = vpop.f32.mrb[0].mxu0
        %v1077 = vadd.f32 0.0, %v1076
        %v1078 = vpop.f32.mrb[0].mxu0
        %v1079 = vadd.f32 0.0, %v1078
        %v1080 = vpop.f32.mrb[0].mxu0
        %v1081 = vadd.f32 0.0, %v1080
        %v1082 = vpop.f32.mrb[0].mxu0
        %v1083 = vadd.f32 0.0, %v1082
        %1084 = vmatprep.mubr.bf16.mxu0 0
        %1085 = vmatmul.mubr.bf16.gmra.mrb[0].mxu0 %v948
        %v1086 = vpop.f32.mrb[0].mxu0
        %v1087 = vadd.f32 0.0, %v1086
        %v1088 = vpop.f32.mrb[0].mxu0
        %v1089 = vadd.f32 0.0, %v1088
        %v1090 = vpop.f32.mrb[0].mxu0
        %v1091 = vadd.f32 0.0, %v1090
        %v1092 = vpop.f32.mrb[0].mxu0
        %v1093 = vadd.f32 0.0, %v1092
        %1094 = vmatprep.mubr.bf16.mxu0 0
        %1095 = vmatmul.mubr.bf16.gmra.mrb[0].mxu0 %v951
        %v1096 = vpop.f32.mrb[0].mxu0
        %v1097 = vadd.f32 0.0, %v1096
        %v1098 = vpop.f32.mrb[0].mxu0
        %v1099 = vadd.f32 0.0, %v1098
        %v1100 = vpop.f32.mrb[0].mxu0
        %v1101 = vadd.f32 0.0, %v1100
        %v1102 = vpop.f32.mrb[0].mxu0
        %v1103 = vadd.f32 0.0, %v1102
        %1104 = vmatprep.mubr.bf16.mxu0 0
        %1105 = vmatmul.mubr.bf16.gmra.mrb[0].mxu0 %v954
        %v1106 = vpop.f32.mrb[0].mxu0
        %v1107 = vadd.f32 0.0, %v1106
        %v1108 = vpop.f32.mrb[0].mxu0
        %v1109 = vadd.f32 0.0, %v1108
        %v1110 = vpop.f32.mrb[0].mxu0
        %v1111 = vadd.f32 0.0, %v1110
        %v1112 = vpop.f32.mrb[0].mxu0
        %v1113 = vadd.f32 0.0, %v1112
        %1114 = vdwg.mxu0
        %v1115 = vadd.f32 %v743, %v997
        %v1116 = vadd.f32 %v745, %v999
        %v1117 = vadd.f32 %v747, %v1001
        %v1118 = vadd.f32 %v749, %v1003
        %v1119 = vadd.f32 %v753, %v1007
        %v1120 = vadd.f32 %v755, %v1009
        %v1121 = vadd.f32 %v757, %v1011
        %v1122 = vadd.f32 %v759, %v1013
        %v1123 = vadd.f32 %v763, %v1017
        %v1124 = vadd.f32 %v765, %v1019
        %v1125 = vadd.f32 %v767, %v1021
        %v1126 = vadd.f32 %v769, %v1023
        %v1127 = vadd.f32 %v773, %v1027
        %v1128 = vadd.f32 %v775, %v1029
        %v1129 = vadd.f32 %v777, %v1031
        %v1130 = vadd.f32 %v779, %v1033
        %v1131 = vadd.f32 %v783, %v1037
        %v1132 = vadd.f32 %v785, %v1039
        %v1133 = vadd.f32 %v787, %v1041
        %v1134 = vadd.f32 %v789, %v1043
        %v1135 = vadd.f32 %v793, %v1047
        %v1136 = vadd.f32 %v795, %v1049
        %v1137 = vadd.f32 %v797, %v1051
        %v1138 = vadd.f32 %v799, %v1053
        %v1139 = vadd.f32 %v803, %v1057
        %v1140 = vadd.f32 %v805, %v1059
        %v1141 = vadd.f32 %v807, %v1061
        %v1142 = vadd.f32 %v809, %v1063
        %v1143 = vadd.f32 %v813, %v1067
        %v1144 = vadd.f32 %v815, %v1069
        %v1145 = vadd.f32 %v817, %v1071
        %v1146 = vadd.f32 %v819, %v1073
        %v1147 = vadd.f32 %v823, %v1077
        %v1148 = vadd.f32 %v825, %v1079
        %v1149 = vadd.f32 %v827, %v1081
        %v1150 = vadd.f32 %v829, %v1083
        %v1151 = vadd.f32 %v833, %v1087
        %v1152 = vadd.f32 %v835, %v1089
        %v1153 = vadd.f32 %v837, %v1091
        %v1154 = vadd.f32 %v839, %v1093
        %v1155 = vadd.f32 %v843, %v1097
        %v1156 = vadd.f32 %v845, %v1099
        %v1157 = vadd.f32 %v847, %v1101
        %v1158 = vadd.f32 %v849, %v1103
        %v1159 = vadd.f32 %v853, %v1107
        %v1160 = vadd.f32 %v855, %v1109
        %v1161 = vadd.f32 %v857, %v1111
        %v1162 = vadd.f32 %v859, %v1113
        %v1163 = vld [vmem:[%s349 + $0x3] sm:$0xff]
        %v1164 = vld [vmem:[%s349 + $0xb] sm:$0xff]
        %v1165 = vld [vmem:[%s349 + $0x13] sm:$0xff]
        %v1166 = vld [vmem:[%s349 + $0x23] sm:$0xff]
        %v1167 = vld [vmem:[%s349 + $0x2b] sm:$0xff]
        %v1168 = vld [vmem:[%s349 + $0x33] sm:$0xff]
        %v1169 = vld [vmem:[%s349 + $0x43] sm:$0xff]
        %v1170 = vld [vmem:[%s349 + $0x4b] sm:$0xff]
        %v1171 = vld [vmem:[%s349 + $0x53] sm:$0xff]
        %v1172 = vld [vmem:[%s349 + $0x63] sm:$0xff]
        %v1173 = vld [vmem:[%s349 + $0x6b] sm:$0xff]
        %v1174 = vld [vmem:[%s349 + $0x73] sm:$0xff]
        %v1175 = vld [vmem:[%s349 + $0x83] sm:$0xff]
        %v1176 = vld [vmem:[%s349 + $0x8b] sm:$0xff]
        %v1177 = vld [vmem:[%s349 + $0x93] sm:$0xff]
        %v1178 = vld [vmem:[%s349 + $0xa3] sm:$0xff]
        %v1179 = vld [vmem:[%s349 + $0xab] sm:$0xff]
        %v1180 = vld [vmem:[%s349 + $0xb3] sm:$0xff]
        %v1181 = vld [vmem:[%s349 + $0xc3] sm:$0xff]
        %v1182 = vld [vmem:[%s349 + $0xcb] sm:$0xff]
        %v1183 = vld [vmem:[%s349 + $0xd3] sm:$0xff]
        %v1184 = vld [vmem:[%s349 + $0xe3] sm:$0xff]
        %v1185 = vld [vmem:[%s349 + $0xeb] sm:$0xff]
        %v1186 = vld [vmem:[%s349 + $0xf3] sm:$0xff]
        %v1187 = vpack.c.bf16 %v1164, %v1163
        %v1188 = vpack.c.bf16 %v1166, %v1165
        %v1189 = vpack.c.bf16 %v1168, %v1167
        %v1190 = vpack.c.bf16 %v1170, %v1169
        %v1191 = vpack.c.bf16 %v1172, %v1171
        %v1192 = vpack.c.bf16 %v1174, %v1173
        %v1193 = vpack.c.bf16 %v1176, %v1175
        %v1194 = vpack.c.bf16 %v1178, %v1177
        %v1195 = vpack.c.bf16 %v1180, %v1179
        %v1196 = vpack.c.bf16 %v1182, %v1181
        %v1197 = vpack.c.bf16 %v1184, %v1183
        %v1198 = vpack.c.bf16 %v1186, %v1185
        %s1199 = scalar_lea.vmem %s1, 96
        %v1200 = vld [vmem:[%s1199] sm:$0xff]
        %v1201 = vld [vmem:[%s1199 + $0x8] sm:$0xff]
        %v1202 = vld [vmem:[%s1199 + $0x10] sm:$0xff]
        %v1203 = vld [vmem:[%s1199 + $0x18] sm:$0x33]
        %v1208 = vunpack.c.l.b16 %v1200
        %v1209 = vunpack.c.h.b16 %v1200
        %v1210 = vunpack.c.l.b16 %v1201
        %v1211 = vunpack.c.h.b16 %v1201
        %v1212 = vunpack.c.l.b16 %v1202
        %v1213 = vunpack.c.h.b16 %v1202
        %v1214 = vunpack.c.l.b16 %v1203
        %v1215 = vunpack.c.h.b16 %v1203
        %v1216 = vpack.c.b16 %v1210, %v1208
        %v1217 = vpack.c.b16 %v1211, %v1209
        %v1218 = vpack.c.b16 %v1214, %v1212
        %v1219 = vpack.c.b16 %v1215, %v1213
        %v1223 = vsel %vm451, %v1187, 0
        %v1226 = vsel %vm451, %v1188, 0
        %v1229 = vsel %vm451, %v1189, 0
        %v1232 = vsel %vm451, %v1190, 0
        %v1235 = vsel %vm451, %v1191, 0
        %v1238 = vsel %vm451, %v1192, 0
        %v1241 = vsel %vm451, %v1193, 0
        %v1244 = vsel %vm451, %v1194, 0
        %v1247 = vsel %vm451, %v1195, 0
        %v1250 = vsel %vm451, %v1196, 0
        %v1253 = vsel %vm451, %v1197, 0
        %v1256 = vsel %vm451, %v1198, 0
        %v1259 = vsel %vm488, %v1218, 0
        %v1262 = vsel %vm488, %v1219, 0
        %1264 = vmatprep.subr.bf16.mxu0 %v1217
        %1265 = vmatpush1.bf16.msra.mxu0 %v1216
        %1266 = vmatprep.subr.bf16.mxu0 %v1262
        %1267 = vmatpush1.bf16.msra.mxu0 %v1259
        %1268 = vmatprep.subr.bf16.mxu0 0
        %1269 = vmatpush1.bf16.msra.mxu0 0
        %1270 = vmatprep.subr.bf16.mxu0 0
        %1271 = vmatpush1.bf16.msra.mxu0 0
        %1272 = vmatprep.subr.bf16.mxu0 0
        %1273 = vmatpush1.bf16.msra.mxu0 0
        %1274 = vmatprep.subr.bf16.mxu0 0
        %1275 = vmatpush1.bf16.msra.mxu0 0
        %1276 = vmatprep.subr.bf16.mxu0 0
        %1277 = vmatpush1.bf16.msra.mxu0 0
        %1278 = vmatprep.subr.bf16.mxu0 0
        %1279 = vmatpush1.bf16.msra.mxu0 0
        %1280 = vmatprep.subr.bf16.mxu0 0
        %1281 = vmatpush1.bf16.msra.mxu0 0
        %1282 = vmatprep.subr.bf16.mxu0 0
        %1283 = vmatpush1.bf16.msra.mxu0 0
        %1284 = vmatprep.subr.bf16.mxu0 0
        %1285 = vmatpush1.bf16.msra.mxu0 0
        %1286 = vmatprep.subr.bf16.mxu0 0
        %1287 = vmatpush1.bf16.msra.mxu0 0
        %1288 = vmatprep.subr.bf16.mxu0 0
        %1289 = vmatpush1.bf16.msra.mxu0 0
        %1290 = vmatprep.subr.bf16.mxu0 0
        %1291 = vmatpush1.bf16.msra.mxu0 0
        %1292 = vmatprep.subr.bf16.mxu0 0
        %1293 = vmatpush1.bf16.msra.mxu0 0
        %1294 = vmatprep.subr.bf16.mxu0 0
        %1295 = vmatpush1.bf16.msra.mxu0 0
        %1296 = vmatprep.mubr.bf16.mxu0 0
        %1297 = vmatmul.mubr.bf16.gmra.mrb[0].mxu0 %v1223
        %v1298 = vpop.f32.mrb[0].mxu0
        %v1299 = vadd.f32 0.0, %v1298
        %v1300 = vpop.f32.mrb[0].mxu0
        %v1301 = vadd.f32 0.0, %v1300
        %v1302 = vpop.f32.mrb[0].mxu0
        %v1303 = vadd.f32 0.0, %v1302
        %v1304 = vpop.f32.mrb[0].mxu0
        %v1305 = vadd.f32 0.0, %v1304
        %1306 = vmatprep.mubr.bf16.mxu0 0
        %1307 = vmatmul.mubr.bf16.gmra.mrb[0].mxu0 %v1226
        %v1308 = vpop.f32.mrb[0].mxu0
        %v1309 = vadd.f32 0.0, %v1308
        %v1310 = vpop.f32.mrb[0].mxu0
        %v1311 = vadd.f32 0.0, %v1310
        %v1312 = vpop.f32.mrb[0].mxu0
        %v1313 = vadd.f32 0.0, %v1312
        %v1314 = vpop.f32.mrb[0].mxu0
        %v1315 = vadd.f32 0.0, %v1314
        %1316 = vmatprep.mubr.bf16.mxu0 0
        %1317 = vmatmul.mubr.bf16.gmra.mrb[0].mxu0 %v1229
        %v1318 = vpop.f32.mrb[0].mxu0
        %v1319 = vadd.f32 0.0, %v1318
        %v1320 = vpop.f32.mrb[0].mxu0
        %v1321 = vadd.f32 0.0, %v1320
        %v1322 = vpop.f32.mrb[0].mxu0
        %v1323 = vadd.f32 0.0, %v1322
        %v1324 = vpop.f32.mrb[0].mxu0
        %v1325 = vadd.f32 0.0, %v1324
        %1326 = vmatprep.mubr.bf16.mxu0 0
        %1327 = vmatmul.mubr.bf16.gmra.mrb[0].mxu0 %v1232
        %v1328 = vpop.f32.mrb[0].mxu0
        %v1329 = vadd.f32 0.0, %v1328
        %v1330 = vpop.f32.mrb[0].mxu0
        %v1331 = vadd.f32 0.0, %v1330
        %v1332 = vpop.f32.mrb[0].mxu0
        %v1333 = vadd.f32 0.0, %v1332
        %v1334 = vpop.f32.mrb[0].mxu0
        %v1335 = vadd.f32 0.0, %v1334
        %1336 = vmatprep.mubr.bf16.mxu0 0
        %1337 = vmatmul.mubr.bf16.gmra.mrb[0].mxu0 %v1235
        %v1338 = vpop.f32.mrb[0].mxu0
        %v1339 = vadd.f32 0.0, %v1338
        %v1340 = vpop.f32.mrb[0].mxu0
        %v1341 = vadd.f32 0.0, %v1340
        %v1342 = vpop.f32.mrb[0].mxu0
        %v1343 = vadd.f32 0.0, %v1342
        %v1344 = vpop.f32.mrb[0].mxu0
        %v1345 = vadd.f32 0.0, %v1344
        %1346 = vmatprep.mubr.bf16.mxu0 0
        %1347 = vmatmul.mubr.bf16.gmra.mrb[0].mxu0 %v1238
        %v1348 = vpop.f32.mrb[0].mxu0
        %v1349 = vadd.f32 0.0, %v1348
        %v1350 = vpop.f32.mrb[0].mxu0
        %v1351 = vadd.f32 0.0, %v1350
        %v1352 = vpop.f32.mrb[0].mxu0
        %v1353 = vadd.f32 0.0, %v1352
        %v1354 = vpop.f32.mrb[0].mxu0
        %v1355 = vadd.f32 0.0, %v1354
        %1356 = vmatprep.mubr.bf16.mxu0 0
        %1357 = vmatmul.mubr.bf16.gmra.mrb[0].mxu0 %v1241
        %v1358 = vpop.f32.mrb[0].mxu0
        %v1359 = vadd.f32 0.0, %v1358
        %v1360 = vpop.f32.mrb[0].mxu0
        %v1361 = vadd.f32 0.0, %v1360
        %v1362 = vpop.f32.mrb[0].mxu0
        %v1363 = vadd.f32 0.0, %v1362
        %v1364 = vpop.f32.mrb[0].mxu0
        %v1365 = vadd.f32 0.0, %v1364
        %1366 = vmatprep.mubr.bf16.mxu0 0
        %1367 = vmatmul.mubr.bf16.gmra.mrb[0].mxu0 %v1244
        %v1368 = vpop.f32.mrb[0].mxu0
        %v1369 = vadd.f32 0.0, %v1368
        %v1370 = vpop.f32.mrb[0].mxu0
        %v1371 = vadd.f32 0.0, %v1370
        %v1372 = vpop.f32.mrb[0].mxu0
        %v1373 = vadd.f32 0.0, %v1372
        %v1374 = vpop.f32.mrb[0].mxu0
        %v1375 = vadd.f32 0.0, %v1374
        %1376 = vmatprep.mubr.bf16.mxu0 0
        %1377 = vmatmul.mubr.bf16.gmra.mrb[0].mxu0 %v1247
        %v1378 = vpop.f32.mrb[0].mxu0
        %v1379 = vadd.f32 0.0, %v1378
        %v1380 = vpop.f32.mrb[0].mxu0
        %v1381 = vadd.f32 0.0, %v1380
        %v1382 = vpop.f32.mrb[0].mxu0
        %v1383 = vadd.f32 0.0, %v1382
        %v1384 = vpop.f32.mrb[0].mxu0
        %v1385 = vadd.f32 0.0, %v1384
        %1386 = vmatprep.mubr.bf16.mxu0 0
        %1387 = vmatmul.mubr.bf16.gmra.mrb[0].mxu0 %v1250
        %v1388 = vpop.f32.mrb[0].mxu0
        %v1389 = vadd.f32 0.0, %v1388
        %v1390 = vpop.f32.mrb[0].mxu0
        %v1391 = vadd.f32 0.0, %v1390
        %v1392 = vpop.f32.mrb[0].mxu0
        %v1393 = vadd.f32 0.0, %v1392
        %v1394 = vpop.f32.mrb[0].mxu0
        %v1395 = vadd.f32 0.0, %v1394
        %1396 = vmatprep.mubr.bf16.mxu0 0
        %1397 = vmatmul.mubr.bf16.gmra.mrb[0].mxu0 %v1253
        %v1398 = vpop.f32.mrb[0].mxu0
        %v1399 = vadd.f32 0.0, %v1398
        %v1400 = vpop.f32.mrb[0].mxu0
        %v1401 = vadd.f32 0.0, %v1400
        %v1402 = vpop.f32.mrb[0].mxu0
        %v1403 = vadd.f32 0.0, %v1402
        %v1404 = vpop.f32.mrb[0].mxu0
        %v1405 = vadd.f32 0.0, %v1404
        %1406 = vmatprep.mubr.bf16.mxu0 0
        %1407 = vmatmul.mubr.bf16.gmra.mrb[0].mxu0 %v1256
        %v1408 = vpop.f32.mrb[0].mxu0
        %v1409 = vadd.f32 0.0, %v1408
        %v1410 = vpop.f32.mrb[0].mxu0
        %v1411 = vadd.f32 0.0, %v1410
        %v1412 = vpop.f32.mrb[0].mxu0
        %v1413 = vadd.f32 0.0, %v1412
        %v1414 = vpop.f32.mrb[0].mxu0
        %v1415 = vadd.f32 0.0, %v1414
        %1416 = vdwg.mxu0
        %v1417 = vadd.f32 %v1115, %v1299
        %v1418 = vadd.f32 %v1116, %v1301
        %v1419 = vadd.f32 %v1117, %v1303
        %v1420 = vadd.f32 %v1118, %v1305
        %v1421 = vadd.f32 %v1119, %v1309
        %v1422 = vadd.f32 %v1120, %v1311
        %v1423 = vadd.f32 %v1121, %v1313
        %v1424 = vadd.f32 %v1122, %v1315
        %v1425 = vadd.f32 %v1123, %v1319
        %v1426 = vadd.f32 %v1124, %v1321
        %v1427 = vadd.f32 %v1125, %v1323
        %v1428 = vadd.f32 %v1126, %v1325
        %v1429 = vadd.f32 %v1127, %v1329
        %v1430 = vadd.f32 %v1128, %v1331
        %v1431 = vadd.f32 %v1129, %v1333
        %v1432 = vadd.f32 %v1130, %v1335
        %v1433 = vadd.f32 %v1131, %v1339
        %v1434 = vadd.f32 %v1132, %v1341
        %v1435 = vadd.f32 %v1133, %v1343
        %v1436 = vadd.f32 %v1134, %v1345
        %v1437 = vadd.f32 %v1135, %v1349
        %v1438 = vadd.f32 %v1136, %v1351
        %v1439 = vadd.f32 %v1137, %v1353
        %v1440 = vadd.f32 %v1138, %v1355
        %v1441 = vadd.f32 %v1139, %v1359
        %v1442 = vadd.f32 %v1140, %v1361
        %v1443 = vadd.f32 %v1141, %v1363
        %v1444 = vadd.f32 %v1142, %v1365
        %v1445 = vadd.f32 %v1143, %v1369
        %v1446 = vadd.f32 %v1144, %v1371
        %v1447 = vadd.f32 %v1145, %v1373
        %v1448 = vadd.f32 %v1146, %v1375
        %v1449 = vadd.f32 %v1147, %v1379
        %v1450 = vadd.f32 %v1148, %v1381
        %v1451 = vadd.f32 %v1149, %v1383
        %v1452 = vadd.f32 %v1150, %v1385
        %v1453 = vadd.f32 %v1151, %v1389
        %v1454 = vadd.f32 %v1152, %v1391
        %v1455 = vadd.f32 %v1153, %v1393
        %v1456 = vadd.f32 %v1154, %v1395
        %v1457 = vadd.f32 %v1155, %v1399
        %v1458 = vadd.f32 %v1156, %v1401
        %v1459 = vadd.f32 %v1157, %v1403
        %v1460 = vadd.f32 %v1158, %v1405
        %v1461 = vadd.f32 %v1159, %v1409
        %v1462 = vadd.f32 %v1160, %v1411
        %v1463 = vadd.f32 %v1161, %v1413
        %v1464 = vadd.f32 %v1162, %v1415
        %v1465 = vld [vmem:[%s349 + $0x4] sm:$0xff]
        %v1466 = vld [vmem:[%s349 + $0xc] sm:$0xff]
        %v1467 = vld [vmem:[%s349 + $0x14] sm:$0xff]
        %v1468 = vld [vmem:[%s349 + $0x24] sm:$0xff]
        %v1469 = vld [vmem:[%s349 + $0x2c] sm:$0xff]
        %v1470 = vld [vmem:[%s349 + $0x34] sm:$0xff]
        %v1471 = vld [vmem:[%s349 + $0x44] sm:$0xff]
        %v1472 = vld [vmem:[%s349 + $0x4c] sm:$0xff]
        %v1473 = vld [vmem:[%s349 + $0x54] sm:$0xff]
        %v1474 = vld [vmem:[%s349 + $0x64] sm:$0xff]
        %v1475 = vld [vmem:[%s349 + $0x6c] sm:$0xff]
        %v1476 = vld [vmem:[%s349 + $0x74] sm:$0xff]
        %v1477 = vld [vmem:[%s349 + $0x84] sm:$0xff]
        %v1478 = vld [vmem:[%s349 + $0x8c] sm:$0xff]
        %v1479 = vld [vmem:[%s349 + $0x94] sm:$0xff]
        %v1480 = vld [vmem:[%s349 + $0xa4] sm:$0xff]
        %v1481 = vld [vmem:[%s349 + $0xac] sm:$0xff]
        %v1482 = vld [vmem:[%s349 + $0xb4] sm:$0xff]
        %v1483 = vld [vmem:[%s349 + $0xc4] sm:$0xff]
        %v1484 = vld [vmem:[%s349 + $0xcc] sm:$0xff]
        %v1485 = vld [vmem:[%s349 + $0xd4] sm:$0xff]
        %v1486 = vld [vmem:[%s349 + $0xe4] sm:$0xff]
        %v1487 = vld [vmem:[%s349 + $0xec] sm:$0xff]
        %v1488 = vld [vmem:[%s349 + $0xf4] sm:$0xff]
        %v1489 = vpack.c.bf16 %v1466, %v1465
        %v1490 = vpack.c.bf16 %v1468, %v1467
        %v1491 = vpack.c.bf16 %v1470, %v1469
        %v1492 = vpack.c.bf16 %v1472, %v1471
        %v1493 = vpack.c.bf16 %v1474, %v1473
        %v1494 = vpack.c.bf16 %v1476, %v1475
        %v1495 = vpack.c.bf16 %v1478, %v1477
        %v1496 = vpack.c.bf16 %v1480, %v1479
        %v1497 = vpack.c.bf16 %v1482, %v1481
        %v1498 = vpack.c.bf16 %v1484, %v1483
        %v1499 = vpack.c.bf16 %v1486, %v1485
        %v1500 = vpack.c.bf16 %v1488, %v1487
        %s1501 = scalar_lea.vmem %s1, 128
        %v1502 = vld [vmem:[%s1501] sm:$0xff]
        %v1503 = vld [vmem:[%s1501 + $0x8] sm:$0xff]
        %v1504 = vld [vmem:[%s1501 + $0x10] sm:$0xff]
        %v1505 = vld [vmem:[%s1501 + $0x18] sm:$0x33]
        %v1510 = vunpack.c.l.b16 %v1502
        %v1511 = vunpack.c.h.b16 %v1502
        %v1512 = vunpack.c.l.b16 %v1503
        %v1513 = vunpack.c.h.b16 %v1503
        %v1514 = vunpack.c.l.b16 %v1504
        %v1515 = vunpack.c.h.b16 %v1504
        %v1516 = vunpack.c.l.b16 %v1505
        %v1517 = vunpack.c.h.b16 %v1505
        %v1518 = vpack.c.b16 %v1512, %v1510
        %v1519 = vpack.c.b16 %v1513, %v1511
        %v1520 = vpack.c.b16 %v1516, %v1514
        %v1521 = vpack.c.b16 %v1517, %v1515
        %v1525 = vsel %vm451, %v1489, 0
        %v1528 = vsel %vm451, %v1490, 0
        %v1531 = vsel %vm451, %v1491, 0
        %v1534 = vsel %vm451, %v1492, 0
        %v1537 = vsel %vm451, %v1493, 0
        %v1540 = vsel %vm451, %v1494, 0
        %v1543 = vsel %vm451, %v1495, 0
        %v1546 = vsel %vm451, %v1496, 0
        %v1549 = vsel %vm451, %v1497, 0
        %v1552 = vsel %vm451, %v1498, 0
        %v1555 = vsel %vm451, %v1499, 0
        %v1558 = vsel %vm451, %v1500, 0
        %v1561 = vsel %vm488, %v1520, 0
        %v1564 = vsel %vm488, %v1521, 0
        %1566 = vmatprep.subr.bf16.mxu0 %v1519
        %1567 = vmatpush1.bf16.msra.mxu0 %v1518
        %1568 = vmatprep.subr.bf16.mxu0 %v1564
        %1569 = vmatpush1.bf16.msra.mxu0 %v1561
        %1570 = vmatprep.subr.bf16.mxu0 0
        %1571 = vmatpush1.bf16.msra.mxu0 0
        %1572 = vmatprep.subr.bf16.mxu0 0
        %1573 = vmatpush1.bf16.msra.mxu0 0
        %1574 = vmatprep.subr.bf16.mxu0 0
        %1575 = vmatpush1.bf16.msra.mxu0 0
        %1576 = vmatprep.subr.bf16.mxu0 0
        %1577 = vmatpush1.bf16.msra.mxu0 0
        %1578 = vmatprep.subr.bf16.mxu0 0
        %1579 = vmatpush1.bf16.msra.mxu0 0
        %1580 = vmatprep.subr.bf16.mxu0 0
        %1581 = vmatpush1.bf16.msra.mxu0 0
        %1582 = vmatprep.subr.bf16.mxu0 0
        %1583 = vmatpush1.bf16.msra.mxu0 0
        %1584 = vmatprep.subr.bf16.mxu0 0
        %1585 = vmatpush1.bf16.msra.mxu0 0
        %1586 = vmatprep.subr.bf16.mxu0 0
        %1587 = vmatpush1.bf16.msra.mxu0 0
        %1588 = vmatprep.subr.bf16.mxu0 0
        %1589 = vmatpush1.bf16.msra.mxu0 0
        %1590 = vmatprep.subr.bf16.mxu0 0
        %1591 = vmatpush1.bf16.msra.mxu0 0
        %1592 = vmatprep.subr.bf16.mxu0 0
        %1593 = vmatpush1.bf16.msra.mxu0 0
        %1594 = vmatprep.subr.bf16.mxu0 0
        %1595 = vmatpush1.bf16.msra.mxu0 0
        %1596 = vmatprep.subr.bf16.mxu0 0
        %1597 = vmatpush1.bf16.msra.mxu0 0
        %1598 = vmatprep.mubr.bf16.mxu0 0
        %1599 = vmatmul.mubr.bf16.gmra.mrb[0].mxu0 %v1525
        %v1600 = vpop.f32.mrb[0].mxu0
        %v1601 = vadd.f32 0.0, %v1600
        %v1602 = vpop.f32.mrb[0].mxu0
        %v1603 = vadd.f32 0.0, %v1602
        %v1604 = vpop.f32.mrb[0].mxu0
        %v1605 = vadd.f32 0.0, %v1604
        %v1606 = vpop.f32.mrb[0].mxu0
        %v1607 = vadd.f32 0.0, %v1606
        %1608 = vmatprep.mubr.bf16.mxu0 0
        %1609 = vmatmul.mubr.bf16.gmra.mrb[0].mxu0 %v1528
        %v1610 = vpop.f32.mrb[0].mxu0
        %v1611 = vadd.f32 0.0, %v1610
        %v1612 = vpop.f32.mrb[0].mxu0
        %v1613 = vadd.f32 0.0, %v1612
        %v1614 = vpop.f32.mrb[0].mxu0
        %v1615 = vadd.f32 0.0, %v1614
        %v1616 = vpop.f32.mrb[0].mxu0
        %v1617 = vadd.f32 0.0, %v1616
        %1618 = vmatprep.mubr.bf16.mxu0 0
        %1619 = vmatmul.mubr.bf16.gmra.mrb[0].mxu0 %v1531
        %v1620 = vpop.f32.mrb[0].mxu0
        %v1621 = vadd.f32 0.0, %v1620
        %v1622 = vpop.f32.mrb[0].mxu0
        %v1623 = vadd.f32 0.0, %v1622
        %v1624 = vpop.f32.mrb[0].mxu0
        %v1625 = vadd.f32 0.0, %v1624
        %v1626 = vpop.f32.mrb[0].mxu0
        %v1627 = vadd.f32 0.0, %v1626
        %1628 = vmatprep.mubr.bf16.mxu0 0
        %1629 = vmatmul.mubr.bf16.gmra.mrb[0].mxu0 %v1534
        %v1630 = vpop.f32.mrb[0].mxu0
        %v1631 = vadd.f32 0.0, %v1630
        %v1632 = vpop.f32.mrb[0].mxu0
        %v1633 = vadd.f32 0.0, %v1632
        %v1634 = vpop.f32.mrb[0].mxu0
        %v1635 = vadd.f32 0.0, %v1634
        %v1636 = vpop.f32.mrb[0].mxu0
        %v1637 = vadd.f32 0.0, %v1636
        %1638 = vmatprep.mubr.bf16.mxu0 0
        %1639 = vmatmul.mubr.bf16.gmra.mrb[0].mxu0 %v1537
        %v1640 = vpop.f32.mrb[0].mxu0
        %v1641 = vadd.f32 0.0, %v1640
        %v1642 = vpop.f32.mrb[0].mxu0
        %v1643 = vadd.f32 0.0, %v1642
        %v1644 = vpop.f32.mrb[0].mxu0
        %v1645 = vadd.f32 0.0, %v1644
        %v1646 = vpop.f32.mrb[0].mxu0
        %v1647 = vadd.f32 0.0, %v1646
        %1648 = vmatprep.mubr.bf16.mxu0 0
        %1649 = vmatmul.mubr.bf16.gmra.mrb[0].mxu0 %v1540
        %v1650 = vpop.f32.mrb[0].mxu0
        %v1651 = vadd.f32 0.0, %v1650
        %v1652 = vpop.f32.mrb[0].mxu0
        %v1653 = vadd.f32 0.0, %v1652
        %v1654 = vpop.f32.mrb[0].mxu0
        %v1655 = vadd.f32 0.0, %v1654
        %v1656 = vpop.f32.mrb[0].mxu0
        %v1657 = vadd.f32 0.0, %v1656
        %1658 = vmatprep.mubr.bf16.mxu0 0
        %1659 = vmatmul.mubr.bf16.gmra.mrb[0].mxu0 %v1543
        %v1660 = vpop.f32.mrb[0].mxu0
        %v1661 = vadd.f32 0.0, %v1660
        %v1662 = vpop.f32.mrb[0].mxu0
        %v1663 = vadd.f32 0.0, %v1662
        %v1664 = vpop.f32.mrb[0].mxu0
        %v1665 = vadd.f32 0.0, %v1664
        %v1666 = vpop.f32.mrb[0].mxu0
        %v1667 = vadd.f32 0.0, %v1666
        %1668 = vmatprep.mubr.bf16.mxu0 0
        %1669 = vmatmul.mubr.bf16.gmra.mrb[0].mxu0 %v1546
        %v1670 = vpop.f32.mrb[0].mxu0
        %v1671 = vadd.f32 0.0, %v1670
        %v1672 = vpop.f32.mrb[0].mxu0
        %v1673 = vadd.f32 0.0, %v1672
        %v1674 = vpop.f32.mrb[0].mxu0
        %v1675 = vadd.f32 0.0, %v1674
        %v1676 = vpop.f32.mrb[0].mxu0
        %v1677 = vadd.f32 0.0, %v1676
        %1678 = vmatprep.mubr.bf16.mxu0 0
        %1679 = vmatmul.mubr.bf16.gmra.mrb[0].mxu0 %v1549
        %v1680 = vpop.f32.mrb[0].mxu0
        %v1681 = vadd.f32 0.0, %v1680
        %v1682 = vpop.f32.mrb[0].mxu0
        %v1683 = vadd.f32 0.0, %v1682
        %v1684 = vpop.f32.mrb[0].mxu0
        %v1685 = vadd.f32 0.0, %v1684
        %v1686 = vpop.f32.mrb[0].mxu0
        %v1687 = vadd.f32 0.0, %v1686
        %1688 = vmatprep.mubr.bf16.mxu0 0
        %1689 = vmatmul.mubr.bf16.gmra.mrb[0].mxu0 %v1552
        %v1690 = vpop.f32.mrb[0].mxu0
        %v1691 = vadd.f32 0.0, %v1690
        %v1692 = vpop.f32.mrb[0].mxu0
        %v1693 = vadd.f32 0.0, %v1692
        %v1694 = vpop.f32.mrb[0].mxu0
        %v1695 = vadd.f32 0.0, %v1694
        %v1696 = vpop.f32.mrb[0].mxu0
        %v1697 = vadd.f32 0.0, %v1696
        %1698 = vmatprep.mubr.bf16.mxu0 0
        %1699 = vmatmul.mubr.bf16.gmra.mrb[0].mxu0 %v1555
        %v1700 = vpop.f32.mrb[0].mxu0
        %v1701 = vadd.f32 0.0, %v1700
        %v1702 = vpop.f32.mrb[0].mxu0
        %v1703 = vadd.f32 0.0, %v1702
        %v1704 = vpop.f32.mrb[0].mxu0
        %v1705 = vadd.f32 0.0, %v1704
        %v1706 = vpop.f32.mrb[0].mxu0
        %v1707 = vadd.f32 0.0, %v1706
        %1708 = vmatprep.mubr.bf16.mxu0 0
        %1709 = vmatmul.mubr.bf16.gmra.mrb[0].mxu0 %v1558
        %v1710 = vpop.f32.mrb[0].mxu0
        %v1711 = vadd.f32 0.0, %v1710
        %v1712 = vpop.f32.mrb[0].mxu0
        %v1713 = vadd.f32 0.0, %v1712
        %v1714 = vpop.f32.mrb[0].mxu0
        %v1715 = vadd.f32 0.0, %v1714
        %v1716 = vpop.f32.mrb[0].mxu0
        %v1717 = vadd.f32 0.0, %v1716
        %1718 = vdwg.mxu0
        %v1719 = vadd.f32 %v1417, %v1601
        %v1720 = vadd.f32 %v1418, %v1603
        %v1721 = vadd.f32 %v1419, %v1605
        %v1722 = vadd.f32 %v1420, %v1607
        %v1723 = vadd.f32 %v1421, %v1611
        %v1724 = vadd.f32 %v1422, %v1613
        %v1725 = vadd.f32 %v1423, %v1615
        %v1726 = vadd.f32 %v1424, %v1617
        %v1727 = vadd.f32 %v1425, %v1621
        %v1728 = vadd.f32 %v1426, %v1623
        %v1729 = vadd.f32 %v1427, %v1625
        %v1730 = vadd.f32 %v1428, %v1627
        %v1731 = vadd.f32 %v1429, %v1631
        %v1732 = vadd.f32 %v1430, %v1633
        %v1733 = vadd.f32 %v1431, %v1635
        %v1734 = vadd.f32 %v1432, %v1637
        %v1735 = vadd.f32 %v1433, %v1641
        %v1736 = vadd.f32 %v1434, %v1643
        %v1737 = vadd.f32 %v1435, %v1645
        %v1738 = vadd.f32 %v1436, %v1647
        %v1739 = vadd.f32 %v1437, %v1651
        %v1740 = vadd.f32 %v1438, %v1653
        %v1741 = vadd.f32 %v1439, %v1655
        %v1742 = vadd.f32 %v1440, %v1657
        %v1743 = vadd.f32 %v1441, %v1661
        %v1744 = vadd.f32 %v1442, %v1663
        %v1745 = vadd.f32 %v1443, %v1665
        %v1746 = vadd.f32 %v1444, %v1667
        %v1747 = vadd.f32 %v1445, %v1671
        %v1748 = vadd.f32 %v1446, %v1673
        %v1749 = vadd.f32 %v1447, %v1675
        %v1750 = vadd.f32 %v1448, %v1677
        %v1751 = vadd.f32 %v1449, %v1681
        %v1752 = vadd.f32 %v1450, %v1683
        %v1753 = vadd.f32 %v1451, %v1685
        %v1754 = vadd.f32 %v1452, %v1687
        %v1755 = vadd.f32 %v1453, %v1691
        %v1756 = vadd.f32 %v1454, %v1693
        %v1757 = vadd.f32 %v1455, %v1695
        %v1758 = vadd.f32 %v1456, %v1697
        %v1759 = vadd.f32 %v1457, %v1701
        %v1760 = vadd.f32 %v1458, %v1703
        %v1761 = vadd.f32 %v1459, %v1705
        %v1762 = vadd.f32 %v1460, %v1707
        %v1763 = vadd.f32 %v1461, %v1711
        %v1764 = vadd.f32 %v1462, %v1713
        %v1765 = vadd.f32 %v1463, %v1715
        %v1766 = vadd.f32 %v1464, %v1717
        %v1767 = vmax.f32 %v1719, %v1720
        %v1768 = vmax.f32 %v1721, %v1722
        %v1769 = vmax.f32 %v1723, %v1724
        %v1770 = vmax.f32 %v1725, %v1726
        %v1771 = vmax.f32 %v1727, %v1728
        %v1772 = vmax.f32 %v1729, %v1730
        %v1773 = vmax.f32 %v1731, %v1732
        %v1774 = vmax.f32 %v1733, %v1734
        %v1775 = vmax.f32 %v1735, %v1736
        %v1776 = vmax.f32 %v1737, %v1738
        %v1777 = vmax.f32 %v1739, %v1740
        %v1778 = vmax.f32 %v1741, %v1742
        %v1779 = vmax.f32 %v1743, %v1744
        %v1780 = vmax.f32 %v1745, %v1746
        %v1781 = vmax.f32 %v1747, %v1748
        %v1782 = vmax.f32 %v1749, %v1750
        %v1783 = vmax.f32 %v1751, %v1752
        %v1784 = vmax.f32 %v1753, %v1754
        %v1785 = vmax.f32 %v1755, %v1756
        %v1786 = vmax.f32 %v1757, %v1758
        %v1787 = vmax.f32 %v1759, %v1760
        %v1788 = vmax.f32 %v1761, %v1762
        %v1789 = vmax.f32 %v1763, %v1764
        %v1790 = vmax.f32 %v1765, %v1766
        %v1815 = vcombine.high %v1767, %v1767
        %v1817 = vunpack.c.l.s4 1983009808
        %v1818 = vunpack.c.0.s8 %v1817
        %v1819 = vlaneseq
        %v1820 = vshrl.u32 %v1819, 7
        %v1821 = vsub.s32 %v1818, %v1820
        %v1822 = vrot.slane %v1767, %v1821
        %v1824 = vunpack.c.l.s4 1983009808
        %v1825 = vunpack.c.0.s8 %v1824
        %v1826 = vlaneseq
        %v1827 = vshrl.u32 %v1826, 7
        %v1828 = vsub.s32 %v1825, %v1827
        %v1829 = vrot.slane %v1815, %v1828
        %v1830 = vcombine.high %v1822, %v1822
        %v1831 = vcombine.high %v1829, %v1829
        %v1832 = vcombine.high %v1768, %v1768
        %v1834 = vunpack.c.l.s4 1983009808
        %v1835 = vunpack.c.0.s8 %v1834
        %v1836 = vlaneseq
        %v1837 = vshrl.u32 %v1836, 7
        %v1838 = vsub.s32 %v1835, %v1837
        %v1839 = vrot.slane %v1768, %v1838
        %v1841 = vunpack.c.l.s4 1983009808
        %v1842 = vunpack.c.0.s8 %v1841
        %v1843 = vlaneseq
        %v1844 = vshrl.u32 %v1843, 7
        %v1845 = vsub.s32 %v1842, %v1844
        %v1846 = vrot.slane %v1832, %v1845
        %v1847 = vcombine.high %v1839, %v1839
        %v1848 = vcombine.high %v1846, %v1846
        %v1849 = vcombine.high %v1769, %v1769
        %v1851 = vunpack.c.l.s4 1983009808
        %v1852 = vunpack.c.0.s8 %v1851
        %v1853 = vlaneseq
        %v1854 = vshrl.u32 %v1853, 7
        %v1855 = vsub.s32 %v1852, %v1854
        %v1856 = vrot.slane %v1769, %v1855
        %v1858 = vunpack.c.l.s4 1983009808
        %v1859 = vunpack.c.0.s8 %v1858
        %v1860 = vlaneseq
        %v1861 = vshrl.u32 %v1860, 7
        %v1862 = vsub.s32 %v1859, %v1861
        %v1863 = vrot.slane %v1849, %v1862
        %v1864 = vcombine.high %v1856, %v1856
        %v1865 = vcombine.high %v1863, %v1863
        %v1866 = vcombine.high %v1770, %v1770
        %v1868 = vunpack.c.l.s4 1983009808
        %v1869 = vunpack.c.0.s8 %v1868
        %v1870 = vlaneseq
        %v1871 = vshrl.u32 %v1870, 7
        %v1872 = vsub.s32 %v1869, %v1871
        %v1873 = vrot.slane %v1770, %v1872
        %v1875 = vunpack.c.l.s4 1983009808
        %v1876 = vunpack.c.0.s8 %v1875
        %v1877 = vlaneseq
        %v1878 = vshrl.u32 %v1877, 7
        %v1879 = vsub.s32 %v1876, %v1878
        %v1880 = vrot.slane %v1866, %v1879
        %v1881 = vcombine.high %v1873, %v1873
        %v1882 = vcombine.high %v1880, %v1880
        %v1883 = vcombine.high %v1771, %v1771
        %v1885 = vunpack.c.l.s4 1983009808
        %v1886 = vunpack.c.0.s8 %v1885
        %v1887 = vlaneseq
        %v1888 = vshrl.u32 %v1887, 7
        %v1889 = vsub.s32 %v1886, %v1888
        %v1890 = vrot.slane %v1771, %v1889
        %v1892 = vunpack.c.l.s4 1983009808
        %v1893 = vunpack.c.0.s8 %v1892
        %v1894 = vlaneseq
        %v1895 = vshrl.u32 %v1894, 7
        %v1896 = vsub.s32 %v1893, %v1895
        %v1897 = vrot.slane %v1883, %v1896
        %v1898 = vcombine.high %v1890, %v1890
        %v1899 = vcombine.high %v1897, %v1897
        %v1900 = vcombine.high %v1772, %v1772
        %v1902 = vunpack.c.l.s4 1983009808
        %v1903 = vunpack.c.0.s8 %v1902
        %v1904 = vlaneseq
        %v1905 = vshrl.u32 %v1904, 7
        %v1906 = vsub.s32 %v1903, %v1905
        %v1907 = vrot.slane %v1772, %v1906
        %v1909 = vunpack.c.l.s4 1983009808
        %v1910 = vunpack.c.0.s8 %v1909
        %v1911 = vlaneseq
        %v1912 = vshrl.u32 %v1911, 7
        %v1913 = vsub.s32 %v1910, %v1912
        %v1914 = vrot.slane %v1900, %v1913
        %v1915 = vcombine.high %v1907, %v1907
        %v1916 = vcombine.high %v1914, %v1914
        %v1917 = vcombine.high %v1773, %v1773
        %v1919 = vunpack.c.l.s4 1983009808
        %v1920 = vunpack.c.0.s8 %v1919
        %v1921 = vlaneseq
        %v1922 = vshrl.u32 %v1921, 7
        %v1923 = vsub.s32 %v1920, %v1922
        %v1924 = vrot.slane %v1773, %v1923
        %v1926 = vunpack.c.l.s4 1983009808
        %v1927 = vunpack.c.0.s8 %v1926
        %v1928 = vlaneseq
        %v1929 = vshrl.u32 %v1928, 7
        %v1930 = vsub.s32 %v1927, %v1929
        %v1931 = vrot.slane %v1917, %v1930
        %v1932 = vcombine.high %v1924, %v1924
        %v1933 = vcombine.high %v1931, %v1931
        %v1934 = vcombine.high %v1774, %v1774
        %v1936 = vunpack.c.l.s4 1983009808
        %v1937 = vunpack.c.0.s8 %v1936
        %v1938 = vlaneseq
        %v1939 = vshrl.u32 %v1938, 7
        %v1940 = vsub.s32 %v1937, %v1939
        %v1941 = vrot.slane %v1774, %v1940
        %v1943 = vunpack.c.l.s4 1983009808
        %v1944 = vunpack.c.0.s8 %v1943
        %v1945 = vlaneseq
        %v1946 = vshrl.u32 %v1945, 7
        %v1947 = vsub.s32 %v1944, %v1946
        %v1948 = vrot.slane %v1934, %v1947
        %v1949 = vcombine.high %v1941, %v1941
        %v1950 = vcombine.high %v1948, %v1948
        %v1951 = vcombine.high %v1775, %v1775
        %v1953 = vunpack.c.l.s4 1983009808
        %v1954 = vunpack.c.0.s8 %v1953
        %v1955 = vlaneseq
        %v1956 = vshrl.u32 %v1955, 7
        %v1957 = vsub.s32 %v1954, %v1956
        %v1958 = vrot.slane %v1775, %v1957
        %v1960 = vunpack.c.l.s4 1983009808
        %v1961 = vunpack.c.0.s8 %v1960
        %v1962 = vlaneseq
        %v1963 = vshrl.u32 %v1962, 7
        %v1964 = vsub.s32 %v1961, %v1963
        %v1965 = vrot.slane %v1951, %v1964
        %v1966 = vcombine.high %v1958, %v1958
        %v1967 = vcombine.high %v1965, %v1965
        %v1968 = vcombine.high %v1776, %v1776
        %v1970 = vunpack.c.l.s4 1983009808
        %v1971 = vunpack.c.0.s8 %v1970
        %v1972 = vlaneseq
        %v1973 = vshrl.u32 %v1972, 7
        %v1974 = vsub.s32 %v1971, %v1973
        %v1975 = vrot.slane %v1776, %v1974
        %v1977 = vunpack.c.l.s4 1983009808
        %v1978 = vunpack.c.0.s8 %v1977
        %v1979 = vlaneseq
        %v1980 = vshrl.u32 %v1979, 7
        %v1981 = vsub.s32 %v1978, %v1980
        %v1982 = vrot.slane %v1968, %v1981
        %v1983 = vcombine.high %v1975, %v1975
        %v1984 = vcombine.high %v1982, %v1982
        %v1985 = vcombine.high %v1777, %v1777
        %v1987 = vunpack.c.l.s4 1983009808
        %v1988 = vunpack.c.0.s8 %v1987
        %v1989 = vlaneseq
        %v1990 = vshrl.u32 %v1989, 7
        %v1991 = vsub.s32 %v1988, %v1990
        %v1992 = vrot.slane %v1777, %v1991
        %v1994 = vunpack.c.l.s4 1983009808
        %v1995 = vunpack.c.0.s8 %v1994
        %v1996 = vlaneseq
        %v1997 = vshrl.u32 %v1996, 7
        %v1998 = vsub.s32 %v1995, %v1997
        %v1999 = vrot.slane %v1985, %v1998
        %v2000 = vcombine.high %v1992, %v1992
        %v2001 = vcombine.high %v1999, %v1999
        %v2002 = vcombine.high %v1778, %v1778
        %v2004 = vunpack.c.l.s4 1983009808
        %v2005 = vunpack.c.0.s8 %v2004
        %v2006 = vlaneseq
        %v2007 = vshrl.u32 %v2006, 7
        %v2008 = vsub.s32 %v2005, %v2007
        %v2009 = vrot.slane %v1778, %v2008
        %v2011 = vunpack.c.l.s4 1983009808
        %v2012 = vunpack.c.0.s8 %v2011
        %v2013 = vlaneseq
        %v2014 = vshrl.u32 %v2013, 7
        %v2015 = vsub.s32 %v2012, %v2014
        %v2016 = vrot.slane %v2002, %v2015
        %v2017 = vcombine.high %v2009, %v2009
        %v2018 = vcombine.high %v2016, %v2016
        %v2019 = vcombine.high %v1779, %v1779
        %v2021 = vunpack.c.l.s4 1983009808
        %v2022 = vunpack.c.0.s8 %v2021
        %v2023 = vlaneseq
        %v2024 = vshrl.u32 %v2023, 7
        %v2025 = vsub.s32 %v2022, %v2024
        %v2026 = vrot.slane %v1779, %v2025
        %v2028 = vunpack.c.l.s4 1983009808
        %v2029 = vunpack.c.0.s8 %v2028
        %v2030 = vlaneseq
        %v2031 = vshrl.u32 %v2030, 7
        %v2032 = vsub.s32 %v2029, %v2031
        %v2033 = vrot.slane %v2019, %v2032
        %v2034 = vcombine.high %v2026, %v2026
        %v2035 = vcombine.high %v2033, %v2033
        %v2036 = vcombine.high %v1780, %v1780
        %v2038 = vunpack.c.l.s4 1983009808
        %v2039 = vunpack.c.0.s8 %v2038
        %v2040 = vlaneseq
        %v2041 = vshrl.u32 %v2040, 7
        %v2042 = vsub.s32 %v2039, %v2041
        %v2043 = vrot.slane %v1780, %v2042
        %v2045 = vunpack.c.l.s4 1983009808
        %v2046 = vunpack.c.0.s8 %v2045
        %v2047 = vlaneseq
        %v2048 = vshrl.u32 %v2047, 7
        %v2049 = vsub.s32 %v2046, %v2048
        %v2050 = vrot.slane %v2036, %v2049
        %v2051 = vcombine.high %v2043, %v2043
        %v2052 = vcombine.high %v2050, %v2050
        %v2053 = vcombine.high %v1781, %v1781
        %v2055 = vunpack.c.l.s4 1983009808
        %v2056 = vunpack.c.0.s8 %v2055
        %v2057 = vlaneseq
        %v2058 = vshrl.u32 %v2057, 7
        %v2059 = vsub.s32 %v2056, %v2058
        %v2060 = vrot.slane %v1781, %v2059
        %v2062 = vunpack.c.l.s4 1983009808
        %v2063 = vunpack.c.0.s8 %v2062
        %v2064 = vlaneseq
        %v2065 = vshrl.u32 %v2064, 7
        %v2066 = vsub.s32 %v2063, %v2065
        %v2067 = vrot.slane %v2053, %v2066
        %v2068 = vcombine.high %v2060, %v2060
        %v2069 = vcombine.high %v2067, %v2067
        %v2070 = vcombine.high %v1782, %v1782
        %v2072 = vunpack.c.l.s4 1983009808
        %v2073 = vunpack.c.0.s8 %v2072
        %v2074 = vlaneseq
        %v2075 = vshrl.u32 %v2074, 7
        %v2076 = vsub.s32 %v2073, %v2075
        %v2077 = vrot.slane %v1782, %v2076
        %v2079 = vunpack.c.l.s4 1983009808
        %v2080 = vunpack.c.0.s8 %v2079
        %v2081 = vlaneseq
        %v2082 = vshrl.u32 %v2081, 7
        %v2083 = vsub.s32 %v2080, %v2082
        %v2084 = vrot.slane %v2070, %v2083
        %v2085 = vcombine.high %v2077, %v2077
        %v2086 = vcombine.high %v2084, %v2084
        %v2087 = vcombine.high %v1783, %v1783
        %v2089 = vunpack.c.l.s4 1983009808
        %v2090 = vunpack.c.0.s8 %v2089
        %v2091 = vlaneseq
        %v2092 = vshrl.u32 %v2091, 7
        %v2093 = vsub.s32 %v2090, %v2092
        %v2094 = vrot.slane %v1783, %v2093
        %v2096 = vunpack.c.l.s4 1983009808
        %v2097 = vunpack.c.0.s8 %v2096
        %v2098 = vlaneseq
        %v2099 = vshrl.u32 %v2098, 7
        %v2100 = vsub.s32 %v2097, %v2099
        %v2101 = vrot.slane %v2087, %v2100
        %v2102 = vcombine.high %v2094, %v2094
        %v2103 = vcombine.high %v2101, %v2101
        %v2104 = vcombine.high %v1784, %v1784
        %v2106 = vunpack.c.l.s4 1983009808
        %v2107 = vunpack.c.0.s8 %v2106
        %v2108 = vlaneseq
        %v2109 = vshrl.u32 %v2108, 7
        %v2110 = vsub.s32 %v2107, %v2109
        %v2111 = vrot.slane %v1784, %v2110
        %v2113 = vunpack.c.l.s4 1983009808
        %v2114 = vunpack.c.0.s8 %v2113
        %v2115 = vlaneseq
        %v2116 = vshrl.u32 %v2115, 7
        %v2117 = vsub.s32 %v2114, %v2116
        %v2118 = vrot.slane %v2104, %v2117
        %v2119 = vcombine.high %v2111, %v2111
        %v2120 = vcombine.high %v2118, %v2118
        %v2121 = vcombine.high %v1785, %v1785
        %v2123 = vunpack.c.l.s4 1983009808
        %v2124 = vunpack.c.0.s8 %v2123
        %v2125 = vlaneseq
        %v2126 = vshrl.u32 %v2125, 7
        %v2127 = vsub.s32 %v2124, %v2126
        %v2128 = vrot.slane %v1785, %v2127
        %v2130 = vunpack.c.l.s4 1983009808
        %v2131 = vunpack.c.0.s8 %v2130
        %v2132 = vlaneseq
        %v2133 = vshrl.u32 %v2132, 7
        %v2134 = vsub.s32 %v2131, %v2133
        %v2135 = vrot.slane %v2121, %v2134
        %v2136 = vcombine.high %v2128, %v2128
        %v2137 = vcombine.high %v2135, %v2135
        %v2138 = vcombine.high %v1786, %v1786
        %v2140 = vunpack.c.l.s4 1983009808
        %v2141 = vunpack.c.0.s8 %v2140
        %v2142 = vlaneseq
        %v2143 = vshrl.u32 %v2142, 7
        %v2144 = vsub.s32 %v2141, %v2143
        %v2145 = vrot.slane %v1786, %v2144
        %v2147 = vunpack.c.l.s4 1983009808
        %v2148 = vunpack.c.0.s8 %v2147
        %v2149 = vlaneseq
        %v2150 = vshrl.u32 %v2149, 7
        %v2151 = vsub.s32 %v2148, %v2150
        %v2152 = vrot.slane %v2138, %v2151
        %v2153 = vcombine.high %v2145, %v2145
        %v2154 = vcombine.high %v2152, %v2152
        %v2155 = vcombine.high %v1787, %v1787
        %v2157 = vunpack.c.l.s4 1983009808
        %v2158 = vunpack.c.0.s8 %v2157
        %v2159 = vlaneseq
        %v2160 = vshrl.u32 %v2159, 7
        %v2161 = vsub.s32 %v2158, %v2160
        %v2162 = vrot.slane %v1787, %v2161
        %v2164 = vunpack.c.l.s4 1983009808
        %v2165 = vunpack.c.0.s8 %v2164
        %v2166 = vlaneseq
        %v2167 = vshrl.u32 %v2166, 7
        %v2168 = vsub.s32 %v2165, %v2167
        %v2169 = vrot.slane %v2155, %v2168
        %v2170 = vcombine.high %v2162, %v2162
        %v2171 = vcombine.high %v2169, %v2169
        %v2172 = vcombine.high %v1788, %v1788
        %v2174 = vunpack.c.l.s4 1983009808
        %v2175 = vunpack.c.0.s8 %v2174
        %v2176 = vlaneseq
        %v2177 = vshrl.u32 %v2176, 7
        %v2178 = vsub.s32 %v2175, %v2177
        %v2179 = vrot.slane %v1788, %v2178
        %v2181 = vunpack.c.l.s4 1983009808
        %v2182 = vunpack.c.0.s8 %v2181
        %v2183 = vlaneseq
        %v2184 = vshrl.u32 %v2183, 7
        %v2185 = vsub.s32 %v2182, %v2184
        %v2186 = vrot.slane %v2172, %v2185
        %v2187 = vcombine.high %v2179, %v2179
        %v2188 = vcombine.high %v2186, %v2186
        %v2189 = vcombine.high %v1789, %v1789
        %v2191 = vunpack.c.l.s4 1983009808
        %v2192 = vunpack.c.0.s8 %v2191
        %v2193 = vlaneseq
        %v2194 = vshrl.u32 %v2193, 7
        %v2195 = vsub.s32 %v2192, %v2194
        %v2196 = vrot.slane %v1789, %v2195
        %v2198 = vunpack.c.l.s4 1983009808
        %v2199 = vunpack.c.0.s8 %v2198
        %v2200 = vlaneseq
        %v2201 = vshrl.u32 %v2200, 7
        %v2202 = vsub.s32 %v2199, %v2201
        %v2203 = vrot.slane %v2189, %v2202
        %v2204 = vcombine.high %v2196, %v2196
        %v2205 = vcombine.high %v2203, %v2203
        %v2206 = vcombine.high %v1790, %v1790
        %v2208 = vunpack.c.l.s4 1983009808
        %v2209 = vunpack.c.0.s8 %v2208
        %v2210 = vlaneseq
        %v2211 = vshrl.u32 %v2210, 7
        %v2212 = vsub.s32 %v2209, %v2211
        %v2213 = vrot.slane %v1790, %v2212
        %v2215 = vunpack.c.l.s4 1983009808
        %v2216 = vunpack.c.0.s8 %v2215
        %v2217 = vlaneseq
        %v2218 = vshrl.u32 %v2217, 7
        %v2219 = vsub.s32 %v2216, %v2218
        %v2220 = vrot.slane %v2206, %v2219
        %v2221 = vcombine.high %v2213, %v2213
        %v2222 = vcombine.high %v2220, %v2220
        %vm2319 = vcmask 1041408
        %v2320 = vsel %vm2319, %v1822, -inf
        %v2321 = vrot.slane %v2320, 4
        %v2322 = vmax.f32 %v2320, %v2321
        %v2323 = vrot.slane %v2322, 2
        %v2324 = vmax.f32 %v2322, %v2323
        %v2325 = vrot.slane %v2324, 1
        %v2326 = vmax.f32 %v2324, %v2325
        %v2327 = vsel %vm2319, %v1830, -inf
        %v2328 = vrot.slane %v2327, 4
        %v2329 = vmax.f32 %v2327, %v2328
        %v2330 = vrot.slane %v2329, 2
        %v2331 = vmax.f32 %v2329, %v2330
        %v2332 = vrot.slane %v2331, 1
        %v2333 = vmax.f32 %v2331, %v2332
        %v2334 = vsel %vm2319, %v1829, -inf
        %v2335 = vrot.slane %v2334, 4
        %v2336 = vmax.f32 %v2334, %v2335
        %v2337 = vrot.slane %v2336, 2
        %v2338 = vmax.f32 %v2336, %v2337
        %v2339 = vrot.slane %v2338, 1
        %v2340 = vmax.f32 %v2338, %v2339
        %v2341 = vsel %vm2319, %v1831, -inf
        %v2342 = vrot.slane %v2341, 4
        %v2343 = vmax.f32 %v2341, %v2342
        %v2344 = vrot.slane %v2343, 2
        %v2345 = vmax.f32 %v2343, %v2344
        %v2346 = vrot.slane %v2345, 1
        %v2347 = vmax.f32 %v2345, %v2346
        %v2348 = vsel %vm2319, %v1839, -inf
        %v2349 = vrot.slane %v2348, 4
        %v2350 = vmax.f32 %v2348, %v2349
        %v2351 = vrot.slane %v2350, 2
        %v2352 = vmax.f32 %v2350, %v2351
        %v2353 = vrot.slane %v2352, 1
        %v2354 = vmax.f32 %v2352, %v2353
        %v2355 = vsel %vm2319, %v1847, -inf
        %v2356 = vrot.slane %v2355, 4
        %v2357 = vmax.f32 %v2355, %v2356
        %v2358 = vrot.slane %v2357, 2
        %v2359 = vmax.f32 %v2357, %v2358
        %v2360 = vrot.slane %v2359, 1
        %v2361 = vmax.f32 %v2359, %v2360
        %v2362 = vsel %vm2319, %v1846, -inf
        %v2363 = vrot.slane %v2362, 4
        %v2364 = vmax.f32 %v2362, %v2363
        %v2365 = vrot.slane %v2364, 2
        %v2366 = vmax.f32 %v2364, %v2365
        %v2367 = vrot.slane %v2366, 1
        %v2368 = vmax.f32 %v2366, %v2367
        %v2369 = vsel %vm2319, %v1848, -inf
        %v2370 = vrot.slane %v2369, 4
        %v2371 = vmax.f32 %v2369, %v2370
        %v2372 = vrot.slane %v2371, 2
        %v2373 = vmax.f32 %v2371, %v2372
        %v2374 = vrot.slane %v2373, 1
        %v2375 = vmax.f32 %v2373, %v2374
        %v2376 = vsel %vm2319, %v1856, -inf
        %v2377 = vrot.slane %v2376, 4
        %v2378 = vmax.f32 %v2376, %v2377
        %v2379 = vrot.slane %v2378, 2
        %v2380 = vmax.f32 %v2378, %v2379
        %v2381 = vrot.slane %v2380, 1
        %v2382 = vmax.f32 %v2380, %v2381
        %v2383 = vsel %vm2319, %v1864, -inf
        %v2384 = vrot.slane %v2383, 4
        %v2385 = vmax.f32 %v2383, %v2384
        %v2386 = vrot.slane %v2385, 2
        %v2387 = vmax.f32 %v2385, %v2386
        %v2388 = vrot.slane %v2387, 1
        %v2389 = vmax.f32 %v2387, %v2388
        %v2390 = vsel %vm2319, %v1863, -inf
        %v2391 = vrot.slane %v2390, 4
        %v2392 = vmax.f32 %v2390, %v2391
        %v2393 = vrot.slane %v2392, 2
        %v2394 = vmax.f32 %v2392, %v2393
        %v2395 = vrot.slane %v2394, 1
        %v2396 = vmax.f32 %v2394, %v2395
        %v2397 = vsel %vm2319, %v1865, -inf
        %v2398 = vrot.slane %v2397, 4
        %v2399 = vmax.f32 %v2397, %v2398
        %v2400 = vrot.slane %v2399, 2
        %v2401 = vmax.f32 %v2399, %v2400
        %v2402 = vrot.slane %v2401, 1
        %v2403 = vmax.f32 %v2401, %v2402
        %v2404 = vsel %vm2319, %v1873, -inf
        %v2405 = vrot.slane %v2404, 4
        %v2406 = vmax.f32 %v2404, %v2405
        %v2407 = vrot.slane %v2406, 2
        %v2408 = vmax.f32 %v2406, %v2407
        %v2409 = vrot.slane %v2408, 1
        %v2410 = vmax.f32 %v2408, %v2409
        %v2411 = vsel %vm2319, %v1881, -inf
        %v2412 = vrot.slane %v2411, 4
        %v2413 = vmax.f32 %v2411, %v2412
        %v2414 = vrot.slane %v2413, 2
        %v2415 = vmax.f32 %v2413, %v2414
        %v2416 = vrot.slane %v2415, 1
        %v2417 = vmax.f32 %v2415, %v2416
        %v2418 = vsel %vm2319, %v1880, -inf
        %v2419 = vrot.slane %v2418, 4
        %v2420 = vmax.f32 %v2418, %v2419
        %v2421 = vrot.slane %v2420, 2
        %v2422 = vmax.f32 %v2420, %v2421
        %v2423 = vrot.slane %v2422, 1
        %v2424 = vmax.f32 %v2422, %v2423
        %v2425 = vsel %vm2319, %v1882, -inf
        %v2426 = vrot.slane %v2425, 4
        %v2427 = vmax.f32 %v2425, %v2426
        %v2428 = vrot.slane %v2427, 2
        %v2429 = vmax.f32 %v2427, %v2428
        %v2430 = vrot.slane %v2429, 1
        %v2431 = vmax.f32 %v2429, %v2430
        %v2432 = vsel %vm2319, %v1890, -inf
        %v2433 = vrot.slane %v2432, 4
        %v2434 = vmax.f32 %v2432, %v2433
        %v2435 = vrot.slane %v2434, 2
        %v2436 = vmax.f32 %v2434, %v2435
        %v2437 = vrot.slane %v2436, 1
        %v2438 = vmax.f32 %v2436, %v2437
        %v2439 = vsel %vm2319, %v1898, -inf
        %v2440 = vrot.slane %v2439, 4
        %v2441 = vmax.f32 %v2439, %v2440
        %v2442 = vrot.slane %v2441, 2
        %v2443 = vmax.f32 %v2441, %v2442
        %v2444 = vrot.slane %v2443, 1
        %v2445 = vmax.f32 %v2443, %v2444
        %v2446 = vsel %vm2319, %v1897, -inf
        %v2447 = vrot.slane %v2446, 4
        %v2448 = vmax.f32 %v2446, %v2447
        %v2449 = vrot.slane %v2448, 2
        %v2450 = vmax.f32 %v2448, %v2449
        %v2451 = vrot.slane %v2450, 1
        %v2452 = vmax.f32 %v2450, %v2451
        %v2453 = vsel %vm2319, %v1899, -inf
        %v2454 = vrot.slane %v2453, 4
        %v2455 = vmax.f32 %v2453, %v2454
        %v2456 = vrot.slane %v2455, 2
        %v2457 = vmax.f32 %v2455, %v2456
        %v2458 = vrot.slane %v2457, 1
        %v2459 = vmax.f32 %v2457, %v2458
        %v2460 = vsel %vm2319, %v1907, -inf
        %v2461 = vrot.slane %v2460, 4
        %v2462 = vmax.f32 %v2460, %v2461
        %v2463 = vrot.slane %v2462, 2
        %v2464 = vmax.f32 %v2462, %v2463
        %v2465 = vrot.slane %v2464, 1
        %v2466 = vmax.f32 %v2464, %v2465
        %v2467 = vsel %vm2319, %v1915, -inf
        %v2468 = vrot.slane %v2467, 4
        %v2469 = vmax.f32 %v2467, %v2468
        %v2470 = vrot.slane %v2469, 2
        %v2471 = vmax.f32 %v2469, %v2470
        %v2472 = vrot.slane %v2471, 1
        %v2473 = vmax.f32 %v2471, %v2472
        %v2474 = vsel %vm2319, %v1914, -inf
        %v2475 = vrot.slane %v2474, 4
        %v2476 = vmax.f32 %v2474, %v2475
        %v2477 = vrot.slane %v2476, 2
        %v2478 = vmax.f32 %v2476, %v2477
        %v2479 = vrot.slane %v2478, 1
        %v2480 = vmax.f32 %v2478, %v2479
        %v2481 = vsel %vm2319, %v1916, -inf
        %v2482 = vrot.slane %v2481, 4
        %v2483 = vmax.f32 %v2481, %v2482
        %v2484 = vrot.slane %v2483, 2
        %v2485 = vmax.f32 %v2483, %v2484
        %v2486 = vrot.slane %v2485, 1
        %v2487 = vmax.f32 %v2485, %v2486
        %v2488 = vsel %vm2319, %v1924, -inf
        %v2489 = vrot.slane %v2488, 4
        %v2490 = vmax.f32 %v2488, %v2489
        %v2491 = vrot.slane %v2490, 2
        %v2492 = vmax.f32 %v2490, %v2491
        %v2493 = vrot.slane %v2492, 1
        %v2494 = vmax.f32 %v2492, %v2493
        %v2495 = vsel %vm2319, %v1932, -inf
        %v2496 = vrot.slane %v2495, 4
        %v2497 = vmax.f32 %v2495, %v2496
        %v2498 = vrot.slane %v2497, 2
        %v2499 = vmax.f32 %v2497, %v2498
        %v2500 = vrot.slane %v2499, 1
        %v2501 = vmax.f32 %v2499, %v2500
        %v2502 = vsel %vm2319, %v1931, -inf
        %v2503 = vrot.slane %v2502, 4
        %v2504 = vmax.f32 %v2502, %v2503
        %v2505 = vrot.slane %v2504, 2
        %v2506 = vmax.f32 %v2504, %v2505
        %v2507 = vrot.slane %v2506, 1
        %v2508 = vmax.f32 %v2506, %v2507
        %v2509 = vsel %vm2319, %v1933, -inf
        %v2510 = vrot.slane %v2509, 4
        %v2511 = vmax.f32 %v2509, %v2510
        %v2512 = vrot.slane %v2511, 2
        %v2513 = vmax.f32 %v2511, %v2512
        %v2514 = vrot.slane %v2513, 1
        %v2515 = vmax.f32 %v2513, %v2514
        %v2516 = vsel %vm2319, %v1941, -inf
        %v2517 = vrot.slane %v2516, 4
        %v2518 = vmax.f32 %v2516, %v2517
        %v2519 = vrot.slane %v2518, 2
        %v2520 = vmax.f32 %v2518, %v2519
        %v2521 = vrot.slane %v2520, 1
        %v2522 = vmax.f32 %v2520, %v2521
        %v2523 = vsel %vm2319, %v1949, -inf
        %v2524 = vrot.slane %v2523, 4
        %v2525 = vmax.f32 %v2523, %v2524
        %v2526 = vrot.slane %v2525, 2
        %v2527 = vmax.f32 %v2525, %v2526
        %v2528 = vrot.slane %v2527, 1
        %v2529 = vmax.f32 %v2527, %v2528
        %v2530 = vsel %vm2319, %v1948, -inf
        %v2531 = vrot.slane %v2530, 4
        %v2532 = vmax.f32 %v2530, %v2531
        %v2533 = vrot.slane %v2532, 2
        %v2534 = vmax.f32 %v2532, %v2533
        %v2535 = vrot.slane %v2534, 1
        %v2536 = vmax.f32 %v2534, %v2535
        %v2537 = vsel %vm2319, %v1950, -inf
        %v2538 = vrot.slane %v2537, 4
        %v2539 = vmax.f32 %v2537, %v2538
        %v2540 = vrot.slane %v2539, 2
        %v2541 = vmax.f32 %v2539, %v2540
        %v2542 = vrot.slane %v2541, 1
        %v2543 = vmax.f32 %v2541, %v2542
        %v2544 = vsel %vm2319, %v1958, -inf
        %v2545 = vrot.slane %v2544, 4
        %v2546 = vmax.f32 %v2544, %v2545
        %v2547 = vrot.slane %v2546, 2
        %v2548 = vmax.f32 %v2546, %v2547
        %v2549 = vrot.slane %v2548, 1
        %v2550 = vmax.f32 %v2548, %v2549
        %v2551 = vsel %vm2319, %v1966, -inf
        %v2552 = vrot.slane %v2551, 4
        %v2553 = vmax.f32 %v2551, %v2552
        %v2554 = vrot.slane %v2553, 2
        %v2555 = vmax.f32 %v2553, %v2554
        %v2556 = vrot.slane %v2555, 1
        %v2557 = vmax.f32 %v2555, %v2556
        %v2558 = vsel %vm2319, %v1965, -inf
        %v2559 = vrot.slane %v2558, 4
        %v2560 = vmax.f32 %v2558, %v2559
        %v2561 = vrot.slane %v2560, 2
        %v2562 = vmax.f32 %v2560, %v2561
        %v2563 = vrot.slane %v2562, 1
        %v2564 = vmax.f32 %v2562, %v2563
        %v2565 = vsel %vm2319, %v1967, -inf
        %v2566 = vrot.slane %v2565, 4
        %v2567 = vmax.f32 %v2565, %v2566
        %v2568 = vrot.slane %v2567, 2
        %v2569 = vmax.f32 %v2567, %v2568
        %v2570 = vrot.slane %v2569, 1
        %v2571 = vmax.f32 %v2569, %v2570
        %v2572 = vsel %vm2319, %v1975, -inf
        %v2573 = vrot.slane %v2572, 4
        %v2574 = vmax.f32 %v2572, %v2573
        %v2575 = vrot.slane %v2574, 2
        %v2576 = vmax.f32 %v2574, %v2575
        %v2577 = vrot.slane %v2576, 1
        %v2578 = vmax.f32 %v2576, %v2577
        %v2579 = vsel %vm2319, %v1983, -inf
        %v2580 = vrot.slane %v2579, 4
        %v2581 = vmax.f32 %v2579, %v2580
        %v2582 = vrot.slane %v2581, 2
        %v2583 = vmax.f32 %v2581, %v2582
        %v2584 = vrot.slane %v2583, 1
        %v2585 = vmax.f32 %v2583, %v2584
        %v2586 = vsel %vm2319, %v1982, -inf
        %v2587 = vrot.slane %v2586, 4
        %v2588 = vmax.f32 %v2586, %v2587
        %v2589 = vrot.slane %v2588, 2
        %v2590 = vmax.f32 %v2588, %v2589
        %v2591 = vrot.slane %v2590, 1
        %v2592 = vmax.f32 %v2590, %v2591
        %v2593 = vsel %vm2319, %v1984, -inf
        %v2594 = vrot.slane %v2593, 4
        %v2595 = vmax.f32 %v2593, %v2594
        %v2596 = vrot.slane %v2595, 2
        %v2597 = vmax.f32 %v2595, %v2596
        %v2598 = vrot.slane %v2597, 1
        %v2599 = vmax.f32 %v2597, %v2598
        %v2600 = vsel %vm2319, %v1992, -inf
        %v2601 = vrot.slane %v2600, 4
        %v2602 = vmax.f32 %v2600, %v2601
        %v2603 = vrot.slane %v2602, 2
        %v2604 = vmax.f32 %v2602, %v2603
        %v2605 = vrot.slane %v2604, 1
        %v2606 = vmax.f32 %v2604, %v2605
        %v2607 = vsel %vm2319, %v2000, -inf
        %v2608 = vrot.slane %v2607, 4
        %v2609 = vmax.f32 %v2607, %v2608
        %v2610 = vrot.slane %v2609, 2
        %v2611 = vmax.f32 %v2609, %v2610
        %v2612 = vrot.slane %v2611, 1
        %v2613 = vmax.f32 %v2611, %v2612
        %v2614 = vsel %vm2319, %v1999, -inf
        %v2615 = vrot.slane %v2614, 4
        %v2616 = vmax.f32 %v2614, %v2615
        %v2617 = vrot.slane %v2616, 2
        %v2618 = vmax.f32 %v2616, %v2617
        %v2619 = vrot.slane %v2618, 1
        %v2620 = vmax.f32 %v2618, %v2619
        %v2621 = vsel %vm2319, %v2001, -inf
        %v2622 = vrot.slane %v2621, 4
        %v2623 = vmax.f32 %v2621, %v2622
        %v2624 = vrot.slane %v2623, 2
        %v2625 = vmax.f32 %v2623, %v2624
        %v2626 = vrot.slane %v2625, 1
        %v2627 = vmax.f32 %v2625, %v2626
        %v2628 = vsel %vm2319, %v2009, -inf
        %v2629 = vrot.slane %v2628, 4
        %v2630 = vmax.f32 %v2628, %v2629
        %v2631 = vrot.slane %v2630, 2
        %v2632 = vmax.f32 %v2630, %v2631
        %v2633 = vrot.slane %v2632, 1
        %v2634 = vmax.f32 %v2632, %v2633
        %v2635 = vsel %vm2319, %v2017, -inf
        %v2636 = vrot.slane %v2635, 4
        %v2637 = vmax.f32 %v2635, %v2636
        %v2638 = vrot.slane %v2637, 2
        %v2639 = vmax.f32 %v2637, %v2638
        %v2640 = vrot.slane %v2639, 1
        %v2641 = vmax.f32 %v2639, %v2640
        %v2642 = vsel %vm2319, %v2016, -inf
        %v2643 = vrot.slane %v2642, 4
        %v2644 = vmax.f32 %v2642, %v2643
        %v2645 = vrot.slane %v2644, 2
        %v2646 = vmax.f32 %v2644, %v2645
        %v2647 = vrot.slane %v2646, 1
        %v2648 = vmax.f32 %v2646, %v2647
        %v2649 = vsel %vm2319, %v2018, -inf
        %v2650 = vrot.slane %v2649, 4
        %v2651 = vmax.f32 %v2649, %v2650
        %v2652 = vrot.slane %v2651, 2
        %v2653 = vmax.f32 %v2651, %v2652
        %v2654 = vrot.slane %v2653, 1
        %v2655 = vmax.f32 %v2653, %v2654
        %v2656 = vsel %vm2319, %v2026, -inf
        %v2657 = vrot.slane %v2656, 4
        %v2658 = vmax.f32 %v2656, %v2657
        %v2659 = vrot.slane %v2658, 2
        %v2660 = vmax.f32 %v2658, %v2659
        %v2661 = vrot.slane %v2660, 1
        %v2662 = vmax.f32 %v2660, %v2661
        %v2663 = vsel %vm2319, %v2034, -inf
        %v2664 = vrot.slane %v2663, 4
        %v2665 = vmax.f32 %v2663, %v2664
        %v2666 = vrot.slane %v2665, 2
        %v2667 = vmax.f32 %v2665, %v2666
        %v2668 = vrot.slane %v2667, 1
        %v2669 = vmax.f32 %v2667, %v2668
        %v2670 = vsel %vm2319, %v2033, -inf
        %v2671 = vrot.slane %v2670, 4
        %v2672 = vmax.f32 %v2670, %v2671
        %v2673 = vrot.slane %v2672, 2
        %v2674 = vmax.f32 %v2672, %v2673
        %v2675 = vrot.slane %v2674, 1
        %v2676 = vmax.f32 %v2674, %v2675
        %v2677 = vsel %vm2319, %v2035, -inf
        %v2678 = vrot.slane %v2677, 4
        %v2679 = vmax.f32 %v2677, %v2678
        %v2680 = vrot.slane %v2679, 2
        %v2681 = vmax.f32 %v2679, %v2680
        %v2682 = vrot.slane %v2681, 1
        %v2683 = vmax.f32 %v2681, %v2682
        %v2684 = vsel %vm2319, %v2043, -inf
        %v2685 = vrot.slane %v2684, 4
        %v2686 = vmax.f32 %v2684, %v2685
        %v2687 = vrot.slane %v2686, 2
        %v2688 = vmax.f32 %v2686, %v2687
        %v2689 = vrot.slane %v2688, 1
        %v2690 = vmax.f32 %v2688, %v2689
        %v2691 = vsel %vm2319, %v2051, -inf
        %v2692 = vrot.slane %v2691, 4
        %v2693 = vmax.f32 %v2691, %v2692
        %v2694 = vrot.slane %v2693, 2
        %v2695 = vmax.f32 %v2693, %v2694
        %v2696 = vrot.slane %v2695, 1
        %v2697 = vmax.f32 %v2695, %v2696
        %v2698 = vsel %vm2319, %v2050, -inf
        %v2699 = vrot.slane %v2698, 4
        %v2700 = vmax.f32 %v2698, %v2699
        %v2701 = vrot.slane %v2700, 2
        %v2702 = vmax.f32 %v2700, %v2701
        %v2703 = vrot.slane %v2702, 1
        %v2704 = vmax.f32 %v2702, %v2703
        %v2705 = vsel %vm2319, %v2052, -inf
        %v2706 = vrot.slane %v2705, 4
        %v2707 = vmax.f32 %v2705, %v2706
        %v2708 = vrot.slane %v2707, 2
        %v2709 = vmax.f32 %v2707, %v2708
        %v2710 = vrot.slane %v2709, 1
        %v2711 = vmax.f32 %v2709, %v2710
        %v2712 = vsel %vm2319, %v2060, -inf
        %v2713 = vrot.slane %v2712, 4
        %v2714 = vmax.f32 %v2712, %v2713
        %v2715 = vrot.slane %v2714, 2
        %v2716 = vmax.f32 %v2714, %v2715
        %v2717 = vrot.slane %v2716, 1
        %v2718 = vmax.f32 %v2716, %v2717
        %v2719 = vsel %vm2319, %v2068, -inf
        %v2720 = vrot.slane %v2719, 4
        %v2721 = vmax.f32 %v2719, %v2720
        %v2722 = vrot.slane %v2721, 2
        %v2723 = vmax.f32 %v2721, %v2722
        %v2724 = vrot.slane %v2723, 1
        %v2725 = vmax.f32 %v2723, %v2724
        %v2726 = vsel %vm2319, %v2067, -inf
        %v2727 = vrot.slane %v2726, 4
        %v2728 = vmax.f32 %v2726, %v2727
        %v2729 = vrot.slane %v2728, 2
        %v2730 = vmax.f32 %v2728, %v2729
        %v2731 = vrot.slane %v2730, 1
        %v2732 = vmax.f32 %v2730, %v2731
        %v2733 = vsel %vm2319, %v2069, -inf
        %v2734 = vrot.slane %v2733, 4
        %v2735 = vmax.f32 %v2733, %v2734
        %v2736 = vrot.slane %v2735, 2
        %v2737 = vmax.f32 %v2735, %v2736
        %v2738 = vrot.slane %v2737, 1
        %v2739 = vmax.f32 %v2737, %v2738
        %v2740 = vsel %vm2319, %v2077, -inf
        %v2741 = vrot.slane %v2740, 4
        %v2742 = vmax.f32 %v2740, %v2741
        %v2743 = vrot.slane %v2742, 2
        %v2744 = vmax.f32 %v2742, %v2743
        %v2745 = vrot.slane %v2744, 1
        %v2746 = vmax.f32 %v2744, %v2745
        %v2747 = vsel %vm2319, %v2085, -inf
        %v2748 = vrot.slane %v2747, 4
        %v2749 = vmax.f32 %v2747, %v2748
        %v2750 = vrot.slane %v2749, 2
        %v2751 = vmax.f32 %v2749, %v2750
        %v2752 = vrot.slane %v2751, 1
        %v2753 = vmax.f32 %v2751, %v2752
        %v2754 = vsel %vm2319, %v2084, -inf
        %v2755 = vrot.slane %v2754, 4
        %v2756 = vmax.f32 %v2754, %v2755
        %v2757 = vrot.slane %v2756, 2
        %v2758 = vmax.f32 %v2756, %v2757
        %v2759 = vrot.slane %v2758, 1
        %v2760 = vmax.f32 %v2758, %v2759
        %v2761 = vsel %vm2319, %v2086, -inf
        %v2762 = vrot.slane %v2761, 4
        %v2763 = vmax.f32 %v2761, %v2762
        %v2764 = vrot.slane %v2763, 2
        %v2765 = vmax.f32 %v2763, %v2764
        %v2766 = vrot.slane %v2765, 1
        %v2767 = vmax.f32 %v2765, %v2766
        %v2768 = vsel %vm2319, %v2094, -inf
        %v2769 = vrot.slane %v2768, 4
        %v2770 = vmax.f32 %v2768, %v2769
        %v2771 = vrot.slane %v2770, 2
        %v2772 = vmax.f32 %v2770, %v2771
        %v2773 = vrot.slane %v2772, 1
        %v2774 = vmax.f32 %v2772, %v2773
        %v2775 = vsel %vm2319, %v2102, -inf
        %v2776 = vrot.slane %v2775, 4
        %v2777 = vmax.f32 %v2775, %v2776
        %v2778 = vrot.slane %v2777, 2
        %v2779 = vmax.f32 %v2777, %v2778
        %v2780 = vrot.slane %v2779, 1
        %v2781 = vmax.f32 %v2779, %v2780
        %v2782 = vsel %vm2319, %v2101, -inf
        %v2783 = vrot.slane %v2782, 4
        %v2784 = vmax.f32 %v2782, %v2783
        %v2785 = vrot.slane %v2784, 2
        %v2786 = vmax.f32 %v2784, %v2785
        %v2787 = vrot.slane %v2786, 1
        %v2788 = vmax.f32 %v2786, %v2787
        %v2789 = vsel %vm2319, %v2103, -inf
        %v2790 = vrot.slane %v2789, 4
        %v2791 = vmax.f32 %v2789, %v2790
        %v2792 = vrot.slane %v2791, 2
        %v2793 = vmax.f32 %v2791, %v2792
        %v2794 = vrot.slane %v2793, 1
        %v2795 = vmax.f32 %v2793, %v2794
        %v2796 = vsel %vm2319, %v2111, -inf
        %v2797 = vrot.slane %v2796, 4
        %v2798 = vmax.f32 %v2796, %v2797
        %v2799 = vrot.slane %v2798, 2
        %v2800 = vmax.f32 %v2798, %v2799
        %v2801 = vrot.slane %v2800, 1
        %v2802 = vmax.f32 %v2800, %v2801
        %v2803 = vsel %vm2319, %v2119, -inf
        %v2804 = vrot.slane %v2803, 4
        %v2805 = vmax.f32 %v2803, %v2804
        %v2806 = vrot.slane %v2805, 2
        %v2807 = vmax.f32 %v2805, %v2806
        %v2808 = vrot.slane %v2807, 1
        %v2809 = vmax.f32 %v2807, %v2808
        %v2810 = vsel %vm2319, %v2118, -inf
        %v2811 = vrot.slane %v2810, 4
        %v2812 = vmax.f32 %v2810, %v2811
        %v2813 = vrot.slane %v2812, 2
        %v2814 = vmax.f32 %v2812, %v2813
        %v2815 = vrot.slane %v2814, 1
        %v2816 = vmax.f32 %v2814, %v2815
        %v2817 = vsel %vm2319, %v2120, -inf
        %v2818 = vrot.slane %v2817, 4
        %v2819 = vmax.f32 %v2817, %v2818
        %v2820 = vrot.slane %v2819, 2
        %v2821 = vmax.f32 %v2819, %v2820
        %v2822 = vrot.slane %v2821, 1
        %v2823 = vmax.f32 %v2821, %v2822
        %v2824 = vsel %vm2319, %v2128, -inf
        %v2825 = vrot.slane %v2824, 4
        %v2826 = vmax.f32 %v2824, %v2825
        %v2827 = vrot.slane %v2826, 2
        %v2828 = vmax.f32 %v2826, %v2827
        %v2829 = vrot.slane %v2828, 1
        %v2830 = vmax.f32 %v2828, %v2829
        %v2831 = vsel %vm2319, %v2136, -inf
        %v2832 = vrot.slane %v2831, 4
        %v2833 = vmax.f32 %v2831, %v2832
        %v2834 = vrot.slane %v2833, 2
        %v2835 = vmax.f32 %v2833, %v2834
        %v2836 = vrot.slane %v2835, 1
        %v2837 = vmax.f32 %v2835, %v2836
        %v2838 = vsel %vm2319, %v2135, -inf
        %v2839 = vrot.slane %v2838, 4
        %v2840 = vmax.f32 %v2838, %v2839
        %v2841 = vrot.slane %v2840, 2
        %v2842 = vmax.f32 %v2840, %v2841
        %v2843 = vrot.slane %v2842, 1
        %v2844 = vmax.f32 %v2842, %v2843
        %v2845 = vsel %vm2319, %v2137, -inf
        %v2846 = vrot.slane %v2845, 4
        %v2847 = vmax.f32 %v2845, %v2846
        %v2848 = vrot.slane %v2847, 2
        %v2849 = vmax.f32 %v2847, %v2848
        %v2850 = vrot.slane %v2849, 1
        %v2851 = vmax.f32 %v2849, %v2850
        %v2852 = vsel %vm2319, %v2145, -inf
        %v2853 = vrot.slane %v2852, 4
        %v2854 = vmax.f32 %v2852, %v2853
        %v2855 = vrot.slane %v2854, 2
        %v2856 = vmax.f32 %v2854, %v2855
        %v2857 = vrot.slane %v2856, 1
        %v2858 = vmax.f32 %v2856, %v2857
        %v2859 = vsel %vm2319, %v2153, -inf
        %v2860 = vrot.slane %v2859, 4
        %v2861 = vmax.f32 %v2859, %v2860
        %v2862 = vrot.slane %v2861, 2
        %v2863 = vmax.f32 %v2861, %v2862
        %v2864 = vrot.slane %v2863, 1
        %v2865 = vmax.f32 %v2863, %v2864
        %v2866 = vsel %vm2319, %v2152, -inf
        %v2867 = vrot.slane %v2866, 4
        %v2868 = vmax.f32 %v2866, %v2867
        %v2869 = vrot.slane %v2868, 2
        %v2870 = vmax.f32 %v2868, %v2869
        %v2871 = vrot.slane %v2870, 1
        %v2872 = vmax.f32 %v2870, %v2871
        %v2873 = vsel %vm2319, %v2154, -inf
        %v2874 = vrot.slane %v2873, 4
        %v2875 = vmax.f32 %v2873, %v2874
        %v2876 = vrot.slane %v2875, 2
        %v2877 = vmax.f32 %v2875, %v2876
        %v2878 = vrot.slane %v2877, 1
        %v2879 = vmax.f32 %v2877, %v2878
        %v2880 = vsel %vm2319, %v2162, -inf
        %v2881 = vrot.slane %v2880, 4
        %v2882 = vmax.f32 %v2880, %v2881
        %v2883 = vrot.slane %v2882, 2
        %v2884 = vmax.f32 %v2882, %v2883
        %v2885 = vrot.slane %v2884, 1
        %v2886 = vmax.f32 %v2884, %v2885
        %v2887 = vsel %vm2319, %v2170, -inf
        %v2888 = vrot.slane %v2887, 4
        %v2889 = vmax.f32 %v2887, %v2888
        %v2890 = vrot.slane %v2889, 2
        %v2891 = vmax.f32 %v2889, %v2890
        %v2892 = vrot.slane %v2891, 1
        %v2893 = vmax.f32 %v2891, %v2892
        %v2894 = vsel %vm2319, %v2169, -inf
        %v2895 = vrot.slane %v2894, 4
        %v2896 = vmax.f32 %v2894, %v2895
        %v2897 = vrot.slane %v2896, 2
        %v2898 = vmax.f32 %v2896, %v2897
        %v2899 = vrot.slane %v2898, 1
        %v2900 = vmax.f32 %v2898, %v2899
        %v2901 = vsel %vm2319, %v2171, -inf
        %v2902 = vrot.slane %v2901, 4
        %v2903 = vmax.f32 %v2901, %v2902
        %v2904 = vrot.slane %v2903, 2
        %v2905 = vmax.f32 %v2903, %v2904
        %v2906 = vrot.slane %v2905, 1
        %v2907 = vmax.f32 %v2905, %v2906
        %v2908 = vsel %vm2319, %v2179, -inf
        %v2909 = vrot.slane %v2908, 4
        %v2910 = vmax.f32 %v2908, %v2909
        %v2911 = vrot.slane %v2910, 2
        %v2912 = vmax.f32 %v2910, %v2911
        %v2913 = vrot.slane %v2912, 1
        %v2914 = vmax.f32 %v2912, %v2913
        %v2915 = vsel %vm2319, %v2187, -inf
        %v2916 = vrot.slane %v2915, 4
        %v2917 = vmax.f32 %v2915, %v2916
        %v2918 = vrot.slane %v2917, 2
        %v2919 = vmax.f32 %v2917, %v2918
        %v2920 = vrot.slane %v2919, 1
        %v2921 = vmax.f32 %v2919, %v2920
        %v2922 = vsel %vm2319, %v2186, -inf
        %v2923 = vrot.slane %v2922, 4
        %v2924 = vmax.f32 %v2922, %v2923
        %v2925 = vrot.slane %v2924, 2
        %v2926 = vmax.f32 %v2924, %v2925
        %v2927 = vrot.slane %v2926, 1
        %v2928 = vmax.f32 %v2926, %v2927
        %v2929 = vsel %vm2319, %v2188, -inf
        %v2930 = vrot.slane %v2929, 4
        %v2931 = vmax.f32 %v2929, %v2930
        %v2932 = vrot.slane %v2931, 2
        %v2933 = vmax.f32 %v2931, %v2932
        %v2934 = vrot.slane %v2933, 1
        %v2935 = vmax.f32 %v2933, %v2934
        %v2936 = vsel %vm2319, %v2196, -inf
        %v2937 = vrot.slane %v2936, 4
        %v2938 = vmax.f32 %v2936, %v2937
        %v2939 = vrot.slane %v2938, 2
        %v2940 = vmax.f32 %v2938, %v2939
        %v2941 = vrot.slane %v2940, 1
        %v2942 = vmax.f32 %v2940, %v2941
        %v2943 = vsel %vm2319, %v2204, -inf
        %v2944 = vrot.slane %v2943, 4
        %v2945 = vmax.f32 %v2943, %v2944
        %v2946 = vrot.slane %v2945, 2
        %v2947 = vmax.f32 %v2945, %v2946
        %v2948 = vrot.slane %v2947, 1
        %v2949 = vmax.f32 %v2947, %v2948
        %v2950 = vsel %vm2319, %v2203, -inf
        %v2951 = vrot.slane %v2950, 4
        %v2952 = vmax.f32 %v2950, %v2951
        %v2953 = vrot.slane %v2952, 2
        %v2954 = vmax.f32 %v2952, %v2953
        %v2955 = vrot.slane %v2954, 1
        %v2956 = vmax.f32 %v2954, %v2955
        %v2957 = vsel %vm2319, %v2205, -inf
        %v2958 = vrot.slane %v2957, 4
        %v2959 = vmax.f32 %v2957, %v2958
        %v2960 = vrot.slane %v2959, 2
        %v2961 = vmax.f32 %v2959, %v2960
        %v2962 = vrot.slane %v2961, 1
        %v2963 = vmax.f32 %v2961, %v2962
        %v2964 = vsel %vm2319, %v2213, -inf
        %v2965 = vrot.slane %v2964, 4
        %v2966 = vmax.f32 %v2964, %v2965
        %v2967 = vrot.slane %v2966, 2
        %v2968 = vmax.f32 %v2966, %v2967
        %v2969 = vrot.slane %v2968, 1
        %v2970 = vmax.f32 %v2968, %v2969
        %v2971 = vsel %vm2319, %v2221, -inf
        %v2972 = vrot.slane %v2971, 4
        %v2973 = vmax.f32 %v2971, %v2972
        %v2974 = vrot.slane %v2973, 2
        %v2975 = vmax.f32 %v2973, %v2974
        %v2976 = vrot.slane %v2975, 1
        %v2977 = vmax.f32 %v2975, %v2976
        %v2978 = vsel %vm2319, %v2220, -inf
        %v2979 = vrot.slane %v2978, 4
        %v2980 = vmax.f32 %v2978, %v2979
        %v2981 = vrot.slane %v2980, 2
        %v2982 = vmax.f32 %v2980, %v2981
        %v2983 = vrot.slane %v2982, 1
        %v2984 = vmax.f32 %v2982, %v2983
        %v2985 = vsel %vm2319, %v2222, -inf
        %v2986 = vrot.slane %v2985, 4
        %v2987 = vmax.f32 %v2985, %v2986
        %v2988 = vrot.slane %v2987, 2
        %v2989 = vmax.f32 %v2987, %v2988
        %v2990 = vrot.slane %v2989, 1
        %v2991 = vmax.f32 %v2989, %v2990
        %v2992 = vld [vmem:[%s2] sm:$0x1]
        %v2994 = vlaneseq
        %v2995 = vshrl.u32 %v2994, 7
        %v2996 = vsub.s32 0, %v2995
        %v2997 = vrot.slane %v2992, %v2996
        %v2999 = vadd.f32 %v2326, %v2997
        %v3000 = vadd.f32 %v2333, %v2997
        %v3001 = vadd.f32 %v2340, %v2997
        %v3002 = vadd.f32 %v2347, %v2997
        %v3003 = vadd.f32 %v2354, %v2997
        %v3004 = vadd.f32 %v2361, %v2997
        %v3005 = vadd.f32 %v2368, %v2997
        %v3006 = vadd.f32 %v2375, %v2997
        %v3007 = vadd.f32 %v2382, %v2997
        %v3008 = vadd.f32 %v2389, %v2997
        %v3009 = vadd.f32 %v2396, %v2997
        %v3010 = vadd.f32 %v2403, %v2997
        %v3011 = vadd.f32 %v2410, %v2997
        %v3012 = vadd.f32 %v2417, %v2997
        %v3013 = vadd.f32 %v2424, %v2997
        %v3014 = vadd.f32 %v2431, %v2997
        %v3015 = vadd.f32 %v2438, %v2997
        %v3016 = vadd.f32 %v2445, %v2997
        %v3017 = vadd.f32 %v2452, %v2997
        %v3018 = vadd.f32 %v2459, %v2997
        %v3019 = vadd.f32 %v2466, %v2997
        %v3020 = vadd.f32 %v2473, %v2997
        %v3021 = vadd.f32 %v2480, %v2997
        %v3022 = vadd.f32 %v2487, %v2997
        %v3023 = vadd.f32 %v2494, %v2997
        %v3024 = vadd.f32 %v2501, %v2997
        %v3025 = vadd.f32 %v2508, %v2997
        %v3026 = vadd.f32 %v2515, %v2997
        %v3027 = vadd.f32 %v2522, %v2997
        %v3028 = vadd.f32 %v2529, %v2997
        %v3029 = vadd.f32 %v2536, %v2997
        %v3030 = vadd.f32 %v2543, %v2997
        %v3031 = vadd.f32 %v2550, %v2997
        %v3032 = vadd.f32 %v2557, %v2997
        %v3033 = vadd.f32 %v2564, %v2997
        %v3034 = vadd.f32 %v2571, %v2997
        %v3035 = vadd.f32 %v2578, %v2997
        %v3036 = vadd.f32 %v2585, %v2997
        %v3037 = vadd.f32 %v2592, %v2997
        %v3038 = vadd.f32 %v2599, %v2997
        %v3039 = vadd.f32 %v2606, %v2997
        %v3040 = vadd.f32 %v2613, %v2997
        %v3041 = vadd.f32 %v2620, %v2997
        %v3042 = vadd.f32 %v2627, %v2997
        %v3043 = vadd.f32 %v2634, %v2997
        %v3044 = vadd.f32 %v2641, %v2997
        %v3045 = vadd.f32 %v2648, %v2997
        %v3046 = vadd.f32 %v2655, %v2997
        %v3047 = vadd.f32 %v2662, %v2997
        %v3048 = vadd.f32 %v2669, %v2997
        %v3049 = vadd.f32 %v2676, %v2997
        %v3050 = vadd.f32 %v2683, %v2997
        %v3051 = vadd.f32 %v2690, %v2997
        %v3052 = vadd.f32 %v2697, %v2997
        %v3053 = vadd.f32 %v2704, %v2997
        %v3054 = vadd.f32 %v2711, %v2997
        %v3055 = vadd.f32 %v2718, %v2997
        %v3056 = vadd.f32 %v2725, %v2997
        %v3057 = vadd.f32 %v2732, %v2997
        %v3058 = vadd.f32 %v2739, %v2997
        %v3059 = vadd.f32 %v2746, %v2997
        %v3060 = vadd.f32 %v2753, %v2997
        %v3061 = vadd.f32 %v2760, %v2997
        %v3062 = vadd.f32 %v2767, %v2997
        %v3063 = vadd.f32 %v2774, %v2997
        %v3064 = vadd.f32 %v2781, %v2997
        %v3065 = vadd.f32 %v2788, %v2997
        %v3066 = vadd.f32 %v2795, %v2997
        %v3067 = vadd.f32 %v2802, %v2997
        %v3068 = vadd.f32 %v2809, %v2997
        %v3069 = vadd.f32 %v2816, %v2997
        %v3070 = vadd.f32 %v2823, %v2997
        %v3071 = vadd.f32 %v2830, %v2997
        %v3072 = vadd.f32 %v2837, %v2997
        %v3073 = vadd.f32 %v2844, %v2997
        %v3074 = vadd.f32 %v2851, %v2997
        %v3075 = vadd.f32 %v2858, %v2997
        %v3076 = vadd.f32 %v2865, %v2997
        %v3077 = vadd.f32 %v2872, %v2997
        %v3078 = vadd.f32 %v2879, %v2997
        %v3079 = vadd.f32 %v2886, %v2997
        %v3080 = vadd.f32 %v2893, %v2997
        %v3081 = vadd.f32 %v2900, %v2997
        %v3082 = vadd.f32 %v2907, %v2997
        %v3083 = vadd.f32 %v2914, %v2997
        %v3084 = vadd.f32 %v2921, %v2997
        %v3085 = vadd.f32 %v2928, %v2997
        %v3086 = vadd.f32 %v2935, %v2997
        %v3087 = vadd.f32 %v2942, %v2997
        %v3088 = vadd.f32 %v2949, %v2997
        %v3089 = vadd.f32 %v2956, %v2997
        %v3090 = vadd.f32 %v2963, %v2997
        %v3091 = vadd.f32 %v2970, %v2997
        %v3092 = vadd.f32 %v2977, %v2997
        %v3093 = vadd.f32 %v2984, %v2997
        %v3094 = vadd.f32 %v2991, %v2997
        %v3095 = vmax.f32 %v2999, 0.0
        %v3096 = vmax.f32 %v3000, 0.0
        %v3097 = vmax.f32 %v3001, 0.0
        %v3098 = vmax.f32 %v3002, 0.0
        %v3099 = vmax.f32 %v3003, 0.0
        %v3100 = vmax.f32 %v3004, 0.0
        %v3101 = vmax.f32 %v3005, 0.0
        %v3102 = vmax.f32 %v3006, 0.0
        %v3103 = vmax.f32 %v3007, 0.0
        %v3104 = vmax.f32 %v3008, 0.0
        %v3105 = vmax.f32 %v3009, 0.0
        %v3106 = vmax.f32 %v3010, 0.0
        %v3107 = vmax.f32 %v3011, 0.0
        %v3108 = vmax.f32 %v3012, 0.0
        %v3109 = vmax.f32 %v3013, 0.0
        %v3110 = vmax.f32 %v3014, 0.0
        %v3111 = vmax.f32 %v3015, 0.0
        %v3112 = vmax.f32 %v3016, 0.0
        %v3113 = vmax.f32 %v3017, 0.0
        %v3114 = vmax.f32 %v3018, 0.0
        %v3115 = vmax.f32 %v3019, 0.0
        %v3116 = vmax.f32 %v3020, 0.0
        %v3117 = vmax.f32 %v3021, 0.0
        %v3118 = vmax.f32 %v3022, 0.0
        %v3119 = vmax.f32 %v3023, 0.0
        %v3120 = vmax.f32 %v3024, 0.0
        %v3121 = vmax.f32 %v3025, 0.0
        %v3122 = vmax.f32 %v3026, 0.0
        %v3123 = vmax.f32 %v3027, 0.0
        %v3124 = vmax.f32 %v3028, 0.0
        %v3125 = vmax.f32 %v3029, 0.0
        %v3126 = vmax.f32 %v3030, 0.0
        %v3127 = vmax.f32 %v3031, 0.0
        %v3128 = vmax.f32 %v3032, 0.0
        %v3129 = vmax.f32 %v3033, 0.0
        %v3130 = vmax.f32 %v3034, 0.0
        %v3131 = vmax.f32 %v3035, 0.0
        %v3132 = vmax.f32 %v3036, 0.0
        %v3133 = vmax.f32 %v3037, 0.0
        %v3134 = vmax.f32 %v3038, 0.0
        %v3135 = vmax.f32 %v3039, 0.0
        %v3136 = vmax.f32 %v3040, 0.0
        %v3137 = vmax.f32 %v3041, 0.0
        %v3138 = vmax.f32 %v3042, 0.0
        %v3139 = vmax.f32 %v3043, 0.0
        %v3140 = vmax.f32 %v3044, 0.0
        %v3141 = vmax.f32 %v3045, 0.0
        %v3142 = vmax.f32 %v3046, 0.0
        %v3143 = vmax.f32 %v3047, 0.0
        %v3144 = vmax.f32 %v3048, 0.0
        %v3145 = vmax.f32 %v3049, 0.0
        %v3146 = vmax.f32 %v3050, 0.0
        %v3147 = vmax.f32 %v3051, 0.0
        %v3148 = vmax.f32 %v3052, 0.0
        %v3149 = vmax.f32 %v3053, 0.0
        %v3150 = vmax.f32 %v3054, 0.0
        %v3151 = vmax.f32 %v3055, 0.0
        %v3152 = vmax.f32 %v3056, 0.0
        %v3153 = vmax.f32 %v3057, 0.0
        %v3154 = vmax.f32 %v3058, 0.0
        %v3155 = vmax.f32 %v3059, 0.0
        %v3156 = vmax.f32 %v3060, 0.0
        %v3157 = vmax.f32 %v3061, 0.0
        %v3158 = vmax.f32 %v3062, 0.0
        %v3159 = vmax.f32 %v3063, 0.0
        %v3160 = vmax.f32 %v3064, 0.0
        %v3161 = vmax.f32 %v3065, 0.0
        %v3162 = vmax.f32 %v3066, 0.0
        %v3163 = vmax.f32 %v3067, 0.0
        %v3164 = vmax.f32 %v3068, 0.0
        %v3165 = vmax.f32 %v3069, 0.0
        %v3166 = vmax.f32 %v3070, 0.0
        %v3167 = vmax.f32 %v3071, 0.0
        %v3168 = vmax.f32 %v3072, 0.0
        %v3169 = vmax.f32 %v3073, 0.0
        %v3170 = vmax.f32 %v3074, 0.0
        %v3171 = vmax.f32 %v3075, 0.0
        %v3172 = vmax.f32 %v3076, 0.0
        %v3173 = vmax.f32 %v3077, 0.0
        %v3174 = vmax.f32 %v3078, 0.0
        %v3175 = vmax.f32 %v3079, 0.0
        %v3176 = vmax.f32 %v3080, 0.0
        %v3177 = vmax.f32 %v3081, 0.0
        %v3178 = vmax.f32 %v3082, 0.0
        %v3179 = vmax.f32 %v3083, 0.0
        %v3180 = vmax.f32 %v3084, 0.0
        %v3181 = vmax.f32 %v3085, 0.0
        %v3182 = vmax.f32 %v3086, 0.0
        %v3183 = vmax.f32 %v3087, 0.0
        %v3184 = vmax.f32 %v3088, 0.0
        %v3185 = vmax.f32 %v3089, 0.0
        %v3186 = vmax.f32 %v3090, 0.0
        %v3187 = vmax.f32 %v3091, 0.0
        %v3188 = vmax.f32 %v3092, 0.0
        %v3189 = vmax.f32 %v3093, 0.0
        %v3190 = vmax.f32 %v3094, 0.0
        %v3191 = vpack.c.bf16 %v3095, %v3095
        %v3192 = vpack.c.bf16 %v3096, %v3096
        %v3193 = vpack.c.bf16 %v3097, %v3097
        %v3194 = vpack.c.bf16 %v3098, %v3098
        %v3195 = vpack.c.bf16 %v3099, %v3099
        %v3196 = vpack.c.bf16 %v3100, %v3100
        %v3197 = vpack.c.bf16 %v3101, %v3101
        %v3198 = vpack.c.bf16 %v3102, %v3102
        %v3199 = vpack.c.bf16 %v3107, %v3107
        %v3200 = vpack.c.bf16 %v3108, %v3108
        %v3201 = vpack.c.bf16 %v3109, %v3109
        %v3202 = vpack.c.bf16 %v3110, %v3110
        %v3203 = vpack.c.bf16 %v3111, %v3111
        %v3204 = vpack.c.bf16 %v3112, %v3112
        %v3205 = vpack.c.bf16 %v3113, %v3113
        %v3206 = vpack.c.bf16 %v3114, %v3114
        %v3207 = vpack.c.bf16 %v3119, %v3119
        %v3208 = vpack.c.bf16 %v3120, %v3120
        %v3209 = vpack.c.bf16 %v3121, %v3121
        %v3210 = vpack.c.bf16 %v3122, %v3122
        %v3211 = vpack.c.bf16 %v3123, %v3123
        %v3212 = vpack.c.bf16 %v3124, %v3124
        %v3213 = vpack.c.bf16 %v3125, %v3125
        %v3214 = vpack.c.bf16 %v3126, %v3126
        %v3215 = vpack.c.bf16 %v3131, %v3131
        %v3216 = vpack.c.bf16 %v3132, %v3132
        %v3217 = vpack.c.bf16 %v3133, %v3133
        %v3218 = vpack.c.bf16 %v3134, %v3134
        %v3219 = vpack.c.bf16 %v3135, %v3135
        %v3220 = vpack.c.bf16 %v3136, %v3136
        %v3221 = vpack.c.bf16 %v3137, %v3137
        %v3222 = vpack.c.bf16 %v3138, %v3138
        %v3223 = vpack.c.bf16 %v3143, %v3143
        %v3224 = vpack.c.bf16 %v3144, %v3144
        %v3225 = vpack.c.bf16 %v3145, %v3145
        %v3226 = vpack.c.bf16 %v3146, %v3146
        %v3227 = vpack.c.bf16 %v3147, %v3147
        %v3228 = vpack.c.bf16 %v3148, %v3148
        %v3229 = vpack.c.bf16 %v3149, %v3149
        %v3230 = vpack.c.bf16 %v3150, %v3150
        %v3231 = vpack.c.bf16 %v3155, %v3155
        %v3232 = vpack.c.bf16 %v3156, %v3156
        %v3233 = vpack.c.bf16 %v3157, %v3157
        %v3234 = vpack.c.bf16 %v3158, %v3158
        %v3235 = vpack.c.bf16 %v3159, %v3159
        %v3236 = vpack.c.bf16 %v3160, %v3160
        %v3237 = vpack.c.bf16 %v3161, %v3161
        %v3238 = vpack.c.bf16 %v3162, %v3162
        %v3239 = vpack.c.bf16 %v3167, %v3167
        %v3240 = vpack.c.bf16 %v3168, %v3168
        %v3241 = vpack.c.bf16 %v3169, %v3169
        %v3242 = vpack.c.bf16 %v3170, %v3170
        %v3243 = vpack.c.bf16 %v3171, %v3171
        %v3244 = vpack.c.bf16 %v3172, %v3172
        %v3245 = vpack.c.bf16 %v3173, %v3173
        %v3246 = vpack.c.bf16 %v3174, %v3174
        %v3247 = vpack.c.bf16 %v3179, %v3179
        %v3248 = vpack.c.bf16 %v3180, %v3180
        %v3249 = vpack.c.bf16 %v3181, %v3181
        %v3250 = vpack.c.bf16 %v3182, %v3182
        %v3251 = vpack.c.bf16 %v3183, %v3183
        %v3252 = vpack.c.bf16 %v3184, %v3184
        %v3253 = vpack.c.bf16 %v3185, %v3185
        %v3254 = vpack.c.bf16 %v3186, %v3186
        %v3255 = vld [vmem:[%s3] sm:$0xff]
        %v3256 = vld [vmem:[%s3 + $0x8] sm:$0xff]
        %v3257 = vld [vmem:[%s3 + $0x10] sm:$0xff]
        %v3258 = vld [vmem:[%s3 + $0x18] sm:$0xff]
        %v3259 = vld [vmem:[%s3 + $0x20] sm:$0xff]
        %v3260 = vld [vmem:[%s3 + $0x28] sm:$0xff]
        %v3261 = vld [vmem:[%s3 + $0x30] sm:$0xff]
        %v3262 = vld [vmem:[%s3 + $0x38] sm:$0xff]
        %v3263 = vld [vmem:[%s3 + $0x40] sm:$0xff]
        %v3264 = vld [vmem:[%s3 + $0x48] sm:$0xff]
        %v3265 = vld [vmem:[%s3 + $0x50] sm:$0xff]
        %v3266 = vld [vmem:[%s3 + $0x58] sm:$0xff]
        %v3267 = vld [vmem:[%s3 + $0x60] sm:$0xff]
        %v3268 = vld [vmem:[%s3 + $0x68] sm:$0xff]
        %v3269 = vld [vmem:[%s3 + $0x70] sm:$0xff]
        %v3270 = vld [vmem:[%s3 + $0x78] sm:$0xff]
        %v3271 = vpack.c.bf16 %v3103, %v3103
        %v3272 = vpack.c.bf16 %v3115, %v3115
        %v3273 = vpack.c.bf16 %v3127, %v3127
        %v3274 = vpack.c.bf16 %v3139, %v3139
        %v3275 = vpack.c.bf16 %v3151, %v3151
        %v3276 = vpack.c.bf16 %v3163, %v3163
        %v3277 = vpack.c.bf16 %v3175, %v3175
        %v3278 = vpack.c.bf16 %v3187, %v3187
        %s3279 = scalar_lea.vmem %s3, 128
        %v3280 = vld [vmem:[%s3279] sm:$0xff]
        %v3281 = vld [vmem:[%s3279 + $0x8] sm:$0xff]
        %v3282 = vld [vmem:[%s3279 + $0x10] sm:$0xff]
        %v3283 = vld [vmem:[%s3279 + $0x18] sm:$0xff]
        %v3284 = vld [vmem:[%s3279 + $0x20] sm:$0xff]
        %v3285 = vld [vmem:[%s3279 + $0x28] sm:$0xff]
        %v3286 = vld [vmem:[%s3279 + $0x30] sm:$0xff]
        %v3287 = vld [vmem:[%s3279 + $0x38] sm:$0xff]
        %v3288 = vld [vmem:[%s3279 + $0x40] sm:$0xff]
        %v3289 = vld [vmem:[%s3279 + $0x48] sm:$0xff]
        %v3290 = vld [vmem:[%s3279 + $0x50] sm:$0xff]
        %v3291 = vld [vmem:[%s3279 + $0x58] sm:$0xff]
        %v3292 = vld [vmem:[%s3279 + $0x60] sm:$0xff]
        %v3293 = vld [vmem:[%s3279 + $0x68] sm:$0xff]
        %v3294 = vld [vmem:[%s3279 + $0x70] sm:$0xff]
        %v3295 = vld [vmem:[%s3279 + $0x78] sm:$0xff]
        %v3360 = vunpack.c.l.b16 %v3192
        %v3361 = vunpack.c.l.b16 %v3193
        %v3362 = vunpack.c.l.b16 %v3194
        %v3363 = vunpack.c.l.b16 %v3195
        %v3364 = vunpack.c.l.b16 %v3196
        %v3365 = vunpack.c.l.b16 %v3197
        %v3366 = vunpack.c.l.b16 %v3198
        %v3367 = vunpack.c.l.b16 %v3271
        %v3368 = vunpack.c.l.b16 %v3200
        %v3369 = vunpack.c.l.b16 %v3201
        %v3370 = vunpack.c.l.b16 %v3202
        %v3371 = vunpack.c.l.b16 %v3203
        %v3372 = vunpack.c.l.b16 %v3204
        %v3373 = vunpack.c.l.b16 %v3205
        %v3374 = vunpack.c.l.b16 %v3206
        %v3375 = vunpack.c.l.b16 %v3272
        %v3376 = vunpack.c.l.b16 %v3208
        %v3377 = vunpack.c.l.b16 %v3209
        %v3378 = vunpack.c.l.b16 %v3210
        %v3379 = vunpack.c.l.b16 %v3211
        %v3380 = vunpack.c.l.b16 %v3212
        %v3381 = vunpack.c.l.b16 %v3213
        %v3382 = vunpack.c.l.b16 %v3214
        %v3383 = vunpack.c.l.b16 %v3273
        %v3384 = vunpack.c.l.b16 %v3216
        %v3385 = vunpack.c.l.b16 %v3217
        %v3386 = vunpack.c.l.b16 %v3218
        %v3387 = vunpack.c.l.b16 %v3219
        %v3388 = vunpack.c.l.b16 %v3220
        %v3389 = vunpack.c.l.b16 %v3221
        %v3390 = vunpack.c.l.b16 %v3222
        %v3391 = vunpack.c.l.b16 %v3274
        %v3392 = vunpack.c.l.b16 %v3224
        %v3393 = vunpack.c.l.b16 %v3225
        %v3394 = vunpack.c.l.b16 %v3226
        %v3395 = vunpack.c.l.b16 %v3227
        %v3396 = vunpack.c.l.b16 %v3228
        %v3397 = vunpack.c.l.b16 %v3229
        %v3398 = vunpack.c.l.b16 %v3230
        %v3399 = vunpack.c.l.b16 %v3275
        %v3400 = vunpack.c.l.b16 %v3232
        %v3401 = vunpack.c.l.b16 %v3233
        %v3402 = vunpack.c.l.b16 %v3234
        %v3403 = vunpack.c.l.b16 %v3235
        %v3404 = vunpack.c.l.b16 %v3236
        %v3405 = vunpack.c.l.b16 %v3237
        %v3406 = vunpack.c.l.b16 %v3238
        %v3407 = vunpack.c.l.b16 %v3276
        %v3408 = vunpack.c.l.b16 %v3240
        %v3409 = vunpack.c.l.b16 %v3241
        %v3410 = vunpack.c.l.b16 %v3242
        %v3411 = vunpack.c.l.b16 %v3243
        %v3412 = vunpack.c.l.b16 %v3244
        %v3413 = vunpack.c.l.b16 %v3245
        %v3414 = vunpack.c.l.b16 %v3246
        %v3415 = vunpack.c.l.b16 %v3277
        %v3416 = vunpack.c.l.b16 %v3248
        %v3417 = vunpack.c.l.b16 %v3249
        %v3418 = vunpack.c.l.b16 %v3250
        %v3419 = vunpack.c.l.b16 %v3251
        %v3420 = vunpack.c.l.b16 %v3252
        %v3421 = vunpack.c.l.b16 %v3253
        %v3422 = vunpack.c.l.b16 %v3254
        %v3423 = vunpack.c.l.b16 %v3278
        %v3424 = vrot.slane %v3361, 7
        %vm3425 = vcmask 1041409
        %v3426 = vsel %vm3425, %v3424, %v3360
        %v3427 = vrot.slane %v3362, 6
        %vm3428 = vcmask 1042434
        %v3429 = vsel %vm3428, %v3427, %v3426
        %v3430 = vrot.slane %v3363, 5
        %vm3431 = vcmask 1043459
        %v3432 = vsel %vm3431, %v3430, %v3429
        %v3433 = vrot.slane %v3364, 4
        %vm3434 = vcmask 1044484
        %v3435 = vsel %vm3434, %v3433, %v3432
        %v3436 = vrot.slane %v3365, 3
        %vm3437 = vcmask 1045509
        %v3438 = vsel %vm3437, %v3436, %v3435
        %v3439 = vrot.slane %v3366, 2
        %vm3440 = vcmask 1046534
        %v3441 = vsel %vm3440, %v3439, %v3438
        %v3442 = vrot.slane %v3367, 1
        %vm3443 = vcmask 1047559
        %v3444 = vsel %vm3443, %v3442, %v3441
        %v3445 = vrot.slane %v3369, 7
        %v3446 = vsel %vm3425, %v3445, %v3368
        %v3447 = vrot.slane %v3370, 6
        %v3448 = vsel %vm3428, %v3447, %v3446
        %v3449 = vrot.slane %v3371, 5
        %v3450 = vsel %vm3431, %v3449, %v3448
        %v3451 = vrot.slane %v3372, 4
        %v3452 = vsel %vm3434, %v3451, %v3450
        %v3453 = vrot.slane %v3373, 3
        %v3454 = vsel %vm3437, %v3453, %v3452
        %v3455 = vrot.slane %v3374, 2
        %v3456 = vsel %vm3440, %v3455, %v3454
        %v3457 = vrot.slane %v3375, 1
        %v3458 = vsel %vm3443, %v3457, %v3456
        %v3459 = vrot.slane %v3377, 7
        %v3460 = vsel %vm3425, %v3459, %v3376
        %v3461 = vrot.slane %v3378, 6
        %v3462 = vsel %vm3428, %v3461, %v3460
        %v3463 = vrot.slane %v3379, 5
        %v3464 = vsel %vm3431, %v3463, %v3462
        %v3465 = vrot.slane %v3380, 4
        %v3466 = vsel %vm3434, %v3465, %v3464
        %v3467 = vrot.slane %v3381, 3
        %v3468 = vsel %vm3437, %v3467, %v3466
        %v3469 = vrot.slane %v3382, 2
        %v3470 = vsel %vm3440, %v3469, %v3468
        %v3471 = vrot.slane %v3383, 1
        %v3472 = vsel %vm3443, %v3471, %v3470
        %v3473 = vrot.slane %v3385, 7
        %v3474 = vsel %vm3425, %v3473, %v3384
        %v3475 = vrot.slane %v3386, 6
        %v3476 = vsel %vm3428, %v3475, %v3474
        %v3477 = vrot.slane %v3387, 5
        %v3478 = vsel %vm3431, %v3477, %v3476
        %v3479 = vrot.slane %v3388, 4
        %v3480 = vsel %vm3434, %v3479, %v3478
        %v3481 = vrot.slane %v3389, 3
        %v3482 = vsel %vm3437, %v3481, %v3480
        %v3483 = vrot.slane %v3390, 2
        %v3484 = vsel %vm3440, %v3483, %v3482
        %v3485 = vrot.slane %v3391, 1
        %v3486 = vsel %vm3443, %v3485, %v3484
        %v3487 = vrot.slane %v3393, 7
        %v3488 = vsel %vm3425, %v3487, %v3392
        %v3489 = vrot.slane %v3394, 6
        %v3490 = vsel %vm3428, %v3489, %v3488
        %v3491 = vrot.slane %v3395, 5
        %v3492 = vsel %vm3431, %v3491, %v3490
        %v3493 = vrot.slane %v3396, 4
        %v3494 = vsel %vm3434, %v3493, %v3492
        %v3495 = vrot.slane %v3397, 3
        %v3496 = vsel %vm3437, %v3495, %v3494
        %v3497 = vrot.slane %v3398, 2
        %v3498 = vsel %vm3440, %v3497, %v3496
        %v3499 = vrot.slane %v3399, 1
        %v3500 = vsel %vm3443, %v3499, %v3498
        %v3501 = vrot.slane %v3401, 7
        %v3502 = vsel %vm3425, %v3501, %v3400
        %v3503 = vrot.slane %v3402, 6
        %v3504 = vsel %vm3428, %v3503, %v3502
        %v3505 = vrot.slane %v3403, 5
        %v3506 = vsel %vm3431, %v3505, %v3504
        %v3507 = vrot.slane %v3404, 4
        %v3508 = vsel %vm3434, %v3507, %v3506
        %v3509 = vrot.slane %v3405, 3
        %v3510 = vsel %vm3437, %v3509, %v3508
        %v3511 = vrot.slane %v3406, 2
        %v3512 = vsel %vm3440, %v3511, %v3510
        %v3513 = vrot.slane %v3407, 1
        %v3514 = vsel %vm3443, %v3513, %v3512
        %v3515 = vrot.slane %v3409, 7
        %v3516 = vsel %vm3425, %v3515, %v3408
        %v3517 = vrot.slane %v3410, 6
        %v3518 = vsel %vm3428, %v3517, %v3516
        %v3519 = vrot.slane %v3411, 5
        %v3520 = vsel %vm3431, %v3519, %v3518
        %v3521 = vrot.slane %v3412, 4
        %v3522 = vsel %vm3434, %v3521, %v3520
        %v3523 = vrot.slane %v3413, 3
        %v3524 = vsel %vm3437, %v3523, %v3522
        %v3525 = vrot.slane %v3414, 2
        %v3526 = vsel %vm3440, %v3525, %v3524
        %v3527 = vrot.slane %v3415, 1
        %v3528 = vsel %vm3443, %v3527, %v3526
        %v3529 = vrot.slane %v3417, 7
        %v3530 = vsel %vm3425, %v3529, %v3416
        %v3531 = vrot.slane %v3418, 6
        %v3532 = vsel %vm3428, %v3531, %v3530
        %v3533 = vrot.slane %v3419, 5
        %v3534 = vsel %vm3431, %v3533, %v3532
        %v3535 = vrot.slane %v3420, 4
        %v3536 = vsel %vm3434, %v3535, %v3534
        %v3537 = vrot.slane %v3421, 3
        %v3538 = vsel %vm3437, %v3537, %v3536
        %v3539 = vrot.slane %v3422, 2
        %v3540 = vsel %vm3440, %v3539, %v3538
        %v3541 = vrot.slane %v3423, 1
        %v3542 = vsel %vm3443, %v3541, %v3540
        %v3543 = vpack.c.b16 %v3458, %v3444
        %v3544 = vpack.c.b16 %v3486, %v3472
        %v3545 = vpack.c.b16 %v3514, %v3500
        %v3546 = vpack.c.b16 %v3542, %v3528
        %v3567 = vunpack.c.l.b16 %v3280
        %v3568 = vunpack.c.h.b16 %v3280
        %v3569 = vunpack.c.l.b16 %v3281
        %v3570 = vunpack.c.h.b16 %v3281
        %v3571 = vunpack.c.l.b16 %v3282
        %v3572 = vunpack.c.h.b16 %v3282
        %v3573 = vunpack.c.l.b16 %v3283
        %v3574 = vunpack.c.h.b16 %v3283
        %v3575 = vunpack.c.l.b16 %v3284
        %v3576 = vunpack.c.h.b16 %v3284
        %v3577 = vunpack.c.l.b16 %v3285
        %v3578 = vunpack.c.h.b16 %v3285
        %v3579 = vunpack.c.l.b16 %v3286
        %v3580 = vunpack.c.h.b16 %v3286
        %v3581 = vunpack.c.l.b16 %v3287
        %v3582 = vunpack.c.h.b16 %v3287
        %v3583 = vunpack.c.l.b16 %v3288
        %v3584 = vunpack.c.h.b16 %v3288
        %v3585 = vunpack.c.l.b16 %v3289
        %v3586 = vunpack.c.h.b16 %v3289
        %v3587 = vunpack.c.l.b16 %v3290
        %v3588 = vunpack.c.h.b16 %v3290
        %v3589 = vunpack.c.l.b16 %v3291
        %v3590 = vunpack.c.h.b16 %v3291
        %v3591 = vunpack.c.l.b16 %v3292
        %v3592 = vunpack.c.h.b16 %v3292
        %v3593 = vunpack.c.l.b16 %v3293
        %v3594 = vunpack.c.h.b16 %v3293
        %v3595 = vunpack.c.l.b16 %v3294
        %v3596 = vunpack.c.h.b16 %v3294
        %v3597 = vunpack.c.l.b16 %v3295
        %v3598 = vunpack.c.h.b16 %v3295
        %v3599 = vpack.c.b16 %v3569, %v3567
        %v3600 = vpack.c.b16 %v3570, %v3568
        %v3601 = vpack.c.b16 %v3573, %v3571
        %v3602 = vpack.c.b16 %v3574, %v3572
        %v3603 = vpack.c.b16 %v3577, %v3575
        %v3604 = vpack.c.b16 %v3578, %v3576
        %v3605 = vpack.c.b16 %v3581, %v3579
        %v3606 = vpack.c.b16 %v3582, %v3580
        %v3607 = vpack.c.b16 %v3585, %v3583
        %v3608 = vpack.c.b16 %v3586, %v3584
        %v3609 = vpack.c.b16 %v3589, %v3587
        %v3610 = vpack.c.b16 %v3590, %v3588
        %v3611 = vpack.c.b16 %v3593, %v3591
        %v3612 = vpack.c.b16 %v3594, %v3592
        %v3613 = vpack.c.b16 %v3597, %v3595
        %v3614 = vpack.c.b16 %v3598, %v3596
        %3631 = vmatprep.subr.bf16.mxu0 %v3600
        %3632 = vmatpush1.bf16.msra.mxu0 %v3599
        %3633 = vmatprep.subr.bf16.mxu0 %v3602
        %3634 = vmatpush1.bf16.msra.mxu0 %v3601
        %3635 = vmatprep.subr.bf16.mxu0 %v3604
        %3636 = vmatpush1.bf16.msra.mxu0 %v3603
        %3637 = vmatprep.subr.bf16.mxu0 %v3606
        %3638 = vmatpush1.bf16.msra.mxu0 %v3605
        %3639 = vmatprep.subr.bf16.mxu0 %v3608
        %3640 = vmatpush1.bf16.msra.mxu0 %v3607
        %3641 = vmatprep.subr.bf16.mxu0 %v3610
        %3642 = vmatpush1.bf16.msra.mxu0 %v3609
        %3643 = vmatprep.subr.bf16.mxu0 %v3612
        %3644 = vmatpush1.bf16.msra.mxu0 %v3611
        %3645 = vmatprep.subr.bf16.mxu0 %v3614
        %3646 = vmatpush1.bf16.msra.mxu0 %v3613
        %3647 = vmatprep.subr.bf16.mxu0 0
        %3648 = vmatpush1.bf16.msra.mxu0 0
        %3649 = vmatprep.subr.bf16.mxu0 0
        %3650 = vmatpush1.bf16.msra.mxu0 0
        %3651 = vmatprep.subr.bf16.mxu0 0
        %3652 = vmatpush1.bf16.msra.mxu0 0
        %3653 = vmatprep.subr.bf16.mxu0 0
        %3654 = vmatpush1.bf16.msra.mxu0 0
        %3655 = vmatprep.subr.bf16.mxu0 0
        %3656 = vmatpush1.bf16.msra.mxu0 0
        %3657 = vmatprep.subr.bf16.mxu0 0
        %3658 = vmatpush1.bf16.msra.mxu0 0
        %3659 = vmatprep.subr.bf16.mxu0 0
        %3660 = vmatpush1.bf16.msra.mxu0 0
        %3661 = vmatprep.subr.bf16.mxu0 0
        %3662 = vmatpush1.bf16.msra.mxu0 0
        %3663 = vmatprep.mubr.bf16.mxu0 0
        %3664 = vmatmul.mubr.bf16.gmra.mrb[0].mxu0 %v3543
        %v3665 = vpop.f32.mrb[0].mxu0
        %v3666 = vadd.f32 0.0, %v3665
        %v3667 = vpop.f32.mrb[0].mxu0
        %v3668 = vadd.f32 0.0, %v3667
        %v3669 = vpop.f32.mrb[0].mxu0
        %v3670 = vadd.f32 0.0, %v3669
        %v3671 = vpop.f32.mrb[0].mxu0
        %v3672 = vadd.f32 0.0, %v3671
        %3673 = vmatprep.mubr.bf16.mxu0 0
        %3674 = vmatmul.mubr.bf16.gmra.mrb[0].mxu0 %v3544
        %v3675 = vpop.f32.mrb[0].mxu0
        %v3676 = vadd.f32 0.0, %v3675
        %v3677 = vpop.f32.mrb[0].mxu0
        %v3678 = vadd.f32 0.0, %v3677
        %v3679 = vpop.f32.mrb[0].mxu0
        %v3680 = vadd.f32 0.0, %v3679
        %v3681 = vpop.f32.mrb[0].mxu0
        %v3682 = vadd.f32 0.0, %v3681
        %3683 = vmatprep.mubr.bf16.mxu0 0
        %3684 = vmatmul.mubr.bf16.gmra.mrb[0].mxu0 %v3545
        %v3685 = vpop.f32.mrb[0].mxu0
        %v3686 = vadd.f32 0.0, %v3685
        %v3687 = vpop.f32.mrb[0].mxu0
        %v3688 = vadd.f32 0.0, %v3687
        %v3689 = vpop.f32.mrb[0].mxu0
        %v3690 = vadd.f32 0.0, %v3689
        %v3691 = vpop.f32.mrb[0].mxu0
        %v3692 = vadd.f32 0.0, %v3691
        %3693 = vmatprep.mubr.bf16.mxu0 0
        %3694 = vmatmul.mubr.bf16.gmra.mrb[0].mxu0 %v3546
        %v3695 = vpop.f32.mrb[0].mxu0
        %v3696 = vadd.f32 0.0, %v3695
        %v3697 = vpop.f32.mrb[0].mxu0
        %v3698 = vadd.f32 0.0, %v3697
        %v3699 = vpop.f32.mrb[0].mxu0
        %v3700 = vadd.f32 0.0, %v3699
        %v3701 = vpop.f32.mrb[0].mxu0
        %v3702 = vadd.f32 0.0, %v3701
        %3703 = vdwg.mxu0
        %v3712 = vunpack.c.l.b16 %v3191
        %v3713 = vunpack.c.l.b16 %v3199
        %v3714 = vunpack.c.l.b16 %v3207
        %v3715 = vunpack.c.l.b16 %v3215
        %v3716 = vunpack.c.l.b16 %v3223
        %v3717 = vunpack.c.l.b16 %v3231
        %v3718 = vunpack.c.l.b16 %v3239
        %v3719 = vunpack.c.l.b16 %v3247
        %v3720 = vrot.slane %v3360, 7
        %v3721 = vsel %vm3425, %v3720, %v3712
        %v3722 = vrot.slane %v3361, 6
        %v3723 = vsel %vm3428, %v3722, %v3721
        %v3724 = vrot.slane %v3362, 5
        %v3725 = vsel %vm3431, %v3724, %v3723
        %v3726 = vrot.slane %v3363, 4
        %v3727 = vsel %vm3434, %v3726, %v3725
        %v3728 = vrot.slane %v3364, 3
        %v3729 = vsel %vm3437, %v3728, %v3727
        %v3730 = vrot.slane %v3365, 2
        %v3731 = vsel %vm3440, %v3730, %v3729
        %v3732 = vrot.slane %v3366, 1
        %v3733 = vsel %vm3443, %v3732, %v3731
        %v3734 = vrot.slane %v3368, 7
        %v3735 = vsel %vm3425, %v3734, %v3713
        %v3736 = vrot.slane %v3369, 6
        %v3737 = vsel %vm3428, %v3736, %v3735
        %v3738 = vrot.slane %v3370, 5
        %v3739 = vsel %vm3431, %v3738, %v3737
        %v3740 = vrot.slane %v3371, 4
        %v3741 = vsel %vm3434, %v3740, %v3739
        %v3742 = vrot.slane %v3372, 3
        %v3743 = vsel %vm3437, %v3742, %v3741
        %v3744 = vrot.slane %v3373, 2
        %v3745 = vsel %vm3440, %v3744, %v3743
        %v3746 = vrot.slane %v3374, 1
        %v3747 = vsel %vm3443, %v3746, %v3745
        %v3748 = vrot.slane %v3376, 7
        %v3749 = vsel %vm3425, %v3748, %v3714
        %v3750 = vrot.slane %v3377, 6
        %v3751 = vsel %vm3428, %v3750, %v3749
        %v3752 = vrot.slane %v3378, 5
        %v3753 = vsel %vm3431, %v3752, %v3751
        %v3754 = vrot.slane %v3379, 4
        %v3755 = vsel %vm3434, %v3754, %v3753
        %v3756 = vrot.slane %v3380, 3
        %v3757 = vsel %vm3437, %v3756, %v3755
        %v3758 = vrot.slane %v3381, 2
        %v3759 = vsel %vm3440, %v3758, %v3757
        %v3760 = vrot.slane %v3382, 1
        %v3761 = vsel %vm3443, %v3760, %v3759
        %v3762 = vrot.slane %v3384, 7
        %v3763 = vsel %vm3425, %v3762, %v3715
        %v3764 = vrot.slane %v3385, 6
        %v3765 = vsel %vm3428, %v3764, %v3763
        %v3766 = vrot.slane %v3386, 5
        %v3767 = vsel %vm3431, %v3766, %v3765
        %v3768 = vrot.slane %v3387, 4
        %v3769 = vsel %vm3434, %v3768, %v3767
        %v3770 = vrot.slane %v3388, 3
        %v3771 = vsel %vm3437, %v3770, %v3769
        %v3772 = vrot.slane %v3389, 2
        %v3773 = vsel %vm3440, %v3772, %v3771
        %v3774 = vrot.slane %v3390, 1
        %v3775 = vsel %vm3443, %v3774, %v3773
        %v3776 = vrot.slane %v3392, 7
        %v3777 = vsel %vm3425, %v3776, %v3716
        %v3778 = vrot.slane %v3393, 6
        %v3779 = vsel %vm3428, %v3778, %v3777
        %v3780 = vrot.slane %v3394, 5
        %v3781 = vsel %vm3431, %v3780, %v3779
        %v3782 = vrot.slane %v3395, 4
        %v3783 = vsel %vm3434, %v3782, %v3781
        %v3784 = vrot.slane %v3396, 3
        %v3785 = vsel %vm3437, %v3784, %v3783
        %v3786 = vrot.slane %v3397, 2
        %v3787 = vsel %vm3440, %v3786, %v3785
        %v3788 = vrot.slane %v3398, 1
        %v3789 = vsel %vm3443, %v3788, %v3787
        %v3790 = vrot.slane %v3400, 7
        %v3791 = vsel %vm3425, %v3790, %v3717
        %v3792 = vrot.slane %v3401, 6
        %v3793 = vsel %vm3428, %v3792, %v3791
        %v3794 = vrot.slane %v3402, 5
        %v3795 = vsel %vm3431, %v3794, %v3793
        %v3796 = vrot.slane %v3403, 4
        %v3797 = vsel %vm3434, %v3796, %v3795
        %v3798 = vrot.slane %v3404, 3
        %v3799 = vsel %vm3437, %v3798, %v3797
        %v3800 = vrot.slane %v3405, 2
        %v3801 = vsel %vm3440, %v3800, %v3799
        %v3802 = vrot.slane %v3406, 1
        %v3803 = vsel %vm3443, %v3802, %v3801
        %v3804 = vrot.slane %v3408, 7
        %v3805 = vsel %vm3425, %v3804, %v3718
        %v3806 = vrot.slane %v3409, 6
        %v3807 = vsel %vm3428, %v3806, %v3805
        %v3808 = vrot.slane %v3410, 5
        %v3809 = vsel %vm3431, %v3808, %v3807
        %v3810 = vrot.slane %v3411, 4
        %v3811 = vsel %vm3434, %v3810, %v3809
        %v3812 = vrot.slane %v3412, 3
        %v3813 = vsel %vm3437, %v3812, %v3811
        %v3814 = vrot.slane %v3413, 2
        %v3815 = vsel %vm3440, %v3814, %v3813
        %v3816 = vrot.slane %v3414, 1
        %v3817 = vsel %vm3443, %v3816, %v3815
        %v3818 = vrot.slane %v3416, 7
        %v3819 = vsel %vm3425, %v3818, %v3719
        %v3820 = vrot.slane %v3417, 6
        %v3821 = vsel %vm3428, %v3820, %v3819
        %v3822 = vrot.slane %v3418, 5
        %v3823 = vsel %vm3431, %v3822, %v3821
        %v3824 = vrot.slane %v3419, 4
        %v3825 = vsel %vm3434, %v3824, %v3823
        %v3826 = vrot.slane %v3420, 3
        %v3827 = vsel %vm3437, %v3826, %v3825
        %v3828 = vrot.slane %v3421, 2
        %v3829 = vsel %vm3440, %v3828, %v3827
        %v3830 = vrot.slane %v3422, 1
        %v3831 = vsel %vm3443, %v3830, %v3829
        %v3832 = vpack.c.b16 %v3747, %v3733
        %v3833 = vpack.c.b16 %v3775, %v3761
        %v3834 = vpack.c.b16 %v3803, %v3789
        %v3835 = vpack.c.b16 %v3831, %v3817
        %v3856 = vunpack.c.l.b16 %v3255
        %v3857 = vunpack.c.h.b16 %v3255
        %v3858 = vunpack.c.l.b16 %v3256
        %v3859 = vunpack.c.h.b16 %v3256
        %v3860 = vunpack.c.l.b16 %v3257
        %v3861 = vunpack.c.h.b16 %v3257
        %v3862 = vunpack.c.l.b16 %v3258
        %v3863 = vunpack.c.h.b16 %v3258
        %v3864 = vunpack.c.l.b16 %v3259
        %v3865 = vunpack.c.h.b16 %v3259
        %v3866 = vunpack.c.l.b16 %v3260
        %v3867 = vunpack.c.h.b16 %v3260
        %v3868 = vunpack.c.l.b16 %v3261
        %v3869 = vunpack.c.h.b16 %v3261
        %v3870 = vunpack.c.l.b16 %v3262
        %v3871 = vunpack.c.h.b16 %v3262
        %v3872 = vunpack.c.l.b16 %v3263
        %v3873 = vunpack.c.h.b16 %v3263
        %v3874 = vunpack.c.l.b16 %v3264
        %v3875 = vunpack.c.h.b16 %v3264
        %v3876 = vunpack.c.l.b16 %v3265
        %v3877 = vunpack.c.h.b16 %v3265
        %v3878 = vunpack.c.l.b16 %v3266
        %v3879 = vunpack.c.h.b16 %v3266
        %v3880 = vunpack.c.l.b16 %v3267
        %v3881 = vunpack.c.h.b16 %v3267
        %v3882 = vunpack.c.l.b16 %v3268
        %v3883 = vunpack.c.h.b16 %v3268
        %v3884 = vunpack.c.l.b16 %v3269
        %v3885 = vunpack.c.h.b16 %v3269
        %v3886 = vunpack.c.l.b16 %v3270
        %v3887 = vunpack.c.h.b16 %v3270
        %v3888 = vpack.c.b16 %v3858, %v3856
        %v3889 = vpack.c.b16 %v3859, %v3857
        %v3890 = vpack.c.b16 %v3862, %v3860
        %v3891 = vpack.c.b16 %v3863, %v3861
        %v3892 = vpack.c.b16 %v3866, %v3864
        %v3893 = vpack.c.b16 %v3867, %v3865
        %v3894 = vpack.c.b16 %v3870, %v3868
        %v3895 = vpack.c.b16 %v3871, %v3869
        %v3896 = vpack.c.b16 %v3874, %v3872
        %v3897 = vpack.c.b16 %v3875, %v3873
        %v3898 = vpack.c.b16 %v3878, %v3876
        %v3899 = vpack.c.b16 %v3879, %v3877
        %v3900 = vpack.c.b16 %v3882, %v3880
        %v3901 = vpack.c.b16 %v3883, %v3881
        %v3902 = vpack.c.b16 %v3886, %v3884
        %v3903 = vpack.c.b16 %v3887, %v3885
        %3920 = vmatprep.subr.bf16.mxu0 %v3889
        %3921 = vmatpush1.bf16.msra.mxu0 %v3888
        %3922 = vmatprep.subr.bf16.mxu0 %v3891
        %3923 = vmatpush1.bf16.msra.mxu0 %v3890
        %3924 = vmatprep.subr.bf16.mxu0 %v3893
        %3925 = vmatpush1.bf16.msra.mxu0 %v3892
        %3926 = vmatprep.subr.bf16.mxu0 %v3895
        %3927 = vmatpush1.bf16.msra.mxu0 %v3894
        %3928 = vmatprep.subr.bf16.mxu0 %v3897
        %3929 = vmatpush1.bf16.msra.mxu0 %v3896
        %3930 = vmatprep.subr.bf16.mxu0 %v3899
        %3931 = vmatpush1.bf16.msra.mxu0 %v3898
        %3932 = vmatprep.subr.bf16.mxu0 %v3901
        %3933 = vmatpush1.bf16.msra.mxu0 %v3900
        %3934 = vmatprep.subr.bf16.mxu0 %v3903
        %3935 = vmatpush1.bf16.msra.mxu0 %v3902
        %3936 = vmatprep.subr.bf16.mxu0 0
        %3937 = vmatpush1.bf16.msra.mxu0 0
        %3938 = vmatprep.subr.bf16.mxu0 0
        %3939 = vmatpush1.bf16.msra.mxu0 0
        %3940 = vmatprep.subr.bf16.mxu0 0
        %3941 = vmatpush1.bf16.msra.mxu0 0
        %3942 = vmatprep.subr.bf16.mxu0 0
        %3943 = vmatpush1.bf16.msra.mxu0 0
        %3944 = vmatprep.subr.bf16.mxu0 0
        %3945 = vmatpush1.bf16.msra.mxu0 0
        %3946 = vmatprep.subr.bf16.mxu0 0
        %3947 = vmatpush1.bf16.msra.mxu0 0
        %3948 = vmatprep.subr.bf16.mxu0 0
        %3949 = vmatpush1.bf16.msra.mxu0 0
        %3950 = vmatprep.subr.bf16.mxu0 0
        %3951 = vmatpush1.bf16.msra.mxu0 0
        %3952 = vmatprep.mubr.bf16.mxu0 0
        %3953 = vmatmul.mubr.bf16.gmra.mrb[0].mxu0 %v3832
        %v3954 = vpop.f32.mrb[0].mxu0
        %v3955 = vadd.f32 %v3666, %v3954
        %v3956 = vpop.f32.mrb[0].mxu0
        %v3957 = vadd.f32 %v3668, %v3956
        %v3958 = vpop.f32.mrb[0].mxu0
        %v3959 = vadd.f32 %v3670, %v3958
        %v3960 = vpop.f32.mrb[0].mxu0
        %v3961 = vadd.f32 %v3672, %v3960
        %3962 = vmatprep.mubr.bf16.mxu0 0
        %3963 = vmatmul.mubr.bf16.gmra.mrb[0].mxu0 %v3833
        %v3964 = vpop.f32.mrb[0].mxu0
        %v3965 = vadd.f32 %v3676, %v3964
        %v3966 = vpop.f32.mrb[0].mxu0
        %v3967 = vadd.f32 %v3678, %v3966
        %v3968 = vpop.f32.mrb[0].mxu0
        %v3969 = vadd.f32 %v3680, %v3968
        %v3970 = vpop.f32.mrb[0].mxu0
        %v3971 = vadd.f32 %v3682, %v3970
        %3972 = vmatprep.mubr.bf16.mxu0 0
        %3973 = vmatmul.mubr.bf16.gmra.mrb[0].mxu0 %v3834
        %v3974 = vpop.f32.mrb[0].mxu0
        %v3975 = vadd.f32 %v3686, %v3974
        %v3976 = vpop.f32.mrb[0].mxu0
        %v3977 = vadd.f32 %v3688, %v3976
        %v3978 = vpop.f32.mrb[0].mxu0
        %v3979 = vadd.f32 %v3690, %v3978
        %v3980 = vpop.f32.mrb[0].mxu0
        %v3981 = vadd.f32 %v3692, %v3980
        %3982 = vmatprep.mubr.bf16.mxu0 0
        %3983 = vmatmul.mubr.bf16.gmra.mrb[0].mxu0 %v3835
        %v3984 = vpop.f32.mrb[0].mxu0
        %v3985 = vadd.f32 %v3696, %v3984
        %v3986 = vpop.f32.mrb[0].mxu0
        %v3987 = vadd.f32 %v3698, %v3986
        %v3988 = vpop.f32.mrb[0].mxu0
        %v3989 = vadd.f32 %v3700, %v3988
        %v3990 = vpop.f32.mrb[0].mxu0
        %v3991 = vadd.f32 %v3702, %v3990
        %3992 = vdwg.mxu0
        %v3993 = vpack.c.bf16 %v3104, %v3104
        %v3994 = vpack.c.bf16 %v3116, %v3116
        %v3995 = vpack.c.bf16 %v3128, %v3128
        %v3996 = vpack.c.bf16 %v3140, %v3140
        %v3997 = vpack.c.bf16 %v3152, %v3152
        %v3998 = vpack.c.bf16 %v3164, %v3164
        %v3999 = vpack.c.bf16 %v3176, %v3176
        %v4000 = vpack.c.bf16 %v3188, %v3188
        %s4001 = scalar_lea.vmem %s3, 256
        %v4002 = vld [vmem:[%s4001] sm:$0xff]
        %v4003 = vld [vmem:[%s4001 + $0x8] sm:$0xff]
        %v4004 = vld [vmem:[%s4001 + $0x10] sm:$0xff]
        %v4005 = vld [vmem:[%s4001 + $0x18] sm:$0xff]
        %v4006 = vld [vmem:[%s4001 + $0x20] sm:$0xff]
        %v4007 = vld [vmem:[%s4001 + $0x28] sm:$0xff]
        %v4008 = vld [vmem:[%s4001 + $0x30] sm:$0xff]
        %v4009 = vld [vmem:[%s4001 + $0x38] sm:$0xff]
        %v4010 = vld [vmem:[%s4001 + $0x40] sm:$0xff]
        %v4011 = vld [vmem:[%s4001 + $0x48] sm:$0xff]
        %v4012 = vld [vmem:[%s4001 + $0x50] sm:$0xff]
        %v4013 = vld [vmem:[%s4001 + $0x58] sm:$0xff]
        %v4014 = vld [vmem:[%s4001 + $0x60] sm:$0xff]
        %v4015 = vld [vmem:[%s4001 + $0x68] sm:$0xff]
        %v4016 = vld [vmem:[%s4001 + $0x70] sm:$0xff]
        %v4017 = vld [vmem:[%s4001 + $0x78] sm:$0xff]
        %v4026 = vunpack.c.l.b16 %v3993
        %v4027 = vunpack.c.l.b16 %v3994
        %v4028 = vunpack.c.l.b16 %v3995
        %v4029 = vunpack.c.l.b16 %v3996
        %v4030 = vunpack.c.l.b16 %v3997
        %v4031 = vunpack.c.l.b16 %v3998
        %v4032 = vunpack.c.l.b16 %v3999
        %v4033 = vunpack.c.l.b16 %v4000
        %v4034 = vrot.slane %v3362, 7
        %v4035 = vsel %vm3425, %v4034, %v3361
        %v4036 = vrot.slane %v3363, 6
        %v4037 = vsel %vm3428, %v4036, %v4035
        %v4038 = vrot.slane %v3364, 5
        %v4039 = vsel %vm3431, %v4038, %v4037
        %v4040 = vrot.slane %v3365, 4
        %v4041 = vsel %vm3434, %v4040, %v4039
        %v4042 = vrot.slane %v3366, 3
        %v4043 = vsel %vm3437, %v4042, %v4041
        %v4044 = vrot.slane %v3367, 2
        %v4045 = vsel %vm3440, %v4044, %v4043
        %v4046 = vrot.slane %v4026, 1
        %v4047 = vsel %vm3443, %v4046, %v4045
        %v4048 = vrot.slane %v3370, 7
        %v4049 = vsel %vm3425, %v4048, %v3369
        %v4050 = vrot.slane %v3371, 6
        %v4051 = vsel %vm3428, %v4050, %v4049
        %v4052 = vrot.slane %v3372, 5
        %v4053 = vsel %vm3431, %v4052, %v4051
        %v4054 = vrot.slane %v3373, 4
        %v4055 = vsel %vm3434, %v4054, %v4053
        %v4056 = vrot.slane %v3374, 3
        %v4057 = vsel %vm3437, %v4056, %v4055
        %v4058 = vrot.slane %v3375, 2
        %v4059 = vsel %vm3440, %v4058, %v4057
        %v4060 = vrot.slane %v4027, 1
        %v4061 = vsel %vm3443, %v4060, %v4059
        %v4062 = vrot.slane %v3378, 7
        %v4063 = vsel %vm3425, %v4062, %v3377
        %v4064 = vrot.slane %v3379, 6
        %v4065 = vsel %vm3428, %v4064, %v4063
        %v4066 = vrot.slane %v3380, 5
        %v4067 = vsel %vm3431, %v4066, %v4065
        %v4068 = vrot.slane %v3381, 4
        %v4069 = vsel %vm3434, %v4068, %v4067
        %v4070 = vrot.slane %v3382, 3
        %v4071 = vsel %vm3437, %v4070, %v4069
        %v4072 = vrot.slane %v3383, 2
        %v4073 = vsel %vm3440, %v4072, %v4071
        %v4074 = vrot.slane %v4028, 1
        %v4075 = vsel %vm3443, %v4074, %v4073
        %v4076 = vrot.slane %v3386, 7
        %v4077 = vsel %vm3425, %v4076, %v3385
        %v4078 = vrot.slane %v3387, 6
        %v4079 = vsel %vm3428, %v4078, %v4077
        %v4080 = vrot.slane %v3388, 5
        %v4081 = vsel %vm3431, %v4080, %v4079
        %v4082 = vrot.slane %v3389, 4
        %v4083 = vsel %vm3434, %v4082, %v4081
        %v4084 = vrot.slane %v3390, 3
        %v4085 = vsel %vm3437, %v4084, %v4083
        %v4086 = vrot.slane %v3391, 2
        %v4087 = vsel %vm3440, %v4086, %v4085
        %v4088 = vrot.slane %v4029, 1
        %v4089 = vsel %vm3443, %v4088, %v4087
        %v4090 = vrot.slane %v3394, 7
        %v4091 = vsel %vm3425, %v4090, %v3393
        %v4092 = vrot.slane %v3395, 6
        %v4093 = vsel %vm3428, %v4092, %v4091
        %v4094 = vrot.slane %v3396, 5
        %v4095 = vsel %vm3431, %v4094, %v4093
        %v4096 = vrot.slane %v3397, 4
        %v4097 = vsel %vm3434, %v4096, %v4095
        %v4098 = vrot.slane %v3398, 3
        %v4099 = vsel %vm3437, %v4098, %v4097
        %v4100 = vrot.slane %v3399, 2
        %v4101 = vsel %vm3440, %v4100, %v4099
        %v4102 = vrot.slane %v4030, 1
        %v4103 = vsel %vm3443, %v4102, %v4101
        %v4104 = vrot.slane %v3402, 7
        %v4105 = vsel %vm3425, %v4104, %v3401
        %v4106 = vrot.slane %v3403, 6
        %v4107 = vsel %vm3428, %v4106, %v4105
        %v4108 = vrot.slane %v3404, 5
        %v4109 = vsel %vm3431, %v4108, %v4107
        %v4110 = vrot.slane %v3405, 4
        %v4111 = vsel %vm3434, %v4110, %v4109
        %v4112 = vrot.slane %v3406, 3
        %v4113 = vsel %vm3437, %v4112, %v4111
        %v4114 = vrot.slane %v3407, 2
        %v4115 = vsel %vm3440, %v4114, %v4113
        %v4116 = vrot.slane %v4031, 1
        %v4117 = vsel %vm3443, %v4116, %v4115
        %v4118 = vrot.slane %v3410, 7
        %v4119 = vsel %vm3425, %v4118, %v3409
        %v4120 = vrot.slane %v3411, 6
        %v4121 = vsel %vm3428, %v4120, %v4119
        %v4122 = vrot.slane %v3412, 5
        %v4123 = vsel %vm3431, %v4122, %v4121
        %v4124 = vrot.slane %v3413, 4
        %v4125 = vsel %vm3434, %v4124, %v4123
        %v4126 = vrot.slane %v3414, 3
        %v4127 = vsel %vm3437, %v4126, %v4125
        %v4128 = vrot.slane %v3415, 2
        %v4129 = vsel %vm3440, %v4128, %v4127
        %v4130 = vrot.slane %v4032, 1
        %v4131 = vsel %vm3443, %v4130, %v4129
        %v4132 = vrot.slane %v3418, 7
        %v4133 = vsel %vm3425, %v4132, %v3417
        %v4134 = vrot.slane %v3419, 6
        %v4135 = vsel %vm3428, %v4134, %v4133
        %v4136 = vrot.slane %v3420, 5
        %v4137 = vsel %vm3431, %v4136, %v4135
        %v4138 = vrot.slane %v3421, 4
        %v4139 = vsel %vm3434, %v4138, %v4137
        %v4140 = vrot.slane %v3422, 3
        %v4141 = vsel %vm3437, %v4140, %v4139
        %v4142 = vrot.slane %v3423, 2
        %v4143 = vsel %vm3440, %v4142, %v4141
        %v4144 = vrot.slane %v4033, 1
        %v4145 = vsel %vm3443, %v4144, %v4143
        %v4146 = vpack.c.b16 %v4061, %v4047
        %v4147 = vpack.c.b16 %v4089, %v4075
        %v4148 = vpack.c.b16 %v4117, %v4103
        %v4149 = vpack.c.b16 %v4145, %v4131
        %v4170 = vunpack.c.l.b16 %v4002
        %v4171 = vunpack.c.h.b16 %v4002
        %v4172 = vunpack.c.l.b16 %v4003
        %v4173 = vunpack.c.h.b16 %v4003
        %v4174 = vunpack.c.l.b16 %v4004
        %v4175 = vunpack.c.h.b16 %v4004
        %v4176 = vunpack.c.l.b16 %v4005
        %v4177 = vunpack.c.h.b16 %v4005
        %v4178 = vunpack.c.l.b16 %v4006
        %v4179 = vunpack.c.h.b16 %v4006
        %v4180 = vunpack.c.l.b16 %v4007
        %v4181 = vunpack.c.h.b16 %v4007
        %v4182 = vunpack.c.l.b16 %v4008
        %v4183 = vunpack.c.h.b16 %v4008
        %v4184 = vunpack.c.l.b16 %v4009
        %v4185 = vunpack.c.h.b16 %v4009
        %v4186 = vunpack.c.l.b16 %v4010
        %v4187 = vunpack.c.h.b16 %v4010
        %v4188 = vunpack.c.l.b16 %v4011
        %v4189 = vunpack.c.h.b16 %v4011
        %v4190 = vunpack.c.l.b16 %v4012
        %v4191 = vunpack.c.h.b16 %v4012
        %v4192 = vunpack.c.l.b16 %v4013
        %v4193 = vunpack.c.h.b16 %v4013
        %v4194 = vunpack.c.l.b16 %v4014
        %v4195 = vunpack.c.h.b16 %v4014
        %v4196 = vunpack.c.l.b16 %v4015
        %v4197 = vunpack.c.h.b16 %v4015
        %v4198 = vunpack.c.l.b16 %v4016
        %v4199 = vunpack.c.h.b16 %v4016
        %v4200 = vunpack.c.l.b16 %v4017
        %v4201 = vunpack.c.h.b16 %v4017
        %v4202 = vpack.c.b16 %v4172, %v4170
        %v4203 = vpack.c.b16 %v4173, %v4171
        %v4204 = vpack.c.b16 %v4176, %v4174
        %v4205 = vpack.c.b16 %v4177, %v4175
        %v4206 = vpack.c.b16 %v4180, %v4178
        %v4207 = vpack.c.b16 %v4181, %v4179
        %v4208 = vpack.c.b16 %v4184, %v4182
        %v4209 = vpack.c.b16 %v4185, %v4183
        %v4210 = vpack.c.b16 %v4188, %v4186
        %v4211 = vpack.c.b16 %v4189, %v4187
        %v4212 = vpack.c.b16 %v4192, %v4190
        %v4213 = vpack.c.b16 %v4193, %v4191
        %v4214 = vpack.c.b16 %v4196, %v4194
        %v4215 = vpack.c.b16 %v4197, %v4195
        %v4216 = vpack.c.b16 %v4200, %v4198
        %v4217 = vpack.c.b16 %v4201, %v4199
        %4234 = vmatprep.subr.bf16.mxu0 %v4203
        %4235 = vmatpush1.bf16.msra.mxu0 %v4202
        %4236 = vmatprep.subr.bf16.mxu0 %v4205
        %4237 = vmatpush1.bf16.msra.mxu0 %v4204
        %4238 = vmatprep.subr.bf16.mxu0 %v4207
        %4239 = vmatpush1.bf16.msra.mxu0 %v4206
        %4240 = vmatprep.subr.bf16.mxu0 %v4209
        %4241 = vmatpush1.bf16.msra.mxu0 %v4208
        %4242 = vmatprep.subr.bf16.mxu0 %v4211
        %4243 = vmatpush1.bf16.msra.mxu0 %v4210
        %4244 = vmatprep.subr.bf16.mxu0 %v4213
        %4245 = vmatpush1.bf16.msra.mxu0 %v4212
        %4246 = vmatprep.subr.bf16.mxu0 %v4215
        %4247 = vmatpush1.bf16.msra.mxu0 %v4214
        %4248 = vmatprep.subr.bf16.mxu0 %v4217
        %4249 = vmatpush1.bf16.msra.mxu0 %v4216
        %4250 = vmatprep.subr.bf16.mxu0 0
        %4251 = vmatpush1.bf16.msra.mxu0 0
        %4252 = vmatprep.subr.bf16.mxu0 0
        %4253 = vmatpush1.bf16.msra.mxu0 0
        %4254 = vmatprep.subr.bf16.mxu0 0
        %4255 = vmatpush1.bf16.msra.mxu0 0
        %4256 = vmatprep.subr.bf16.mxu0 0
        %4257 = vmatpush1.bf16.msra.mxu0 0
        %4258 = vmatprep.subr.bf16.mxu0 0
        %4259 = vmatpush1.bf16.msra.mxu0 0
        %4260 = vmatprep.subr.bf16.mxu0 0
        %4261 = vmatpush1.bf16.msra.mxu0 0
        %4262 = vmatprep.subr.bf16.mxu0 0
        %4263 = vmatpush1.bf16.msra.mxu0 0
        %4264 = vmatprep.subr.bf16.mxu0 0
        %4265 = vmatpush1.bf16.msra.mxu0 0
        %4266 = vmatprep.mubr.bf16.mxu0 0
        %4267 = vmatmul.mubr.bf16.gmra.mrb[0].mxu0 %v4146
        %v4268 = vpop.f32.mrb[0].mxu0
        %v4269 = vadd.f32 0.0, %v4268
        %v4270 = vpop.f32.mrb[0].mxu0
        %v4271 = vadd.f32 0.0, %v4270
        %v4272 = vpop.f32.mrb[0].mxu0
        %v4273 = vadd.f32 0.0, %v4272
        %v4274 = vpop.f32.mrb[0].mxu0
        %v4275 = vadd.f32 0.0, %v4274
        %4276 = vmatprep.mubr.bf16.mxu0 0
        %4277 = vmatmul.mubr.bf16.gmra.mrb[0].mxu0 %v4147
        %v4278 = vpop.f32.mrb[0].mxu0
        %v4279 = vadd.f32 0.0, %v4278
        %v4280 = vpop.f32.mrb[0].mxu0
        %v4281 = vadd.f32 0.0, %v4280
        %v4282 = vpop.f32.mrb[0].mxu0
        %v4283 = vadd.f32 0.0, %v4282
        %v4284 = vpop.f32.mrb[0].mxu0
        %v4285 = vadd.f32 0.0, %v4284
        %4286 = vmatprep.mubr.bf16.mxu0 0
        %4287 = vmatmul.mubr.bf16.gmra.mrb[0].mxu0 %v4148
        %v4288 = vpop.f32.mrb[0].mxu0
        %v4289 = vadd.f32 0.0, %v4288
        %v4290 = vpop.f32.mrb[0].mxu0
        %v4291 = vadd.f32 0.0, %v4290
        %v4292 = vpop.f32.mrb[0].mxu0
        %v4293 = vadd.f32 0.0, %v4292
        %v4294 = vpop.f32.mrb[0].mxu0
        %v4295 = vadd.f32 0.0, %v4294
        %4296 = vmatprep.mubr.bf16.mxu0 0
        %4297 = vmatmul.mubr.bf16.gmra.mrb[0].mxu0 %v4149
        %v4298 = vpop.f32.mrb[0].mxu0
        %v4299 = vadd.f32 0.0, %v4298
        %v4300 = vpop.f32.mrb[0].mxu0
        %v4301 = vadd.f32 0.0, %v4300
        %v4302 = vpop.f32.mrb[0].mxu0
        %v4303 = vadd.f32 0.0, %v4302
        %v4304 = vpop.f32.mrb[0].mxu0
        %v4305 = vadd.f32 0.0, %v4304
        %4306 = vdwg.mxu0
        %v4307 = vadd.f32 %v3955, %v4269
        %v4308 = vadd.f32 %v3957, %v4271
        %v4309 = vadd.f32 %v3959, %v4273
        %v4310 = vadd.f32 %v3961, %v4275
        %v4311 = vadd.f32 %v3965, %v4279
        %v4312 = vadd.f32 %v3967, %v4281
        %v4313 = vadd.f32 %v3969, %v4283
        %v4314 = vadd.f32 %v3971, %v4285
        %v4315 = vadd.f32 %v3975, %v4289
        %v4316 = vadd.f32 %v3977, %v4291
        %v4317 = vadd.f32 %v3979, %v4293
        %v4318 = vadd.f32 %v3981, %v4295
        %v4319 = vadd.f32 %v3985, %v4299
        %v4320 = vadd.f32 %v3987, %v4301
        %v4321 = vadd.f32 %v3989, %v4303
        %v4322 = vadd.f32 %v3991, %v4305
        %v4323 = vpack.c.bf16 %v3105, %v3105
        %v4324 = vpack.c.bf16 %v3117, %v3117
        %v4325 = vpack.c.bf16 %v3129, %v3129
        %v4326 = vpack.c.bf16 %v3141, %v3141
        %v4327 = vpack.c.bf16 %v3153, %v3153
        %v4328 = vpack.c.bf16 %v3165, %v3165
        %v4329 = vpack.c.bf16 %v3177, %v3177
        %v4330 = vpack.c.bf16 %v3189, %v3189
        %s4331 = scalar_lea.vmem %s3, 384
        %v4332 = vld [vmem:[%s4331] sm:$0xff]
        %v4333 = vld [vmem:[%s4331 + $0x8] sm:$0xff]
        %v4334 = vld [vmem:[%s4331 + $0x10] sm:$0xff]
        %v4335 = vld [vmem:[%s4331 + $0x18] sm:$0xff]
        %v4336 = vld [vmem:[%s4331 + $0x20] sm:$0xff]
        %v4337 = vld [vmem:[%s4331 + $0x28] sm:$0xff]
        %v4338 = vld [vmem:[%s4331 + $0x30] sm:$0xff]
        %v4339 = vld [vmem:[%s4331 + $0x38] sm:$0xff]
        %v4340 = vld [vmem:[%s4331 + $0x40] sm:$0xff]
        %v4341 = vld [vmem:[%s4331 + $0x48] sm:$0xff]
        %v4342 = vld [vmem:[%s4331 + $0x50] sm:$0xff]
        %v4343 = vld [vmem:[%s4331 + $0x58] sm:$0xff]
        %v4344 = vld [vmem:[%s4331 + $0x60] sm:$0xff]
        %v4345 = vld [vmem:[%s4331 + $0x68] sm:$0xff]
        %v4346 = vld [vmem:[%s4331 + $0x70] sm:$0xff]
        %v4347 = vld [vmem:[%s4331 + $0x78] sm:$0xff]
        %v4356 = vunpack.c.l.b16 %v4323
        %v4357 = vunpack.c.l.b16 %v4324
        %v4358 = vunpack.c.l.b16 %v4325
        %v4359 = vunpack.c.l.b16 %v4326
        %v4360 = vunpack.c.l.b16 %v4327
        %v4361 = vunpack.c.l.b16 %v4328
        %v4362 = vunpack.c.l.b16 %v4329
        %v4363 = vunpack.c.l.b16 %v4330
        %v4364 = vrot.slane %v3363, 7
        %v4365 = vsel %vm3425, %v4364, %v3362
        %v4366 = vrot.slane %v3364, 6
        %v4367 = vsel %vm3428, %v4366, %v4365
        %v4368 = vrot.slane %v3365, 5
        %v4369 = vsel %vm3431, %v4368, %v4367
        %v4370 = vrot.slane %v3366, 4
        %v4371 = vsel %vm3434, %v4370, %v4369
        %v4372 = vrot.slane %v3367, 3
        %v4373 = vsel %vm3437, %v4372, %v4371
        %v4374 = vrot.slane %v4026, 2
        %v4375 = vsel %vm3440, %v4374, %v4373
        %v4376 = vrot.slane %v4356, 1
        %v4377 = vsel %vm3443, %v4376, %v4375
        %v4378 = vrot.slane %v3371, 7
        %v4379 = vsel %vm3425, %v4378, %v3370
        %v4380 = vrot.slane %v3372, 6
        %v4381 = vsel %vm3428, %v4380, %v4379
        %v4382 = vrot.slane %v3373, 5
        %v4383 = vsel %vm3431, %v4382, %v4381
        %v4384 = vrot.slane %v3374, 4
        %v4385 = vsel %vm3434, %v4384, %v4383
        %v4386 = vrot.slane %v3375, 3
        %v4387 = vsel %vm3437, %v4386, %v4385
        %v4388 = vrot.slane %v4027, 2
        %v4389 = vsel %vm3440, %v4388, %v4387
        %v4390 = vrot.slane %v4357, 1
        %v4391 = vsel %vm3443, %v4390, %v4389
        %v4392 = vrot.slane %v3379, 7
        %v4393 = vsel %vm3425, %v4392, %v3378
        %v4394 = vrot.slane %v3380, 6
        %v4395 = vsel %vm3428, %v4394, %v4393
        %v4396 = vrot.slane %v3381, 5
        %v4397 = vsel %vm3431, %v4396, %v4395
        %v4398 = vrot.slane %v3382, 4
        %v4399 = vsel %vm3434, %v4398, %v4397
        %v4400 = vrot.slane %v3383, 3
        %v4401 = vsel %vm3437, %v4400, %v4399
        %v4402 = vrot.slane %v4028, 2
        %v4403 = vsel %vm3440, %v4402, %v4401
        %v4404 = vrot.slane %v4358, 1
        %v4405 = vsel %vm3443, %v4404, %v4403
        %v4406 = vrot.slane %v3387, 7
        %v4407 = vsel %vm3425, %v4406, %v3386
        %v4408 = vrot.slane %v3388, 6
        %v4409 = vsel %vm3428, %v4408, %v4407
        %v4410 = vrot.slane %v3389, 5
        %v4411 = vsel %vm3431, %v4410, %v4409
        %v4412 = vrot.slane %v3390, 4
        %v4413 = vsel %vm3434, %v4412, %v4411
        %v4414 = vrot.slane %v3391, 3
        %v4415 = vsel %vm3437, %v4414, %v4413
        %v4416 = vrot.slane %v4029, 2
        %v4417 = vsel %vm3440, %v4416, %v4415
        %v4418 = vrot.slane %v4359, 1
        %v4419 = vsel %vm3443, %v4418, %v4417
        %v4420 = vrot.slane %v3395, 7
        %v4421 = vsel %vm3425, %v4420, %v3394
        %v4422 = vrot.slane %v3396, 6
        %v4423 = vsel %vm3428, %v4422, %v4421
        %v4424 = vrot.slane %v3397, 5
        %v4425 = vsel %vm3431, %v4424, %v4423
        %v4426 = vrot.slane %v3398, 4
        %v4427 = vsel %vm3434, %v4426, %v4425
        %v4428 = vrot.slane %v3399, 3
        %v4429 = vsel %vm3437, %v4428, %v4427
        %v4430 = vrot.slane %v4030, 2
        %v4431 = vsel %vm3440, %v4430, %v4429
        %v4432 = vrot.slane %v4360, 1
        %v4433 = vsel %vm3443, %v4432, %v4431
        %v4434 = vrot.slane %v3403, 7
        %v4435 = vsel %vm3425, %v4434, %v3402
        %v4436 = vrot.slane %v3404, 6
        %v4437 = vsel %vm3428, %v4436, %v4435
        %v4438 = vrot.slane %v3405, 5
        %v4439 = vsel %vm3431, %v4438, %v4437
        %v4440 = vrot.slane %v3406, 4
        %v4441 = vsel %vm3434, %v4440, %v4439
        %v4442 = vrot.slane %v3407, 3
        %v4443 = vsel %vm3437, %v4442, %v4441
        %v4444 = vrot.slane %v4031, 2
        %v4445 = vsel %vm3440, %v4444, %v4443
        %v4446 = vrot.slane %v4361, 1
        %v4447 = vsel %vm3443, %v4446, %v4445
        %v4448 = vrot.slane %v3411, 7
        %v4449 = vsel %vm3425, %v4448, %v3410
        %v4450 = vrot.slane %v3412, 6
        %v4451 = vsel %vm3428, %v4450, %v4449
        %v4452 = vrot.slane %v3413, 5
        %v4453 = vsel %vm3431, %v4452, %v4451
        %v4454 = vrot.slane %v3414, 4
        %v4455 = vsel %vm3434, %v4454, %v4453
        %v4456 = vrot.slane %v3415, 3
        %v4457 = vsel %vm3437, %v4456, %v4455
        %v4458 = vrot.slane %v4032, 2
        %v4459 = vsel %vm3440, %v4458, %v4457
        %v4460 = vrot.slane %v4362, 1
        %v4461 = vsel %vm3443, %v4460, %v4459
        %v4462 = vrot.slane %v3419, 7
        %v4463 = vsel %vm3425, %v4462, %v3418
        %v4464 = vrot.slane %v3420, 6
        %v4465 = vsel %vm3428, %v4464, %v4463
        %v4466 = vrot.slane %v3421, 5
        %v4467 = vsel %vm3431, %v4466, %v4465
        %v4468 = vrot.slane %v3422, 4
        %v4469 = vsel %vm3434, %v4468, %v4467
        %v4470 = vrot.slane %v3423, 3
        %v4471 = vsel %vm3437, %v4470, %v4469
        %v4472 = vrot.slane %v4033, 2
        %v4473 = vsel %vm3440, %v4472, %v4471
        %v4474 = vrot.slane %v4363, 1
        %v4475 = vsel %vm3443, %v4474, %v4473
        %v4476 = vpack.c.b16 %v4391, %v4377
        %v4477 = vpack.c.b16 %v4419, %v4405
        %v4478 = vpack.c.b16 %v4447, %v4433
        %v4479 = vpack.c.b16 %v4475, %v4461
        %v4500 = vunpack.c.l.b16 %v4332
        %v4501 = vunpack.c.h.b16 %v4332
        %v4502 = vunpack.c.l.b16 %v4333
        %v4503 = vunpack.c.h.b16 %v4333
        %v4504 = vunpack.c.l.b16 %v4334
        %v4505 = vunpack.c.h.b16 %v4334
        %v4506 = vunpack.c.l.b16 %v4335
        %v4507 = vunpack.c.h.b16 %v4335
        %v4508 = vunpack.c.l.b16 %v4336
        %v4509 = vunpack.c.h.b16 %v4336
        %v4510 = vunpack.c.l.b16 %v4337
        %v4511 = vunpack.c.h.b16 %v4337
        %v4512 = vunpack.c.l.b16 %v4338
        %v4513 = vunpack.c.h.b16 %v4338
        %v4514 = vunpack.c.l.b16 %v4339
        %v4515 = vunpack.c.h.b16 %v4339
        %v4516 = vunpack.c.l.b16 %v4340
        %v4517 = vunpack.c.h.b16 %v4340
        %v4518 = vunpack.c.l.b16 %v4341
        %v4519 = vunpack.c.h.b16 %v4341
        %v4520 = vunpack.c.l.b16 %v4342
        %v4521 = vunpack.c.h.b16 %v4342
        %v4522 = vunpack.c.l.b16 %v4343
        %v4523 = vunpack.c.h.b16 %v4343
        %v4524 = vunpack.c.l.b16 %v4344
        %v4525 = vunpack.c.h.b16 %v4344
        %v4526 = vunpack.c.l.b16 %v4345
        %v4527 = vunpack.c.h.b16 %v4345
        %v4528 = vunpack.c.l.b16 %v4346
        %v4529 = vunpack.c.h.b16 %v4346
        %v4530 = vunpack.c.l.b16 %v4347
        %v4531 = vunpack.c.h.b16 %v4347
        %v4532 = vpack.c.b16 %v4502, %v4500
        %v4533 = vpack.c.b16 %v4503, %v4501
        %v4534 = vpack.c.b16 %v4506, %v4504
        %v4535 = vpack.c.b16 %v4507, %v4505
        %v4536 = vpack.c.b16 %v4510, %v4508
        %v4537 = vpack.c.b16 %v4511, %v4509
        %v4538 = vpack.c.b16 %v4514, %v4512
        %v4539 = vpack.c.b16 %v4515, %v4513
        %v4540 = vpack.c.b16 %v4518, %v4516
        %v4541 = vpack.c.b16 %v4519, %v4517
        %v4542 = vpack.c.b16 %v4522, %v4520
        %v4543 = vpack.c.b16 %v4523, %v4521
        %v4544 = vpack.c.b16 %v4526, %v4524
        %v4545 = vpack.c.b16 %v4527, %v4525
        %v4546 = vpack.c.b16 %v4530, %v4528
        %v4547 = vpack.c.b16 %v4531, %v4529
        %4564 = vmatprep.subr.bf16.mxu0 %v4533
        %4565 = vmatpush1.bf16.msra.mxu0 %v4532
        %4566 = vmatprep.subr.bf16.mxu0 %v4535
        %4567 = vmatpush1.bf16.msra.mxu0 %v4534
        %4568 = vmatprep.subr.bf16.mxu0 %v4537
        %4569 = vmatpush1.bf16.msra.mxu0 %v4536
        %4570 = vmatprep.subr.bf16.mxu0 %v4539
        %4571 = vmatpush1.bf16.msra.mxu0 %v4538
        %4572 = vmatprep.subr.bf16.mxu0 %v4541
        %4573 = vmatpush1.bf16.msra.mxu0 %v4540
        %4574 = vmatprep.subr.bf16.mxu0 %v4543
        %4575 = vmatpush1.bf16.msra.mxu0 %v4542
        %4576 = vmatprep.subr.bf16.mxu0 %v4545
        %4577 = vmatpush1.bf16.msra.mxu0 %v4544
        %4578 = vmatprep.subr.bf16.mxu0 %v4547
        %4579 = vmatpush1.bf16.msra.mxu0 %v4546
        %4580 = vmatprep.subr.bf16.mxu0 0
        %4581 = vmatpush1.bf16.msra.mxu0 0
        %4582 = vmatprep.subr.bf16.mxu0 0
        %4583 = vmatpush1.bf16.msra.mxu0 0
        %4584 = vmatprep.subr.bf16.mxu0 0
        %4585 = vmatpush1.bf16.msra.mxu0 0
        %4586 = vmatprep.subr.bf16.mxu0 0
        %4587 = vmatpush1.bf16.msra.mxu0 0
        %4588 = vmatprep.subr.bf16.mxu0 0
        %4589 = vmatpush1.bf16.msra.mxu0 0
        %4590 = vmatprep.subr.bf16.mxu0 0
        %4591 = vmatpush1.bf16.msra.mxu0 0
        %4592 = vmatprep.subr.bf16.mxu0 0
        %4593 = vmatpush1.bf16.msra.mxu0 0
        %4594 = vmatprep.subr.bf16.mxu0 0
        %4595 = vmatpush1.bf16.msra.mxu0 0
        %4596 = vmatprep.mubr.bf16.mxu0 0
        %4597 = vmatmul.mubr.bf16.gmra.mrb[0].mxu0 %v4476
        %v4598 = vpop.f32.mrb[0].mxu0
        %v4599 = vadd.f32 0.0, %v4598
        %v4600 = vpop.f32.mrb[0].mxu0
        %v4601 = vadd.f32 0.0, %v4600
        %v4602 = vpop.f32.mrb[0].mxu0
        %v4603 = vadd.f32 0.0, %v4602
        %v4604 = vpop.f32.mrb[0].mxu0
        %v4605 = vadd.f32 0.0, %v4604
        %4606 = vmatprep.mubr.bf16.mxu0 0
        %4607 = vmatmul.mubr.bf16.gmra.mrb[0].mxu0 %v4477
        %v4608 = vpop.f32.mrb[0].mxu0
        %v4609 = vadd.f32 0.0, %v4608
        %v4610 = vpop.f32.mrb[0].mxu0
        %v4611 = vadd.f32 0.0, %v4610
        %v4612 = vpop.f32.mrb[0].mxu0
        %v4613 = vadd.f32 0.0, %v4612
        %v4614 = vpop.f32.mrb[0].mxu0
        %v4615 = vadd.f32 0.0, %v4614
        %4616 = vmatprep.mubr.bf16.mxu0 0
        %4617 = vmatmul.mubr.bf16.gmra.mrb[0].mxu0 %v4478
        %v4618 = vpop.f32.mrb[0].mxu0
        %v4619 = vadd.f32 0.0, %v4618
        %v4620 = vpop.f32.mrb[0].mxu0
        %v4621 = vadd.f32 0.0, %v4620
        %v4622 = vpop.f32.mrb[0].mxu0
        %v4623 = vadd.f32 0.0, %v4622
        %v4624 = vpop.f32.mrb[0].mxu0
        %v4625 = vadd.f32 0.0, %v4624
        %4626 = vmatprep.mubr.bf16.mxu0 0
        %4627 = vmatmul.mubr.bf16.gmra.mrb[0].mxu0 %v4479
        %v4628 = vpop.f32.mrb[0].mxu0
        %v4629 = vadd.f32 0.0, %v4628
        %v4630 = vpop.f32.mrb[0].mxu0
        %v4631 = vadd.f32 0.0, %v4630
        %v4632 = vpop.f32.mrb[0].mxu0
        %v4633 = vadd.f32 0.0, %v4632
        %v4634 = vpop.f32.mrb[0].mxu0
        %v4635 = vadd.f32 0.0, %v4634
        %4636 = vdwg.mxu0
        %v4637 = vadd.f32 %v4307, %v4599
        %v4638 = vadd.f32 %v4308, %v4601
        %v4639 = vadd.f32 %v4309, %v4603
        %v4640 = vadd.f32 %v4310, %v4605
        %v4641 = vadd.f32 %v4311, %v4609
        %v4642 = vadd.f32 %v4312, %v4611
        %v4643 = vadd.f32 %v4313, %v4613
        %v4644 = vadd.f32 %v4314, %v4615
        %v4645 = vadd.f32 %v4315, %v4619
        %v4646 = vadd.f32 %v4316, %v4621
        %v4647 = vadd.f32 %v4317, %v4623
        %v4648 = vadd.f32 %v4318, %v4625
        %v4649 = vadd.f32 %v4319, %v4629
        %v4650 = vadd.f32 %v4320, %v4631
        %v4651 = vadd.f32 %v4321, %v4633
        %v4652 = vadd.f32 %v4322, %v4635
        %v4653 = vpack.c.bf16 %v3106, %v3106
        %v4654 = vpack.c.bf16 %v3118, %v3118
        %v4655 = vpack.c.bf16 %v3130, %v3130
        %v4656 = vpack.c.bf16 %v3142, %v3142
        %v4657 = vpack.c.bf16 %v3154, %v3154
        %v4658 = vpack.c.bf16 %v3166, %v3166
        %v4659 = vpack.c.bf16 %v3178, %v3178
        %v4660 = vpack.c.bf16 %v3190, %v3190
        %s4661 = scalar_lea.vmem %s3, 512
        %v4662 = vld [vmem:[%s4661] sm:$0xff]
        %v4663 = vld [vmem:[%s4661 + $0x8] sm:$0xff]
        %v4664 = vld [vmem:[%s4661 + $0x10] sm:$0xff]
        %v4665 = vld [vmem:[%s4661 + $0x18] sm:$0xff]
        %v4666 = vld [vmem:[%s4661 + $0x20] sm:$0xff]
        %v4667 = vld [vmem:[%s4661 + $0x28] sm:$0xff]
        %v4668 = vld [vmem:[%s4661 + $0x30] sm:$0xff]
        %v4669 = vld [vmem:[%s4661 + $0x38] sm:$0xff]
        %v4670 = vld [vmem:[%s4661 + $0x40] sm:$0xff]
        %v4671 = vld [vmem:[%s4661 + $0x48] sm:$0xff]
        %v4672 = vld [vmem:[%s4661 + $0x50] sm:$0xff]
        %v4673 = vld [vmem:[%s4661 + $0x58] sm:$0xff]
        %v4674 = vld [vmem:[%s4661 + $0x60] sm:$0xff]
        %v4675 = vld [vmem:[%s4661 + $0x68] sm:$0xff]
        %v4676 = vld [vmem:[%s4661 + $0x70] sm:$0xff]
        %v4677 = vld [vmem:[%s4661 + $0x78] sm:$0xff]
        %v4686 = vunpack.c.l.b16 %v4653
        %v4687 = vunpack.c.l.b16 %v4654
        %v4688 = vunpack.c.l.b16 %v4655
        %v4689 = vunpack.c.l.b16 %v4656
        %v4690 = vunpack.c.l.b16 %v4657
        %v4691 = vunpack.c.l.b16 %v4658
        %v4692 = vunpack.c.l.b16 %v4659
        %v4693 = vunpack.c.l.b16 %v4660
        %v4694 = vrot.slane %v3364, 7
        %v4695 = vsel %vm3425, %v4694, %v3363
        %v4696 = vrot.slane %v3365, 6
        %v4697 = vsel %vm3428, %v4696, %v4695
        %v4698 = vrot.slane %v3366, 5
        %v4699 = vsel %vm3431, %v4698, %v4697
        %v4700 = vrot.slane %v3367, 4
        %v4701 = vsel %vm3434, %v4700, %v4699
        %v4702 = vrot.slane %v4026, 3
        %v4703 = vsel %vm3437, %v4702, %v4701
        %v4704 = vrot.slane %v4356, 2
        %v4705 = vsel %vm3440, %v4704, %v4703
        %v4706 = vrot.slane %v4686, 1
        %v4707 = vsel %vm3443, %v4706, %v4705
        %v4708 = vrot.slane %v3372, 7
        %v4709 = vsel %vm3425, %v4708, %v3371
        %v4710 = vrot.slane %v3373, 6
        %v4711 = vsel %vm3428, %v4710, %v4709
        %v4712 = vrot.slane %v3374, 5
        %v4713 = vsel %vm3431, %v4712, %v4711
        %v4714 = vrot.slane %v3375, 4
        %v4715 = vsel %vm3434, %v4714, %v4713
        %v4716 = vrot.slane %v4027, 3
        %v4717 = vsel %vm3437, %v4716, %v4715
        %v4718 = vrot.slane %v4357, 2
        %v4719 = vsel %vm3440, %v4718, %v4717
        %v4720 = vrot.slane %v4687, 1
        %v4721 = vsel %vm3443, %v4720, %v4719
        %v4722 = vrot.slane %v3380, 7
        %v4723 = vsel %vm3425, %v4722, %v3379
        %v4724 = vrot.slane %v3381, 6
        %v4725 = vsel %vm3428, %v4724, %v4723
        %v4726 = vrot.slane %v3382, 5
        %v4727 = vsel %vm3431, %v4726, %v4725
        %v4728 = vrot.slane %v3383, 4
        %v4729 = vsel %vm3434, %v4728, %v4727
        %v4730 = vrot.slane %v4028, 3
        %v4731 = vsel %vm3437, %v4730, %v4729
        %v4732 = vrot.slane %v4358, 2
        %v4733 = vsel %vm3440, %v4732, %v4731
        %v4734 = vrot.slane %v4688, 1
        %v4735 = vsel %vm3443, %v4734, %v4733
        %v4736 = vrot.slane %v3388, 7
        %v4737 = vsel %vm3425, %v4736, %v3387
        %v4738 = vrot.slane %v3389, 6
        %v4739 = vsel %vm3428, %v4738, %v4737
        %v4740 = vrot.slane %v3390, 5
        %v4741 = vsel %vm3431, %v4740, %v4739
        %v4742 = vrot.slane %v3391, 4
        %v4743 = vsel %vm3434, %v4742, %v4741
        %v4744 = vrot.slane %v4029, 3
        %v4745 = vsel %vm3437, %v4744, %v4743
        %v4746 = vrot.slane %v4359, 2
        %v4747 = vsel %vm3440, %v4746, %v4745
        %v4748 = vrot.slane %v4689, 1
        %v4749 = vsel %vm3443, %v4748, %v4747
        %v4750 = vrot.slane %v3396, 7
        %v4751 = vsel %vm3425, %v4750, %v3395
        %v4752 = vrot.slane %v3397, 6
        %v4753 = vsel %vm3428, %v4752, %v4751
        %v4754 = vrot.slane %v3398, 5
        %v4755 = vsel %vm3431, %v4754, %v4753
        %v4756 = vrot.slane %v3399, 4
        %v4757 = vsel %vm3434, %v4756, %v4755
        %v4758 = vrot.slane %v4030, 3
        %v4759 = vsel %vm3437, %v4758, %v4757
        %v4760 = vrot.slane %v4360, 2
        %v4761 = vsel %vm3440, %v4760, %v4759
        %v4762 = vrot.slane %v4690, 1
        %v4763 = vsel %vm3443, %v4762, %v4761
        %v4764 = vrot.slane %v3404, 7
        %v4765 = vsel %vm3425, %v4764, %v3403
        %v4766 = vrot.slane %v3405, 6
        %v4767 = vsel %vm3428, %v4766, %v4765
        %v4768 = vrot.slane %v3406, 5
        %v4769 = vsel %vm3431, %v4768, %v4767
        %v4770 = vrot.slane %v3407, 4
        %v4771 = vsel %vm3434, %v4770, %v4769
        %v4772 = vrot.slane %v4031, 3
        %v4773 = vsel %vm3437, %v4772, %v4771
        %v4774 = vrot.slane %v4361, 2
        %v4775 = vsel %vm3440, %v4774, %v4773
        %v4776 = vrot.slane %v4691, 1
        %v4777 = vsel %vm3443, %v4776, %v4775
        %v4778 = vrot.slane %v3412, 7
        %v4779 = vsel %vm3425, %v4778, %v3411
        %v4780 = vrot.slane %v3413, 6
        %v4781 = vsel %vm3428, %v4780, %v4779
        %v4782 = vrot.slane %v3414, 5
        %v4783 = vsel %vm3431, %v4782, %v4781
        %v4784 = vrot.slane %v3415, 4
        %v4785 = vsel %vm3434, %v4784, %v4783
        %v4786 = vrot.slane %v4032, 3
        %v4787 = vsel %vm3437, %v4786, %v4785
        %v4788 = vrot.slane %v4362, 2
        %v4789 = vsel %vm3440, %v4788, %v4787
        %v4790 = vrot.slane %v4692, 1
        %v4791 = vsel %vm3443, %v4790, %v4789
        %v4792 = vrot.slane %v3420, 7
        %v4793 = vsel %vm3425, %v4792, %v3419
        %v4794 = vrot.slane %v3421, 6
        %v4795 = vsel %vm3428, %v4794, %v4793
        %v4796 = vrot.slane %v3422, 5
        %v4797 = vsel %vm3431, %v4796, %v4795
        %v4798 = vrot.slane %v3423, 4
        %v4799 = vsel %vm3434, %v4798, %v4797
        %v4800 = vrot.slane %v4033, 3
        %v4801 = vsel %vm3437, %v4800, %v4799
        %v4802 = vrot.slane %v4363, 2
        %v4803 = vsel %vm3440, %v4802, %v4801
        %v4804 = vrot.slane %v4693, 1
        %v4805 = vsel %vm3443, %v4804, %v4803
        %v4806 = vpack.c.b16 %v4721, %v4707
        %v4807 = vpack.c.b16 %v4749, %v4735
        %v4808 = vpack.c.b16 %v4777, %v4763
        %v4809 = vpack.c.b16 %v4805, %v4791
        %v4830 = vunpack.c.l.b16 %v4662
        %v4831 = vunpack.c.h.b16 %v4662
        %v4832 = vunpack.c.l.b16 %v4663
        %v4833 = vunpack.c.h.b16 %v4663
        %v4834 = vunpack.c.l.b16 %v4664
        %v4835 = vunpack.c.h.b16 %v4664
        %v4836 = vunpack.c.l.b16 %v4665
        %v4837 = vunpack.c.h.b16 %v4665
        %v4838 = vunpack.c.l.b16 %v4666
        %v4839 = vunpack.c.h.b16 %v4666
        %v4840 = vunpack.c.l.b16 %v4667
        %v4841 = vunpack.c.h.b16 %v4667
        %v4842 = vunpack.c.l.b16 %v4668
        %v4843 = vunpack.c.h.b16 %v4668
        %v4844 = vunpack.c.l.b16 %v4669
        %v4845 = vunpack.c.h.b16 %v4669
        %v4846 = vunpack.c.l.b16 %v4670
        %v4847 = vunpack.c.h.b16 %v4670
        %v4848 = vunpack.c.l.b16 %v4671
        %v4849 = vunpack.c.h.b16 %v4671
        %v4850 = vunpack.c.l.b16 %v4672
        %v4851 = vunpack.c.h.b16 %v4672
        %v4852 = vunpack.c.l.b16 %v4673
        %v4853 = vunpack.c.h.b16 %v4673
        %v4854 = vunpack.c.l.b16 %v4674
        %v4855 = vunpack.c.h.b16 %v4674
        %v4856 = vunpack.c.l.b16 %v4675
        %v4857 = vunpack.c.h.b16 %v4675
        %v4858 = vunpack.c.l.b16 %v4676
        %v4859 = vunpack.c.h.b16 %v4676
        %v4860 = vunpack.c.l.b16 %v4677
        %v4861 = vunpack.c.h.b16 %v4677
        %v4862 = vpack.c.b16 %v4832, %v4830
        %v4863 = vpack.c.b16 %v4833, %v4831
        %v4864 = vpack.c.b16 %v4836, %v4834
        %v4865 = vpack.c.b16 %v4837, %v4835
        %v4866 = vpack.c.b16 %v4840, %v4838
        %v4867 = vpack.c.b16 %v4841, %v4839
        %v4868 = vpack.c.b16 %v4844, %v4842
        %v4869 = vpack.c.b16 %v4845, %v4843
        %v4870 = vpack.c.b16 %v4848, %v4846
        %v4871 = vpack.c.b16 %v4849, %v4847
        %v4872 = vpack.c.b16 %v4852, %v4850
        %v4873 = vpack.c.b16 %v4853, %v4851
        %v4874 = vpack.c.b16 %v4856, %v4854
        %v4875 = vpack.c.b16 %v4857, %v4855
        %v4876 = vpack.c.b16 %v4860, %v4858
        %v4877 = vpack.c.b16 %v4861, %v4859
        %4894 = vmatprep.subr.bf16.mxu0 %v4863
        %4895 = vmatpush1.bf16.msra.mxu0 %v4862
        %4896 = vmatprep.subr.bf16.mxu0 %v4865
        %4897 = vmatpush1.bf16.msra.mxu0 %v4864
        %4898 = vmatprep.subr.bf16.mxu0 %v4867
        %4899 = vmatpush1.bf16.msra.mxu0 %v4866
        %4900 = vmatprep.subr.bf16.mxu0 %v4869
        %4901 = vmatpush1.bf16.msra.mxu0 %v4868
        %4902 = vmatprep.subr.bf16.mxu0 %v4871
        %4903 = vmatpush1.bf16.msra.mxu0 %v4870
        %4904 = vmatprep.subr.bf16.mxu0 %v4873
        %4905 = vmatpush1.bf16.msra.mxu0 %v4872
        %4906 = vmatprep.subr.bf16.mxu0 %v4875
        %4907 = vmatpush1.bf16.msra.mxu0 %v4874
        %4908 = vmatprep.subr.bf16.mxu0 %v4877
        %4909 = vmatpush1.bf16.msra.mxu0 %v4876
        %4910 = vmatprep.subr.bf16.mxu0 0
        %4911 = vmatpush1.bf16.msra.mxu0 0
        %4912 = vmatprep.subr.bf16.mxu0 0
        %4913 = vmatpush1.bf16.msra.mxu0 0
        %4914 = vmatprep.subr.bf16.mxu0 0
        %4915 = vmatpush1.bf16.msra.mxu0 0
        %4916 = vmatprep.subr.bf16.mxu0 0
        %4917 = vmatpush1.bf16.msra.mxu0 0
        %4918 = vmatprep.subr.bf16.mxu0 0
        %4919 = vmatpush1.bf16.msra.mxu0 0
        %4920 = vmatprep.subr.bf16.mxu0 0
        %4921 = vmatpush1.bf16.msra.mxu0 0
        %4922 = vmatprep.subr.bf16.mxu0 0
        %4923 = vmatpush1.bf16.msra.mxu0 0
        %4924 = vmatprep.subr.bf16.mxu0 0
        %4925 = vmatpush1.bf16.msra.mxu0 0
        %4926 = vmatprep.mubr.bf16.mxu0 0
        %4927 = vmatmul.mubr.bf16.gmra.mrb[0].mxu0 %v4806
        %v4928 = vpop.f32.mrb[0].mxu0
        %v4929 = vadd.f32 0.0, %v4928
        %v4930 = vpop.f32.mrb[0].mxu0
        %v4931 = vadd.f32 0.0, %v4930
        %v4932 = vpop.f32.mrb[0].mxu0
        %v4933 = vadd.f32 0.0, %v4932
        %v4934 = vpop.f32.mrb[0].mxu0
        %v4935 = vadd.f32 0.0, %v4934
        %4936 = vmatprep.mubr.bf16.mxu0 0
        %4937 = vmatmul.mubr.bf16.gmra.mrb[0].mxu0 %v4807
        %v4938 = vpop.f32.mrb[0].mxu0
        %v4939 = vadd.f32 0.0, %v4938
        %v4940 = vpop.f32.mrb[0].mxu0
        %v4941 = vadd.f32 0.0, %v4940
        %v4942 = vpop.f32.mrb[0].mxu0
        %v4943 = vadd.f32 0.0, %v4942
        %v4944 = vpop.f32.mrb[0].mxu0
        %v4945 = vadd.f32 0.0, %v4944
        %4946 = vmatprep.mubr.bf16.mxu0 0
        %4947 = vmatmul.mubr.bf16.gmra.mrb[0].mxu0 %v4808
        %v4948 = vpop.f32.mrb[0].mxu0
        %v4949 = vadd.f32 0.0, %v4948
        %v4950 = vpop.f32.mrb[0].mxu0
        %v4951 = vadd.f32 0.0, %v4950
        %v4952 = vpop.f32.mrb[0].mxu0
        %v4953 = vadd.f32 0.0, %v4952
        %v4954 = vpop.f32.mrb[0].mxu0
        %v4955 = vadd.f32 0.0, %v4954
        %4956 = vmatprep.mubr.bf16.mxu0 0
        %4957 = vmatmul.mubr.bf16.gmra.mrb[0].mxu0 %v4809
        %v4958 = vpop.f32.mrb[0].mxu0
        %v4959 = vadd.f32 0.0, %v4958
        %v4960 = vpop.f32.mrb[0].mxu0
        %v4961 = vadd.f32 0.0, %v4960
        %v4962 = vpop.f32.mrb[0].mxu0
        %v4963 = vadd.f32 0.0, %v4962
        %v4964 = vpop.f32.mrb[0].mxu0
        %v4965 = vadd.f32 0.0, %v4964
        %4966 = vdwg.mxu0
        %v4967 = vadd.f32 %v4637, %v4929
        %v4968 = vadd.f32 %v4638, %v4931
        %v4969 = vadd.f32 %v4639, %v4933
        %v4970 = vadd.f32 %v4640, %v4935
        %v4971 = vadd.f32 %v4641, %v4939
        %v4972 = vadd.f32 %v4642, %v4941
        %v4973 = vadd.f32 %v4643, %v4943
        %v4974 = vadd.f32 %v4644, %v4945
        %v4975 = vadd.f32 %v4645, %v4949
        %v4976 = vadd.f32 %v4646, %v4951
        %v4977 = vadd.f32 %v4647, %v4953
        %v4978 = vadd.f32 %v4648, %v4955
        %v4979 = vadd.f32 %v4649, %v4959
        %v4980 = vadd.f32 %v4650, %v4961
        %v4981 = vadd.f32 %v4651, %v4963
        %v4982 = vadd.f32 %v4652, %v4965
        %v4983 = vmax.f32 %v4967, %v4968
        %v4984 = vmax.f32 %v4969, %v4970
        %v4985 = vmax.f32 %v4971, %v4972
        %v4986 = vmax.f32 %v4973, %v4974
        %v4987 = vmax.f32 %v4975, %v4976
        %v4988 = vmax.f32 %v4977, %v4978
        %v4989 = vmax.f32 %v4979, %v4980
        %v4990 = vmax.f32 %v4981, %v4982
        %v4999 = vcombine.high %v4983, %v4983
        %v5001 = vunpack.c.l.s4 1983009808
        %v5002 = vunpack.c.0.s8 %v5001
        %v5003 = vlaneseq
        %v5004 = vshrl.u32 %v5003, 7
        %v5005 = vsub.s32 %v5002, %v5004
        %v5006 = vrot.slane %v4983, %v5005
        %v5008 = vunpack.c.l.s4 1983009808
        %v5009 = vunpack.c.0.s8 %v5008
        %v5010 = vlaneseq
        %v5011 = vshrl.u32 %v5010, 7
        %v5012 = vsub.s32 %v5009, %v5011
        %v5013 = vrot.slane %v4999, %v5012
        %v5014 = vcombine.high %v5006, %v5006
        %v5015 = vcombine.high %v5013, %v5013
        %v5016 = vcombine.high %v4984, %v4984
        %v5018 = vunpack.c.l.s4 1983009808
        %v5019 = vunpack.c.0.s8 %v5018
        %v5020 = vlaneseq
        %v5021 = vshrl.u32 %v5020, 7
        %v5022 = vsub.s32 %v5019, %v5021
        %v5023 = vrot.slane %v4984, %v5022
        %v5025 = vunpack.c.l.s4 1983009808
        %v5026 = vunpack.c.0.s8 %v5025
        %v5027 = vlaneseq
        %v5028 = vshrl.u32 %v5027, 7
        %v5029 = vsub.s32 %v5026, %v5028
        %v5030 = vrot.slane %v5016, %v5029
        %v5031 = vcombine.high %v5023, %v5023
        %v5032 = vcombine.high %v5030, %v5030
        %v5033 = vcombine.high %v4985, %v4985
        %v5035 = vunpack.c.l.s4 1983009808
        %v5036 = vunpack.c.0.s8 %v5035
        %v5037 = vlaneseq
        %v5038 = vshrl.u32 %v5037, 7
        %v5039 = vsub.s32 %v5036, %v5038
        %v5040 = vrot.slane %v4985, %v5039
        %v5042 = vunpack.c.l.s4 1983009808
        %v5043 = vunpack.c.0.s8 %v5042
        %v5044 = vlaneseq
        %v5045 = vshrl.u32 %v5044, 7
        %v5046 = vsub.s32 %v5043, %v5045
        %v5047 = vrot.slane %v5033, %v5046
        %v5048 = vcombine.high %v5040, %v5040
        %v5049 = vcombine.high %v5047, %v5047
        %v5050 = vcombine.high %v4986, %v4986
        %v5052 = vunpack.c.l.s4 1983009808
        %v5053 = vunpack.c.0.s8 %v5052
        %v5054 = vlaneseq
        %v5055 = vshrl.u32 %v5054, 7
        %v5056 = vsub.s32 %v5053, %v5055
        %v5057 = vrot.slane %v4986, %v5056
        %v5059 = vunpack.c.l.s4 1983009808
        %v5060 = vunpack.c.0.s8 %v5059
        %v5061 = vlaneseq
        %v5062 = vshrl.u32 %v5061, 7
        %v5063 = vsub.s32 %v5060, %v5062
        %v5064 = vrot.slane %v5050, %v5063
        %v5065 = vcombine.high %v5057, %v5057
        %v5066 = vcombine.high %v5064, %v5064
        %v5067 = vcombine.high %v4987, %v4987
        %v5069 = vunpack.c.l.s4 1983009808
        %v5070 = vunpack.c.0.s8 %v5069
        %v5071 = vlaneseq
        %v5072 = vshrl.u32 %v5071, 7
        %v5073 = vsub.s32 %v5070, %v5072
        %v5074 = vrot.slane %v4987, %v5073
        %v5076 = vunpack.c.l.s4 1983009808
        %v5077 = vunpack.c.0.s8 %v5076
        %v5078 = vlaneseq
        %v5079 = vshrl.u32 %v5078, 7
        %v5080 = vsub.s32 %v5077, %v5079
        %v5081 = vrot.slane %v5067, %v5080
        %v5082 = vcombine.high %v5074, %v5074
        %v5083 = vcombine.high %v5081, %v5081
        %v5084 = vcombine.high %v4988, %v4988
        %v5086 = vunpack.c.l.s4 1983009808
        %v5087 = vunpack.c.0.s8 %v5086
        %v5088 = vlaneseq
        %v5089 = vshrl.u32 %v5088, 7
        %v5090 = vsub.s32 %v5087, %v5089
        %v5091 = vrot.slane %v4988, %v5090
        %v5093 = vunpack.c.l.s4 1983009808
        %v5094 = vunpack.c.0.s8 %v5093
        %v5095 = vlaneseq
        %v5096 = vshrl.u32 %v5095, 7
        %v5097 = vsub.s32 %v5094, %v5096
        %v5098 = vrot.slane %v5084, %v5097
        %v5099 = vcombine.high %v5091, %v5091
        %v5100 = vcombine.high %v5098, %v5098
        %v5101 = vcombine.high %v4989, %v4989
        %v5103 = vunpack.c.l.s4 1983009808
        %v5104 = vunpack.c.0.s8 %v5103
        %v5105 = vlaneseq
        %v5106 = vshrl.u32 %v5105, 7
        %v5107 = vsub.s32 %v5104, %v5106
        %v5108 = vrot.slane %v4989, %v5107
        %v5110 = vunpack.c.l.s4 1983009808
        %v5111 = vunpack.c.0.s8 %v5110
        %v5112 = vlaneseq
        %v5113 = vshrl.u32 %v5112, 7
        %v5114 = vsub.s32 %v5111, %v5113
        %v5115 = vrot.slane %v5101, %v5114
        %v5116 = vcombine.high %v5108, %v5108
        %v5117 = vcombine.high %v5115, %v5115
        %v5118 = vcombine.high %v4990, %v4990
        %v5120 = vunpack.c.l.s4 1983009808
        %v5121 = vunpack.c.0.s8 %v5120
        %v5122 = vlaneseq
        %v5123 = vshrl.u32 %v5122, 7
        %v5124 = vsub.s32 %v5121, %v5123
        %v5125 = vrot.slane %v4990, %v5124
        %v5127 = vunpack.c.l.s4 1983009808
        %v5128 = vunpack.c.0.s8 %v5127
        %v5129 = vlaneseq
        %v5130 = vshrl.u32 %v5129, 7
        %v5131 = vsub.s32 %v5128, %v5130
        %v5132 = vrot.slane %v5118, %v5131
        %v5133 = vcombine.high %v5125, %v5125
        %v5134 = vcombine.high %v5132, %v5132
        %v5167 = vsel %vm2319, %v5006, -inf
        %v5168 = vrot.slane %v5167, 4
        %v5169 = vmax.f32 %v5167, %v5168
        %v5170 = vrot.slane %v5169, 2
        %v5171 = vmax.f32 %v5169, %v5170
        %v5172 = vrot.slane %v5171, 1
        %v5173 = vmax.f32 %v5171, %v5172
        %v5174 = vsel %vm2319, %v5014, -inf
        %v5175 = vrot.slane %v5174, 4
        %v5176 = vmax.f32 %v5174, %v5175
        %v5177 = vrot.slane %v5176, 2
        %v5178 = vmax.f32 %v5176, %v5177
        %v5179 = vrot.slane %v5178, 1
        %v5180 = vmax.f32 %v5178, %v5179
        %v5181 = vsel %vm2319, %v5013, -inf
        %v5182 = vrot.slane %v5181, 4
        %v5183 = vmax.f32 %v5181, %v5182
        %v5184 = vrot.slane %v5183, 2
        %v5185 = vmax.f32 %v5183, %v5184
        %v5186 = vrot.slane %v5185, 1
        %v5187 = vmax.f32 %v5185, %v5186
        %v5188 = vsel %vm2319, %v5015, -inf
        %v5189 = vrot.slane %v5188, 4
        %v5190 = vmax.f32 %v5188, %v5189
        %v5191 = vrot.slane %v5190, 2
        %v5192 = vmax.f32 %v5190, %v5191
        %v5193 = vrot.slane %v5192, 1
        %v5194 = vmax.f32 %v5192, %v5193
        %v5195 = vsel %vm2319, %v5023, -inf
        %v5196 = vrot.slane %v5195, 4
        %v5197 = vmax.f32 %v5195, %v5196
        %v5198 = vrot.slane %v5197, 2
        %v5199 = vmax.f32 %v5197, %v5198
        %v5200 = vrot.slane %v5199, 1
        %v5201 = vmax.f32 %v5199, %v5200
        %v5202 = vsel %vm2319, %v5031, -inf
        %v5203 = vrot.slane %v5202, 4
        %v5204 = vmax.f32 %v5202, %v5203
        %v5205 = vrot.slane %v5204, 2
        %v5206 = vmax.f32 %v5204, %v5205
        %v5207 = vrot.slane %v5206, 1
        %v5208 = vmax.f32 %v5206, %v5207
        %v5209 = vsel %vm2319, %v5030, -inf
        %v5210 = vrot.slane %v5209, 4
        %v5211 = vmax.f32 %v5209, %v5210
        %v5212 = vrot.slane %v5211, 2
        %v5213 = vmax.f32 %v5211, %v5212
        %v5214 = vrot.slane %v5213, 1
        %v5215 = vmax.f32 %v5213, %v5214
        %v5216 = vsel %vm2319, %v5032, -inf
        %v5217 = vrot.slane %v5216, 4
        %v5218 = vmax.f32 %v5216, %v5217
        %v5219 = vrot.slane %v5218, 2
        %v5220 = vmax.f32 %v5218, %v5219
        %v5221 = vrot.slane %v5220, 1
        %v5222 = vmax.f32 %v5220, %v5221
        %v5223 = vsel %vm2319, %v5040, -inf
        %v5224 = vrot.slane %v5223, 4
        %v5225 = vmax.f32 %v5223, %v5224
        %v5226 = vrot.slane %v5225, 2
        %v5227 = vmax.f32 %v5225, %v5226
        %v5228 = vrot.slane %v5227, 1
        %v5229 = vmax.f32 %v5227, %v5228
        %v5230 = vsel %vm2319, %v5048, -inf
        %v5231 = vrot.slane %v5230, 4
        %v5232 = vmax.f32 %v5230, %v5231
        %v5233 = vrot.slane %v5232, 2
        %v5234 = vmax.f32 %v5232, %v5233
        %v5235 = vrot.slane %v5234, 1
        %v5236 = vmax.f32 %v5234, %v5235
        %v5237 = vsel %vm2319, %v5047, -inf
        %v5238 = vrot.slane %v5237, 4
        %v5239 = vmax.f32 %v5237, %v5238
        %v5240 = vrot.slane %v5239, 2
        %v5241 = vmax.f32 %v5239, %v5240
        %v5242 = vrot.slane %v5241, 1
        %v5243 = vmax.f32 %v5241, %v5242
        %v5244 = vsel %vm2319, %v5049, -inf
        %v5245 = vrot.slane %v5244, 4
        %v5246 = vmax.f32 %v5244, %v5245
        %v5247 = vrot.slane %v5246, 2
        %v5248 = vmax.f32 %v5246, %v5247
        %v5249 = vrot.slane %v5248, 1
        %v5250 = vmax.f32 %v5248, %v5249
        %v5251 = vsel %vm2319, %v5057, -inf
        %v5252 = vrot.slane %v5251, 4
        %v5253 = vmax.f32 %v5251, %v5252
        %v5254 = vrot.slane %v5253, 2
        %v5255 = vmax.f32 %v5253, %v5254
        %v5256 = vrot.slane %v5255, 1
        %v5257 = vmax.f32 %v5255, %v5256
        %v5258 = vsel %vm2319, %v5065, -inf
        %v5259 = vrot.slane %v5258, 4
        %v5260 = vmax.f32 %v5258, %v5259
        %v5261 = vrot.slane %v5260, 2
        %v5262 = vmax.f32 %v5260, %v5261
        %v5263 = vrot.slane %v5262, 1
        %v5264 = vmax.f32 %v5262, %v5263
        %v5265 = vsel %vm2319, %v5064, -inf
        %v5266 = vrot.slane %v5265, 4
        %v5267 = vmax.f32 %v5265, %v5266
        %v5268 = vrot.slane %v5267, 2
        %v5269 = vmax.f32 %v5267, %v5268
        %v5270 = vrot.slane %v5269, 1
        %v5271 = vmax.f32 %v5269, %v5270
        %v5272 = vsel %vm2319, %v5066, -inf
        %v5273 = vrot.slane %v5272, 4
        %v5274 = vmax.f32 %v5272, %v5273
        %v5275 = vrot.slane %v5274, 2
        %v5276 = vmax.f32 %v5274, %v5275
        %v5277 = vrot.slane %v5276, 1
        %v5278 = vmax.f32 %v5276, %v5277
        %v5279 = vsel %vm2319, %v5074, -inf
        %v5280 = vrot.slane %v5279, 4
        %v5281 = vmax.f32 %v5279, %v5280
        %v5282 = vrot.slane %v5281, 2
        %v5283 = vmax.f32 %v5281, %v5282
        %v5284 = vrot.slane %v5283, 1
        %v5285 = vmax.f32 %v5283, %v5284
        %v5286 = vsel %vm2319, %v5082, -inf
        %v5287 = vrot.slane %v5286, 4
        %v5288 = vmax.f32 %v5286, %v5287
        %v5289 = vrot.slane %v5288, 2
        %v5290 = vmax.f32 %v5288, %v5289
        %v5291 = vrot.slane %v5290, 1
        %v5292 = vmax.f32 %v5290, %v5291
        %v5293 = vsel %vm2319, %v5081, -inf
        %v5294 = vrot.slane %v5293, 4
        %v5295 = vmax.f32 %v5293, %v5294
        %v5296 = vrot.slane %v5295, 2
        %v5297 = vmax.f32 %v5295, %v5296
        %v5298 = vrot.slane %v5297, 1
        %v5299 = vmax.f32 %v5297, %v5298
        %v5300 = vsel %vm2319, %v5083, -inf
        %v5301 = vrot.slane %v5300, 4
        %v5302 = vmax.f32 %v5300, %v5301
        %v5303 = vrot.slane %v5302, 2
        %v5304 = vmax.f32 %v5302, %v5303
        %v5305 = vrot.slane %v5304, 1
        %v5306 = vmax.f32 %v5304, %v5305
        %v5307 = vsel %vm2319, %v5091, -inf
        %v5308 = vrot.slane %v5307, 4
        %v5309 = vmax.f32 %v5307, %v5308
        %v5310 = vrot.slane %v5309, 2
        %v5311 = vmax.f32 %v5309, %v5310
        %v5312 = vrot.slane %v5311, 1
        %v5313 = vmax.f32 %v5311, %v5312
        %v5314 = vsel %vm2319, %v5099, -inf
        %v5315 = vrot.slane %v5314, 4
        %v5316 = vmax.f32 %v5314, %v5315
        %v5317 = vrot.slane %v5316, 2
        %v5318 = vmax.f32 %v5316, %v5317
        %v5319 = vrot.slane %v5318, 1
        %v5320 = vmax.f32 %v5318, %v5319
        %v5321 = vsel %vm2319, %v5098, -inf
        %v5322 = vrot.slane %v5321, 4
        %v5323 = vmax.f32 %v5321, %v5322
        %v5324 = vrot.slane %v5323, 2
        %v5325 = vmax.f32 %v5323, %v5324
        %v5326 = vrot.slane %v5325, 1
        %v5327 = vmax.f32 %v5325, %v5326
        %v5328 = vsel %vm2319, %v5100, -inf
        %v5329 = vrot.slane %v5328, 4
        %v5330 = vmax.f32 %v5328, %v5329
        %v5331 = vrot.slane %v5330, 2
        %v5332 = vmax.f32 %v5330, %v5331
        %v5333 = vrot.slane %v5332, 1
        %v5334 = vmax.f32 %v5332, %v5333
        %v5335 = vsel %vm2319, %v5108, -inf
        %v5336 = vrot.slane %v5335, 4
        %v5337 = vmax.f32 %v5335, %v5336
        %v5338 = vrot.slane %v5337, 2
        %v5339 = vmax.f32 %v5337, %v5338
        %v5340 = vrot.slane %v5339, 1
        %v5341 = vmax.f32 %v5339, %v5340
        %v5342 = vsel %vm2319, %v5116, -inf
        %v5343 = vrot.slane %v5342, 4
        %v5344 = vmax.f32 %v5342, %v5343
        %v5345 = vrot.slane %v5344, 2
        %v5346 = vmax.f32 %v5344, %v5345
        %v5347 = vrot.slane %v5346, 1
        %v5348 = vmax.f32 %v5346, %v5347
        %v5349 = vsel %vm2319, %v5115, -inf
        %v5350 = vrot.slane %v5349, 4
        %v5351 = vmax.f32 %v5349, %v5350
        %v5352 = vrot.slane %v5351, 2
        %v5353 = vmax.f32 %v5351, %v5352
        %v5354 = vrot.slane %v5353, 1
        %v5355 = vmax.f32 %v5353, %v5354
        %v5356 = vsel %vm2319, %v5117, -inf
        %v5357 = vrot.slane %v5356, 4
        %v5358 = vmax.f32 %v5356, %v5357
        %v5359 = vrot.slane %v5358, 2
        %v5360 = vmax.f32 %v5358, %v5359
        %v5361 = vrot.slane %v5360, 1
        %v5362 = vmax.f32 %v5360, %v5361
        %v5363 = vsel %vm2319, %v5125, -inf
        %v5364 = vrot.slane %v5363, 4
        %v5365 = vmax.f32 %v5363, %v5364
        %v5366 = vrot.slane %v5365, 2
        %v5367 = vmax.f32 %v5365, %v5366
        %v5368 = vrot.slane %v5367, 1
        %v5369 = vmax.f32 %v5367, %v5368
        %v5370 = vsel %vm2319, %v5133, -inf
        %v5371 = vrot.slane %v5370, 4
        %v5372 = vmax.f32 %v5370, %v5371
        %v5373 = vrot.slane %v5372, 2
        %v5374 = vmax.f32 %v5372, %v5373
        %v5375 = vrot.slane %v5374, 1
        %v5376 = vmax.f32 %v5374, %v5375
        %v5377 = vsel %vm2319, %v5132, -inf
        %v5378 = vrot.slane %v5377, 4
        %v5379 = vmax.f32 %v5377, %v5378
        %v5380 = vrot.slane %v5379, 2
        %v5381 = vmax.f32 %v5379, %v5380
        %v5382 = vrot.slane %v5381, 1
        %v5383 = vmax.f32 %v5381, %v5382
        %v5384 = vsel %vm2319, %v5134, -inf
        %v5385 = vrot.slane %v5384, 4
        %v5386 = vmax.f32 %v5384, %v5385
        %v5387 = vrot.slane %v5386, 2
        %v5388 = vmax.f32 %v5386, %v5387
        %v5389 = vrot.slane %v5388, 1
        %v5390 = vmax.f32 %v5388, %v5389
        %v5391 = vld [vmem:[%s4] sm:$0x1]
        %v5393 = vlaneseq
        %v5394 = vshrl.u32 %v5393, 7
        %v5395 = vsub.s32 0, %v5394
        %v5396 = vrot.slane %v5391, %v5395
        %v5398 = vadd.f32 %v5173, %v5396
        %v5399 = vadd.f32 %v5180, %v5396
        %v5400 = vadd.f32 %v5187, %v5396
        %v5401 = vadd.f32 %v5194, %v5396
        %v5402 = vadd.f32 %v5201, %v5396
        %v5403 = vadd.f32 %v5208, %v5396
        %v5404 = vadd.f32 %v5215, %v5396
        %v5405 = vadd.f32 %v5222, %v5396
        %v5406 = vadd.f32 %v5229, %v5396
        %v5407 = vadd.f32 %v5236, %v5396
        %v5408 = vadd.f32 %v5243, %v5396
        %v5409 = vadd.f32 %v5250, %v5396
        %v5410 = vadd.f32 %v5257, %v5396
        %v5411 = vadd.f32 %v5264, %v5396
        %v5412 = vadd.f32 %v5271, %v5396
        %v5413 = vadd.f32 %v5278, %v5396
        %v5414 = vadd.f32 %v5285, %v5396
        %v5415 = vadd.f32 %v5292, %v5396
        %v5416 = vadd.f32 %v5299, %v5396
        %v5417 = vadd.f32 %v5306, %v5396
        %v5418 = vadd.f32 %v5313, %v5396
        %v5419 = vadd.f32 %v5320, %v5396
        %v5420 = vadd.f32 %v5327, %v5396
        %v5421 = vadd.f32 %v5334, %v5396
        %v5422 = vadd.f32 %v5341, %v5396
        %v5423 = vadd.f32 %v5348, %v5396
        %v5424 = vadd.f32 %v5355, %v5396
        %v5425 = vadd.f32 %v5362, %v5396
        %v5426 = vadd.f32 %v5369, %v5396
        %v5427 = vadd.f32 %v5376, %v5396
        %v5428 = vadd.f32 %v5383, %v5396
        %v5429 = vadd.f32 %v5390, %v5396
        %v5430 = vmax.f32 %v5398, 0.0
        %v5431 = vmax.f32 %v5399, 0.0
        %v5432 = vmax.f32 %v5400, 0.0
        %v5433 = vmax.f32 %v5401, 0.0
        %v5434 = vmax.f32 %v5402, 0.0
        %v5435 = vmax.f32 %v5403, 0.0
        %v5436 = vmax.f32 %v5404, 0.0
        %v5437 = vmax.f32 %v5405, 0.0
        %v5438 = vmax.f32 %v5406, 0.0
        %v5439 = vmax.f32 %v5407, 0.0
        %v5440 = vmax.f32 %v5408, 0.0
        %v5441 = vmax.f32 %v5409, 0.0
        %v5442 = vmax.f32 %v5410, 0.0
        %v5443 = vmax.f32 %v5411, 0.0
        %v5444 = vmax.f32 %v5412, 0.0
        %v5445 = vmax.f32 %v5413, 0.0
        %v5446 = vmax.f32 %v5414, 0.0
        %v5447 = vmax.f32 %v5415, 0.0
        %v5448 = vmax.f32 %v5416, 0.0
        %v5449 = vmax.f32 %v5417, 0.0
        %v5450 = vmax.f32 %v5418, 0.0
        %v5451 = vmax.f32 %v5419, 0.0
        %v5452 = vmax.f32 %v5420, 0.0
        %v5453 = vmax.f32 %v5421, 0.0
        %v5454 = vmax.f32 %v5422, 0.0
        %v5455 = vmax.f32 %v5423, 0.0
        %v5456 = vmax.f32 %v5424, 0.0
        %v5457 = vmax.f32 %v5425, 0.0
        %v5458 = vmax.f32 %v5426, 0.0
        %v5459 = vmax.f32 %v5427, 0.0
        %v5460 = vmax.f32 %v5428, 0.0
        %v5461 = vmax.f32 %v5429, 0.0
        %v5462 = vpack.c.bf16 %v5430, %v5430
        %v5463 = vpack.c.bf16 %v5434, %v5434
        %v5464 = vpack.c.bf16 %v5438, %v5438
        %v5465 = vpack.c.bf16 %v5442, %v5442
        %v5466 = vpack.c.bf16 %v5446, %v5446
        %v5467 = vpack.c.bf16 %v5450, %v5450
        %v5468 = vpack.c.bf16 %v5454, %v5454
        %v5469 = vpack.c.bf16 %v5458, %v5458
        %v5470 = vld [vmem:[#allocation2] sm:$0xff]
        %v5471 = vld [vmem:[#allocation2 + $0x8] sm:$0xff]
        %v5472 = vld [vmem:[#allocation2 + $0x10] sm:$0xff]
        %v5473 = vld [vmem:[#allocation2 + $0x18] sm:$0xff]
        %v5474 = vld [vmem:[#allocation2 + $0x20] sm:$0xff]
        %v5475 = vld [vmem:[#allocation2 + $0x28] sm:$0xff]
        %v5476 = vld [vmem:[#allocation2 + $0x30] sm:$0xff]
        %v5477 = vld [vmem:[#allocation2 + $0x38] sm:$0xff]
        %v5478 = vld [vmem:[#allocation2 + $0x40] sm:$0xff]
        %v5479 = vld [vmem:[#allocation2 + $0x48] sm:$0xff]
        %v5480 = vld [vmem:[#allocation2 + $0x50] sm:$0xff]
        %v5481 = vld [vmem:[#allocation2 + $0x58] sm:$0xff]
        %v5482 = vld [vmem:[#allocation2 + $0x60] sm:$0xff]
        %v5483 = vld [vmem:[#allocation2 + $0x68] sm:$0xff]
        %v5484 = vld [vmem:[#allocation2 + $0x70] sm:$0xff]
        %v5485 = vld [vmem:[#allocation2 + $0x78] sm:$0xff]
        %v5486 = vpack.c.bf16 %v5431, %v5431
        %v5487 = vpack.c.bf16 %v5435, %v5435
        %v5488 = vpack.c.bf16 %v5439, %v5439
        %v5489 = vpack.c.bf16 %v5443, %v5443
        %v5490 = vpack.c.bf16 %v5447, %v5447
        %v5491 = vpack.c.bf16 %v5451, %v5451
        %v5492 = vpack.c.bf16 %v5455, %v5455
        %v5493 = vpack.c.bf16 %v5459, %v5459
        %s5494 = scalar_lea.vmem [#allocation2], 128
        %v5495 = vld [vmem:[%s5494] sm:$0xff]
        %v5496 = vld [vmem:[%s5494 + $0x8] sm:$0xff]
        %v5497 = vld [vmem:[%s5494 + $0x10] sm:$0xff]
        %v5498 = vld [vmem:[%s5494 + $0x18] sm:$0xff]
        %v5499 = vld [vmem:[%s5494 + $0x20] sm:$0xff]
        %v5500 = vld [vmem:[%s5494 + $0x28] sm:$0xff]
        %v5501 = vld [vmem:[%s5494 + $0x30] sm:$0xff]
        %v5502 = vld [vmem:[%s5494 + $0x38] sm:$0xff]
        %v5503 = vld [vmem:[%s5494 + $0x40] sm:$0xff]
        %v5504 = vld [vmem:[%s5494 + $0x48] sm:$0xff]
        %v5505 = vld [vmem:[%s5494 + $0x50] sm:$0xff]
        %v5506 = vld [vmem:[%s5494 + $0x58] sm:$0xff]
        %v5507 = vld [vmem:[%s5494 + $0x60] sm:$0xff]
        %v5508 = vld [vmem:[%s5494 + $0x68] sm:$0xff]
        %v5509 = vld [vmem:[%s5494 + $0x70] sm:$0xff]
        %v5510 = vld [vmem:[%s5494 + $0x78] sm:$0xff]
        %v5519 = vunpack.c.l.b16 %v5486
        %v5520 = vunpack.c.l.b16 %v5487
        %v5521 = vunpack.c.l.b16 %v5488
        %v5522 = vunpack.c.l.b16 %v5489
        %v5523 = vunpack.c.l.b16 %v5490
        %v5524 = vunpack.c.l.b16 %v5491
        %v5525 = vunpack.c.l.b16 %v5492
        %v5526 = vunpack.c.l.b16 %v5493
        %v5527 = vrot.slane %v5520, 7
        %v5528 = vsel %vm3425, %v5527, %v5519
        %v5529 = vrot.slane %v5521, 6
        %v5530 = vsel %vm3428, %v5529, %v5528
        %v5531 = vrot.slane %v5522, 5
        %v5532 = vsel %vm3431, %v5531, %v5530
        %v5533 = vrot.slane %v5523, 4
        %v5534 = vsel %vm3434, %v5533, %v5532
        %v5535 = vrot.slane %v5524, 3
        %v5536 = vsel %vm3437, %v5535, %v5534
        %v5537 = vrot.slane %v5525, 2
        %v5538 = vsel %vm3440, %v5537, %v5536
        %v5539 = vrot.slane %v5526, 1
        %v5540 = vsel %vm3443, %v5539, %v5538
        %v5541 = vpack.c.b16 %v5540, %v5540
        %v5559 = vunpack.c.l.b16 %v5495
        %v5560 = vunpack.c.h.b16 %v5495
        %v5561 = vunpack.c.l.b16 %v5496
        %v5562 = vunpack.c.h.b16 %v5496
        %v5563 = vunpack.c.l.b16 %v5497
        %v5564 = vunpack.c.h.b16 %v5497
        %v5565 = vunpack.c.l.b16 %v5498
        %v5566 = vunpack.c.h.b16 %v5498
        %v5567 = vunpack.c.l.b16 %v5499
        %v5568 = vunpack.c.h.b16 %v5499
        %v5569 = vunpack.c.l.b16 %v5500
        %v5570 = vunpack.c.h.b16 %v5500
        %v5571 = vunpack.c.l.b16 %v5501
        %v5572 = vunpack.c.h.b16 %v5501
        %v5573 = vunpack.c.l.b16 %v5502
        %v5574 = vunpack.c.h.b16 %v5502
        %v5575 = vunpack.c.l.b16 %v5503
        %v5576 = vunpack.c.h.b16 %v5503
        %v5577 = vunpack.c.l.b16 %v5504
        %v5578 = vunpack.c.h.b16 %v5504
        %v5579 = vunpack.c.l.b16 %v5505
        %v5580 = vunpack.c.h.b16 %v5505
        %v5581 = vunpack.c.l.b16 %v5506
        %v5582 = vunpack.c.h.b16 %v5506
        %v5583 = vunpack.c.l.b16 %v5507
        %v5584 = vunpack.c.h.b16 %v5507
        %v5585 = vunpack.c.l.b16 %v5508
        %v5586 = vunpack.c.h.b16 %v5508
        %v5587 = vunpack.c.l.b16 %v5509
        %v5588 = vunpack.c.h.b16 %v5509
        %v5589 = vunpack.c.l.b16 %v5510
        %v5590 = vunpack.c.h.b16 %v5510
        %v5591 = vpack.c.b16 %v5561, %v5559
        %v5592 = vpack.c.b16 %v5562, %v5560
        %v5593 = vpack.c.b16 %v5565, %v5563
        %v5594 = vpack.c.b16 %v5566, %v5564
        %v5595 = vpack.c.b16 %v5569, %v5567
        %v5596 = vpack.c.b16 %v5570, %v5568
        %v5597 = vpack.c.b16 %v5573, %v5571
        %v5598 = vpack.c.b16 %v5574, %v5572
        %v5599 = vpack.c.b16 %v5577, %v5575
        %v5600 = vpack.c.b16 %v5578, %v5576
        %v5601 = vpack.c.b16 %v5581, %v5579
        %v5602 = vpack.c.b16 %v5582, %v5580
        %v5603 = vpack.c.b16 %v5585, %v5583
        %v5604 = vpack.c.b16 %v5586, %v5584
        %v5605 = vpack.c.b16 %v5589, %v5587
        %v5606 = vpack.c.b16 %v5590, %v5588
        %5623 = vmatprep.subr.bf16.mxu0 %v5592
        %5624 = vmatpush1.bf16.msra.mxu0 %v5591
        %5625 = vmatprep.subr.bf16.mxu0 %v5594
        %5626 = vmatpush1.bf16.msra.mxu0 %v5593
        %5627 = vmatprep.subr.bf16.mxu0 %v5596
        %5628 = vmatpush1.bf16.msra.mxu0 %v5595
        %5629 = vmatprep.subr.bf16.mxu0 %v5598
        %5630 = vmatpush1.bf16.msra.mxu0 %v5597
        %5631 = vmatprep.subr.bf16.mxu0 %v5600
        %5632 = vmatpush1.bf16.msra.mxu0 %v5599
        %5633 = vmatprep.subr.bf16.mxu0 %v5602
        %5634 = vmatpush1.bf16.msra.mxu0 %v5601
        %5635 = vmatprep.subr.bf16.mxu0 %v5604
        %5636 = vmatpush1.bf16.msra.mxu0 %v5603
        %5637 = vmatprep.subr.bf16.mxu0 %v5606
        %5638 = vmatpush1.bf16.msra.mxu0 %v5605
        %5639 = vmatprep.subr.bf16.mxu0 0
        %5640 = vmatpush1.bf16.msra.mxu0 0
        %5641 = vmatprep.subr.bf16.mxu0 0
        %5642 = vmatpush1.bf16.msra.mxu0 0
        %5643 = vmatprep.subr.bf16.mxu0 0
        %5644 = vmatpush1.bf16.msra.mxu0 0
        %5645 = vmatprep.subr.bf16.mxu0 0
        %5646 = vmatpush1.bf16.msra.mxu0 0
        %5647 = vmatprep.subr.bf16.mxu0 0
        %5648 = vmatpush1.bf16.msra.mxu0 0
        %5649 = vmatprep.subr.bf16.mxu0 0
        %5650 = vmatpush1.bf16.msra.mxu0 0
        %5651 = vmatprep.subr.bf16.mxu0 0
        %5652 = vmatpush1.bf16.msra.mxu0 0
        %5653 = vmatprep.subr.bf16.mxu0 0
        %5654 = vmatpush1.bf16.msra.mxu0 0
        %5655 = vmatprep.mubr.bf16.mxu0 0
        %5656 = vmatmul.mubr.bf16.gmra.mrb[0].mxu0 %v5541
        %v5657 = vpop.f32.mrb[0].mxu0
        %v5658 = vadd.f32 0.0, %v5657
        %v5659 = vpop.f32.mrb[0].mxu0
        %v5660 = vadd.f32 0.0, %v5659
        %v5661 = vpop.f32.mrb[0].mxu0
        %v5662 = vpop.f32.mrb[0].mxu0
        %5663 = vdwg.mxu0
        %v5672 = vunpack.c.l.b16 %v5462
        %v5673 = vunpack.c.l.b16 %v5463
        %v5674 = vunpack.c.l.b16 %v5464
        %v5675 = vunpack.c.l.b16 %v5465
        %v5676 = vunpack.c.l.b16 %v5466
        %v5677 = vunpack.c.l.b16 %v5467
        %v5678 = vunpack.c.l.b16 %v5468
        %v5679 = vunpack.c.l.b16 %v5469
        %v5680 = vrot.slane %v5673, 7
        %v5681 = vsel %vm3425, %v5680, %v5672
        %v5682 = vrot.slane %v5674, 6
        %v5683 = vsel %vm3428, %v5682, %v5681
        %v5684 = vrot.slane %v5675, 5
        %v5685 = vsel %vm3431, %v5684, %v5683
        %v5686 = vrot.slane %v5676, 4
        %v5687 = vsel %vm3434, %v5686, %v5685
        %v5688 = vrot.slane %v5677, 3
        %v5689 = vsel %vm3437, %v5688, %v5687
        %v5690 = vrot.slane %v5678, 2
        %v5691 = vsel %vm3440, %v5690, %v5689
        %v5692 = vrot.slane %v5679, 1
        %v5693 = vsel %vm3443, %v5692, %v5691
        %v5694 = vpack.c.b16 %v5693, %v5693
        %v5712 = vunpack.c.l.b16 %v5470
        %v5713 = vunpack.c.h.b16 %v5470
        %v5714 = vunpack.c.l.b16 %v5471
        %v5715 = vunpack.c.h.b16 %v5471
        %v5716 = vunpack.c.l.b16 %v5472
        %v5717 = vunpack.c.h.b16 %v5472
        %v5718 = vunpack.c.l.b16 %v5473
        %v5719 = vunpack.c.h.b16 %v5473
        %v5720 = vunpack.c.l.b16 %v5474
        %v5721 = vunpack.c.h.b16 %v5474
        %v5722 = vunpack.c.l.b16 %v5475
        %v5723 = vunpack.c.h.b16 %v5475
        %v5724 = vunpack.c.l.b16 %v5476
        %v5725 = vunpack.c.h.b16 %v5476
        %v5726 = vunpack.c.l.b16 %v5477
        %v5727 = vunpack.c.h.b16 %v5477
        %v5728 = vunpack.c.l.b16 %v5478
        %v5729 = vunpack.c.h.b16 %v5478
        %v5730 = vunpack.c.l.b16 %v5479
        %v5731 = vunpack.c.h.b16 %v5479
        %v5732 = vunpack.c.l.b16 %v5480
        %v5733 = vunpack.c.h.b16 %v5480
        %v5734 = vunpack.c.l.b16 %v5481
        %v5735 = vunpack.c.h.b16 %v5481
        %v5736 = vunpack.c.l.b16 %v5482
        %v5737 = vunpack.c.h.b16 %v5482
        %v5738 = vunpack.c.l.b16 %v5483
        %v5739 = vunpack.c.h.b16 %v5483
        %v5740 = vunpack.c.l.b16 %v5484
        %v5741 = vunpack.c.h.b16 %v5484
        %v5742 = vunpack.c.l.b16 %v5485
        %v5743 = vunpack.c.h.b16 %v5485
        %v5744 = vpack.c.b16 %v5714, %v5712
        %v5745 = vpack.c.b16 %v5715, %v5713
        %v5746 = vpack.c.b16 %v5718, %v5716
        %v5747 = vpack.c.b16 %v5719, %v5717
        %v5748 = vpack.c.b16 %v5722, %v5720
        %v5749 = vpack.c.b16 %v5723, %v5721
        %v5750 = vpack.c.b16 %v5726, %v5724
        %v5751 = vpack.c.b16 %v5727, %v5725
        %v5752 = vpack.c.b16 %v5730, %v5728
        %v5753 = vpack.c.b16 %v5731, %v5729
        %v5754 = vpack.c.b16 %v5734, %v5732
        %v5755 = vpack.c.b16 %v5735, %v5733
        %v5756 = vpack.c.b16 %v5738, %v5736
        %v5757 = vpack.c.b16 %v5739, %v5737
        %v5758 = vpack.c.b16 %v5742, %v5740
        %v5759 = vpack.c.b16 %v5743, %v5741
        %5776 = vmatprep.subr.bf16.mxu0 %v5745
        %5777 = vmatpush1.bf16.msra.mxu0 %v5744
        %5778 = vmatprep.subr.bf16.mxu0 %v5747
        %5779 = vmatpush1.bf16.msra.mxu0 %v5746
        %5780 = vmatprep.subr.bf16.mxu0 %v5749
        %5781 = vmatpush1.bf16.msra.mxu0 %v5748
        %5782 = vmatprep.subr.bf16.mxu0 %v5751
        %5783 = vmatpush1.bf16.msra.mxu0 %v5750
        %5784 = vmatprep.subr.bf16.mxu0 %v5753
        %5785 = vmatpush1.bf16.msra.mxu0 %v5752
        %5786 = vmatprep.subr.bf16.mxu0 %v5755
        %5787 = vmatpush1.bf16.msra.mxu0 %v5754
        %5788 = vmatprep.subr.bf16.mxu0 %v5757
        %5789 = vmatpush1.bf16.msra.mxu0 %v5756
        %5790 = vmatprep.subr.bf16.mxu0 %v5759
        %5791 = vmatpush1.bf16.msra.mxu0 %v5758
        %5792 = vmatprep.subr.bf16.mxu0 0
        %5793 = vmatpush1.bf16.msra.mxu0 0
        %5794 = vmatprep.subr.bf16.mxu0 0
        %5795 = vmatpush1.bf16.msra.mxu0 0
        %5796 = vmatprep.subr.bf16.mxu0 0
        %5797 = vmatpush1.bf16.msra.mxu0 0
        %5798 = vmatprep.subr.bf16.mxu0 0
        %5799 = vmatpush1.bf16.msra.mxu0 0
        %5800 = vmatprep.subr.bf16.mxu0 0
        %5801 = vmatpush1.bf16.msra.mxu0 0
        %5802 = vmatprep.subr.bf16.mxu0 0
        %5803 = vmatpush1.bf16.msra.mxu0 0
        %5804 = vmatprep.subr.bf16.mxu0 0
        %5805 = vmatpush1.bf16.msra.mxu0 0
        %5806 = vmatprep.subr.bf16.mxu0 0
        %5807 = vmatpush1.bf16.msra.mxu0 0
        %5808 = vmatprep.mubr.bf16.mxu0 0
        %5809 = vmatmul.mubr.bf16.gmra.mrb[0].mxu0 %v5694
        %v5810 = vpop.f32.mrb[0].mxu0
        %v5811 = vadd.f32 %v5658, %v5810
        %v5812 = vpop.f32.mrb[0].mxu0
        %v5813 = vadd.f32 %v5660, %v5812
        %v5814 = vpop.f32.mrb[0].mxu0
        %v5815 = vpop.f32.mrb[0].mxu0
        %5816 = vdwg.mxu0
        %v5817 = vpack.c.bf16 %v5432, %v5432
        %v5818 = vpack.c.bf16 %v5436, %v5436
        %v5819 = vpack.c.bf16 %v5440, %v5440
        %v5820 = vpack.c.bf16 %v5444, %v5444
        %v5821 = vpack.c.bf16 %v5448, %v5448
        %v5822 = vpack.c.bf16 %v5452, %v5452
        %v5823 = vpack.c.bf16 %v5456, %v5456
        %v5824 = vpack.c.bf16 %v5460, %v5460
        %s5825 = scalar_lea.vmem [#allocation2], 256
        %v5826 = vld [vmem:[%s5825] sm:$0xff]
        %v5827 = vld [vmem:[%s5825 + $0x8] sm:$0xff]
        %v5828 = vld [vmem:[%s5825 + $0x10] sm:$0xff]
        %v5829 = vld [vmem:[%s5825 + $0x18] sm:$0xff]
        %v5830 = vld [vmem:[%s5825 + $0x20] sm:$0xff]
        %v5831 = vld [vmem:[%s5825 + $0x28] sm:$0xff]
        %v5832 = vld [vmem:[%s5825 + $0x30] sm:$0xff]
        %v5833 = vld [vmem:[%s5825 + $0x38] sm:$0xff]
        %v5834 = vld [vmem:[%s5825 + $0x40] sm:$0xff]
        %v5835 = vld [vmem:[%s5825 + $0x48] sm:$0xff]
        %v5836 = vld [vmem:[%s5825 + $0x50] sm:$0xff]
        %v5837 = vld [vmem:[%s5825 + $0x58] sm:$0xff]
        %v5838 = vld [vmem:[%s5825 + $0x60] sm:$0xff]
        %v5839 = vld [vmem:[%s5825 + $0x68] sm:$0xff]
        %v5840 = vld [vmem:[%s5825 + $0x70] sm:$0xff]
        %v5841 = vld [vmem:[%s5825 + $0x78] sm:$0xff]
        %v5850 = vunpack.c.l.b16 %v5817
        %v5851 = vunpack.c.l.b16 %v5818
        %v5852 = vunpack.c.l.b16 %v5819
        %v5853 = vunpack.c.l.b16 %v5820
        %v5854 = vunpack.c.l.b16 %v5821
        %v5855 = vunpack.c.l.b16 %v5822
        %v5856 = vunpack.c.l.b16 %v5823
        %v5857 = vunpack.c.l.b16 %v5824
        %v5858 = vrot.slane %v5851, 7
        %v5859 = vsel %vm3425, %v5858, %v5850
        %v5860 = vrot.slane %v5852, 6
        %v5861 = vsel %vm3428, %v5860, %v5859
        %v5862 = vrot.slane %v5853, 5
        %v5863 = vsel %vm3431, %v5862, %v5861
        %v5864 = vrot.slane %v5854, 4
        %v5865 = vsel %vm3434, %v5864, %v5863
        %v5866 = vrot.slane %v5855, 3
        %v5867 = vsel %vm3437, %v5866, %v5865
        %v5868 = vrot.slane %v5856, 2
        %v5869 = vsel %vm3440, %v5868, %v5867
        %v5870 = vrot.slane %v5857, 1
        %v5871 = vsel %vm3443, %v5870, %v5869
        %v5872 = vpack.c.b16 %v5871, %v5871
        %v5890 = vunpack.c.l.b16 %v5826
        %v5891 = vunpack.c.h.b16 %v5826
        %v5892 = vunpack.c.l.b16 %v5827
        %v5893 = vunpack.c.h.b16 %v5827
        %v5894 = vunpack.c.l.b16 %v5828
        %v5895 = vunpack.c.h.b16 %v5828
        %v5896 = vunpack.c.l.b16 %v5829
        %v5897 = vunpack.c.h.b16 %v5829
        %v5898 = vunpack.c.l.b16 %v5830
        %v5899 = vunpack.c.h.b16 %v5830
        %v5900 = vunpack.c.l.b16 %v5831
        %v5901 = vunpack.c.h.b16 %v5831
        %v5902 = vunpack.c.l.b16 %v5832
        %v5903 = vunpack.c.h.b16 %v5832
        %v5904 = vunpack.c.l.b16 %v5833
        %v5905 = vunpack.c.h.b16 %v5833
        %v5906 = vunpack.c.l.b16 %v5834
        %v5907 = vunpack.c.h.b16 %v5834
        %v5908 = vunpack.c.l.b16 %v5835
        %v5909 = vunpack.c.h.b16 %v5835
        %v5910 = vunpack.c.l.b16 %v5836
        %v5911 = vunpack.c.h.b16 %v5836
        %v5912 = vunpack.c.l.b16 %v5837
        %v5913 = vunpack.c.h.b16 %v5837
        %v5914 = vunpack.c.l.b16 %v5838
        %v5915 = vunpack.c.h.b16 %v5838
        %v5916 = vunpack.c.l.b16 %v5839
        %v5917 = vunpack.c.h.b16 %v5839
        %v5918 = vunpack.c.l.b16 %v5840
        %v5919 = vunpack.c.h.b16 %v5840
        %v5920 = vunpack.c.l.b16 %v5841
        %v5921 = vunpack.c.h.b16 %v5841
        %v5922 = vpack.c.b16 %v5892, %v5890
        %v5923 = vpack.c.b16 %v5893, %v5891
        %v5924 = vpack.c.b16 %v5896, %v5894
        %v5925 = vpack.c.b16 %v5897, %v5895
        %v5926 = vpack.c.b16 %v5900, %v5898
        %v5927 = vpack.c.b16 %v5901, %v5899
        %v5928 = vpack.c.b16 %v5904, %v5902
        %v5929 = vpack.c.b16 %v5905, %v5903
        %v5930 = vpack.c.b16 %v5908, %v5906
        %v5931 = vpack.c.b16 %v5909, %v5907
        %v5932 = vpack.c.b16 %v5912, %v5910
        %v5933 = vpack.c.b16 %v5913, %v5911
        %v5934 = vpack.c.b16 %v5916, %v5914
        %v5935 = vpack.c.b16 %v5917, %v5915
        %v5936 = vpack.c.b16 %v5920, %v5918
        %v5937 = vpack.c.b16 %v5921, %v5919
        %5954 = vmatprep.subr.bf16.mxu0 %v5923
        %5955 = vmatpush1.bf16.msra.mxu0 %v5922
        %5956 = vmatprep.subr.bf16.mxu0 %v5925
        %5957 = vmatpush1.bf16.msra.mxu0 %v5924
        %5958 = vmatprep.subr.bf16.mxu0 %v5927
        %5959 = vmatpush1.bf16.msra.mxu0 %v5926
        %5960 = vmatprep.subr.bf16.mxu0 %v5929
        %5961 = vmatpush1.bf16.msra.mxu0 %v5928
        %5962 = vmatprep.subr.bf16.mxu0 %v5931
        %5963 = vmatpush1.bf16.msra.mxu0 %v5930
        %5964 = vmatprep.subr.bf16.mxu0 %v5933
        %5965 = vmatpush1.bf16.msra.mxu0 %v5932
        %5966 = vmatprep.subr.bf16.mxu0 %v5935
        %5967 = vmatpush1.bf16.msra.mxu0 %v5934
        %5968 = vmatprep.subr.bf16.mxu0 %v5937
        %5969 = vmatpush1.bf16.msra.mxu0 %v5936
        %5970 = vmatprep.subr.bf16.mxu0 0
        %5971 = vmatpush1.bf16.msra.mxu0 0
        %5972 = vmatprep.subr.bf16.mxu0 0
        %5973 = vmatpush1.bf16.msra.mxu0 0
        %5974 = vmatprep.subr.bf16.mxu0 0
        %5975 = vmatpush1.bf16.msra.mxu0 0
        %5976 = vmatprep.subr.bf16.mxu0 0
        %5977 = vmatpush1.bf16.msra.mxu0 0
        %5978 = vmatprep.subr.bf16.mxu0 0
        %5979 = vmatpush1.bf16.msra.mxu0 0
        %5980 = vmatprep.subr.bf16.mxu0 0
        %5981 = vmatpush1.bf16.msra.mxu0 0
        %5982 = vmatprep.subr.bf16.mxu0 0
        %5983 = vmatpush1.bf16.msra.mxu0 0
        %5984 = vmatprep.subr.bf16.mxu0 0
        %5985 = vmatpush1.bf16.msra.mxu0 0
        %5986 = vmatprep.mubr.bf16.mxu0 0
        %5987 = vmatmul.mubr.bf16.gmra.mrb[0].mxu0 %v5872
        %v5988 = vpop.f32.mrb[0].mxu0
        %v5989 = vadd.f32 0.0, %v5988
        %v5990 = vpop.f32.mrb[0].mxu0
        %v5991 = vadd.f32 0.0, %v5990
        %v5992 = vpop.f32.mrb[0].mxu0
        %v5993 = vpop.f32.mrb[0].mxu0
        %5994 = vdwg.mxu0
        %v5995 = vadd.f32 %v5811, %v5989
        %v5996 = vadd.f32 %v5813, %v5991
        %v5997 = vpack.c.bf16 %v5433, %v5433
        %v5998 = vpack.c.bf16 %v5437, %v5437
        %v5999 = vpack.c.bf16 %v5441, %v5441
        %v6000 = vpack.c.bf16 %v5445, %v5445
        %v6001 = vpack.c.bf16 %v5449, %v5449
        %v6002 = vpack.c.bf16 %v5453, %v5453
        %v6003 = vpack.c.bf16 %v5457, %v5457
        %v6004 = vpack.c.bf16 %v5461, %v5461
        %s6005 = scalar_lea.vmem [#allocation2], 384
        %v6006 = vld [vmem:[%s6005] sm:$0xff]
        %v6007 = vld [vmem:[%s6005 + $0x8] sm:$0xff]
        %v6008 = vld [vmem:[%s6005 + $0x10] sm:$0xff]
        %v6009 = vld [vmem:[%s6005 + $0x18] sm:$0xff]
        %v6010 = vld [vmem:[%s6005 + $0x20] sm:$0xff]
        %v6011 = vld [vmem:[%s6005 + $0x28] sm:$0xff]
        %v6012 = vld [vmem:[%s6005 + $0x30] sm:$0xff]
        %v6013 = vld [vmem:[%s6005 + $0x38] sm:$0xff]
        %v6014 = vld [vmem:[%s6005 + $0x40] sm:$0xff]
        %v6015 = vld [vmem:[%s6005 + $0x48] sm:$0xff]
        %v6016 = vld [vmem:[%s6005 + $0x50] sm:$0xff]
        %v6017 = vld [vmem:[%s6005 + $0x58] sm:$0xff]
        %v6018 = vld [vmem:[%s6005 + $0x60] sm:$0xff]
        %v6019 = vld [vmem:[%s6005 + $0x68] sm:$0xff]
        %v6020 = vld [vmem:[%s6005 + $0x70] sm:$0xff]
        %v6021 = vld [vmem:[%s6005 + $0x78] sm:$0xff]
        %v6030 = vunpack.c.l.b16 %v5997
        %v6031 = vunpack.c.l.b16 %v5998
        %v6032 = vunpack.c.l.b16 %v5999
        %v6033 = vunpack.c.l.b16 %v6000
        %v6034 = vunpack.c.l.b16 %v6001
        %v6035 = vunpack.c.l.b16 %v6002
        %v6036 = vunpack.c.l.b16 %v6003
        %v6037 = vunpack.c.l.b16 %v6004
        %v6038 = vrot.slane %v6031, 7
        %v6039 = vsel %vm3425, %v6038, %v6030
        %v6040 = vrot.slane %v6032, 6
        %v6041 = vsel %vm3428, %v6040, %v6039
        %v6042 = vrot.slane %v6033, 5
        %v6043 = vsel %vm3431, %v6042, %v6041
        %v6044 = vrot.slane %v6034, 4
        %v6045 = vsel %vm3434, %v6044, %v6043
        %v6046 = vrot.slane %v6035, 3
        %v6047 = vsel %vm3437, %v6046, %v6045
        %v6048 = vrot.slane %v6036, 2
        %v6049 = vsel %vm3440, %v6048, %v6047
        %v6050 = vrot.slane %v6037, 1
        %v6051 = vsel %vm3443, %v6050, %v6049
        %v6052 = vpack.c.b16 %v6051, %v6051
        %v6070 = vunpack.c.l.b16 %v6006
        %v6071 = vunpack.c.h.b16 %v6006
        %v6072 = vunpack.c.l.b16 %v6007
        %v6073 = vunpack.c.h.b16 %v6007
        %v6074 = vunpack.c.l.b16 %v6008
        %v6075 = vunpack.c.h.b16 %v6008
        %v6076 = vunpack.c.l.b16 %v6009
        %v6077 = vunpack.c.h.b16 %v6009
        %v6078 = vunpack.c.l.b16 %v6010
        %v6079 = vunpack.c.h.b16 %v6010
        %v6080 = vunpack.c.l.b16 %v6011
        %v6081 = vunpack.c.h.b16 %v6011
        %v6082 = vunpack.c.l.b16 %v6012
        %v6083 = vunpack.c.h.b16 %v6012
        %v6084 = vunpack.c.l.b16 %v6013
        %v6085 = vunpack.c.h.b16 %v6013
        %v6086 = vunpack.c.l.b16 %v6014
        %v6087 = vunpack.c.h.b16 %v6014
        %v6088 = vunpack.c.l.b16 %v6015
        %v6089 = vunpack.c.h.b16 %v6015
        %v6090 = vunpack.c.l.b16 %v6016
        %v6091 = vunpack.c.h.b16 %v6016
        %v6092 = vunpack.c.l.b16 %v6017
        %v6093 = vunpack.c.h.b16 %v6017
        %v6094 = vunpack.c.l.b16 %v6018
        %v6095 = vunpack.c.h.b16 %v6018
        %v6096 = vunpack.c.l.b16 %v6019
        %v6097 = vunpack.c.h.b16 %v6019
        %v6098 = vunpack.c.l.b16 %v6020
        %v6099 = vunpack.c.h.b16 %v6020
        %v6100 = vunpack.c.l.b16 %v6021
        %v6101 = vunpack.c.h.b16 %v6021
        %v6102 = vpack.c.b16 %v6072, %v6070
        %v6103 = vpack.c.b16 %v6073, %v6071
        %v6104 = vpack.c.b16 %v6076, %v6074
        %v6105 = vpack.c.b16 %v6077, %v6075
        %v6106 = vpack.c.b16 %v6080, %v6078
        %v6107 = vpack.c.b16 %v6081, %v6079
        %v6108 = vpack.c.b16 %v6084, %v6082
        %v6109 = vpack.c.b16 %v6085, %v6083
        %v6110 = vpack.c.b16 %v6088, %v6086
        %v6111 = vpack.c.b16 %v6089, %v6087
        %v6112 = vpack.c.b16 %v6092, %v6090
        %v6113 = vpack.c.b16 %v6093, %v6091
        %v6114 = vpack.c.b16 %v6096, %v6094
        %v6115 = vpack.c.b16 %v6097, %v6095
        %v6116 = vpack.c.b16 %v6100, %v6098
        %v6117 = vpack.c.b16 %v6101, %v6099
        %6134 = vmatprep.subr.bf16.mxu0 %v6103
        %6135 = vmatpush1.bf16.msra.mxu0 %v6102
        %6136 = vmatprep.subr.bf16.mxu0 %v6105
        %6137 = vmatpush1.bf16.msra.mxu0 %v6104
        %6138 = vmatprep.subr.bf16.mxu0 %v6107
        %6139 = vmatpush1.bf16.msra.mxu0 %v6106
        %6140 = vmatprep.subr.bf16.mxu0 %v6109
        %6141 = vmatpush1.bf16.msra.mxu0 %v6108
        %6142 = vmatprep.subr.bf16.mxu0 %v6111
        %6143 = vmatpush1.bf16.msra.mxu0 %v6110
        %6144 = vmatprep.subr.bf16.mxu0 %v6113
        %6145 = vmatpush1.bf16.msra.mxu0 %v6112
        %6146 = vmatprep.subr.bf16.mxu0 %v6115
        %6147 = vmatpush1.bf16.msra.mxu0 %v6114
        %6148 = vmatprep.subr.bf16.mxu0 %v6117
        %6149 = vmatpush1.bf16.msra.mxu0 %v6116
        %6150 = vmatprep.subr.bf16.mxu0 0
        %6151 = vmatpush1.bf16.msra.mxu0 0
        %6152 = vmatprep.subr.bf16.mxu0 0
        %6153 = vmatpush1.bf16.msra.mxu0 0
        %6154 = vmatprep.subr.bf16.mxu0 0
        %6155 = vmatpush1.bf16.msra.mxu0 0
        %6156 = vmatprep.subr.bf16.mxu0 0
        %6157 = vmatpush1.bf16.msra.mxu0 0
        %6158 = vmatprep.subr.bf16.mxu0 0
        %6159 = vmatpush1.bf16.msra.mxu0 0
        %6160 = vmatprep.subr.bf16.mxu0 0
        %6161 = vmatpush1.bf16.msra.mxu0 0
        %6162 = vmatprep.subr.bf16.mxu0 0
        %6163 = vmatpush1.bf16.msra.mxu0 0
        %6164 = vmatprep.subr.bf16.mxu0 0
        %6165 = vmatpush1.bf16.msra.mxu0 0
        %6166 = vmatprep.mubr.bf16.mxu0 0
        %6167 = vmatmul.mubr.bf16.gmra.mrb[0].mxu0 %v6052
        %v6168 = vpop.f32.mrb[0].mxu0
        %v6169 = vadd.f32 0.0, %v6168
        %v6170 = vpop.f32.mrb[0].mxu0
        %v6171 = vadd.f32 0.0, %v6170
        %v6172 = vpop.f32.mrb[0].mxu0
        %v6173 = vpop.f32.mrb[0].mxu0
        %6174 = vdwg.mxu0
        %v6175 = vadd.f32 %v5995, %v6169
        %v6176 = vadd.f32 %v5996, %v6171
        %v6177 = vld [vmem:[%s6] sm:$0x3]
        %v6179 = vlaneseq
        %v6180 = vshrl.u32 %v6179, 7
        %v6181 = vsub.s32 0, %v6180
        %v6182 = vrot.slane %v6177, %v6181
        %v6183 = vlaneseq
        %v6184 = vshrl.u32 %v6183, 7
        %v6185 = vsub.s32 1, %v6184
        %v6186 = vrot.slane %v6177, %v6185
        %v6189 = vadd.f32 %v6175, %v6182
        %v6190 = vadd.f32 %v6176, %v6186
        %v6191 = vmax.f32 %v6189, 0.0
        %v6192 = vmax.f32 %v6190, 0.0
        %v6193 = vpack.c.bf16 %v6191, %v6191
        %v6194 = vpack.c.bf16 %v6192, %v6192
        %v6195 = vld [vmem:[%s7] sm:$0xf]
        %v6196 = vld [vmem:[%s7 + $0x4] sm:$0xf]
        %v6197 = vld [vmem:[%s7 + $0x8] sm:$0xf]
        %v6198 = vld [vmem:[%s7 + $0xc] sm:$0xf]
        %v6199 = vld [vmem:[%s7 + $0x10] sm:$0xf]
        %v6200 = vld [vmem:[%s7 + $0x14] sm:$0xf]
        %v6201 = vld [vmem:[%s7 + $0x18] sm:$0xf]
        %v6202 = vld [vmem:[%s7 + $0x1c] sm:$0xf]
        %v6203 = vld [vmem:[%s7 + $0x20] sm:$0xf]
        %v6204 = vld [vmem:[%s7 + $0x24] sm:$0xf]
        %v6205 = vld [vmem:[%s7 + $0x28] sm:$0xf]
        %v6206 = vld [vmem:[%s7 + $0x2c] sm:$0xf]
        %v6207 = vld [vmem:[%s7 + $0x30] sm:$0xf]
        %v6208 = vld [vmem:[%s7 + $0x34] sm:$0xf]
        %v6209 = vld [vmem:[%s7 + $0x38] sm:$0xf]
        %v6210 = vld [vmem:[%s7 + $0x3c] sm:$0xf]
        %v6211 = vld [vmem:[%s7 + $0x40] sm:$0xf]
        %v6212 = vld [vmem:[%s7 + $0x44] sm:$0xf]
        %v6213 = vld [vmem:[%s7 + $0x48] sm:$0xf]
        %v6214 = vld [vmem:[%s7 + $0x4c] sm:$0xf]
        %v6215 = vld [vmem:[%s7 + $0x50] sm:$0xf]
        %v6216 = vld [vmem:[%s7 + $0x54] sm:$0xf]
        %v6217 = vld [vmem:[%s7 + $0x58] sm:$0xf]
        %v6218 = vld [vmem:[%s7 + $0x5c] sm:$0xf]
        %v6219 = vld [vmem:[%s7 + $0x60] sm:$0xf]
        %v6220 = vld [vmem:[%s7 + $0x64] sm:$0xf]
        %v6221 = vld [vmem:[%s7 + $0x68] sm:$0xf]
        %v6222 = vld [vmem:[%s7 + $0x6c] sm:$0xf]
        %v6223 = vld [vmem:[%s7 + $0x70] sm:$0xf]
        %v6224 = vld [vmem:[%s7 + $0x74] sm:$0xf]
        %v6225 = vld [vmem:[%s7 + $0x78] sm:$0xf]
        %v6226 = vld [vmem:[%s7 + $0x7c] sm:$0xf]
        %v6227 = vld [vmem:[%s8] sm:$0x1]
        %v6229 = vlaneseq
        %v6230 = vshrl.u32 %v6229, 7
        %v6231 = vsub.s32 0, %v6230
        %v6232 = vrot.slane %v6227, %v6231
        %v6266 = vunpack.c.l.b16 %v6195
        %v6267 = vunpack.c.l.b16 %v6196
        %v6268 = vunpack.c.l.b16 %v6197
        %v6269 = vunpack.c.l.b16 %v6198
        %v6270 = vunpack.c.l.b16 %v6199
        %v6271 = vunpack.c.l.b16 %v6200
        %v6272 = vunpack.c.l.b16 %v6201
        %v6273 = vunpack.c.l.b16 %v6202
        %v6274 = vunpack.c.l.b16 %v6203
        %v6275 = vunpack.c.l.b16 %v6204
        %v6276 = vunpack.c.l.b16 %v6205
        %v6277 = vunpack.c.l.b16 %v6206
        %v6278 = vunpack.c.l.b16 %v6207
        %v6279 = vunpack.c.l.b16 %v6208
        %v6280 = vunpack.c.l.b16 %v6209
        %v6281 = vunpack.c.l.b16 %v6210
        %v6282 = vunpack.c.l.b16 %v6211
        %v6283 = vunpack.c.l.b16 %v6212
        %v6284 = vunpack.c.l.b16 %v6213
        %v6285 = vunpack.c.l.b16 %v6214
        %v6286 = vunpack.c.l.b16 %v6215
        %v6287 = vunpack.c.l.b16 %v6216
        %v6288 = vunpack.c.l.b16 %v6217
        %v6289 = vunpack.c.l.b16 %v6218
        %v6290 = vunpack.c.l.b16 %v6219
        %v6291 = vunpack.c.l.b16 %v6220
        %v6292 = vunpack.c.l.b16 %v6221
        %v6293 = vunpack.c.l.b16 %v6222
        %v6294 = vunpack.c.l.b16 %v6223
        %v6295 = vunpack.c.l.b16 %v6224
        %v6296 = vunpack.c.l.b16 %v6225
        %v6297 = vunpack.c.l.b16 %v6226
        %v6298 = vpack.c.b16 %v6267, %v6266
        %v6299 = vpack.c.b16 %v6269, %v6268
        %v6300 = vpack.c.b16 %v6271, %v6270
        %v6301 = vpack.c.b16 %v6273, %v6272
        %v6302 = vpack.c.b16 %v6275, %v6274
        %v6303 = vpack.c.b16 %v6277, %v6276
        %v6304 = vpack.c.b16 %v6279, %v6278
        %v6305 = vpack.c.b16 %v6281, %v6280
        %v6306 = vpack.c.b16 %v6283, %v6282
        %v6307 = vpack.c.b16 %v6285, %v6284
        %v6308 = vpack.c.b16 %v6287, %v6286
        %v6309 = vpack.c.b16 %v6289, %v6288
        %v6310 = vpack.c.b16 %v6291, %v6290
        %v6311 = vpack.c.b16 %v6293, %v6292
        %v6312 = vpack.c.b16 %v6295, %v6294
        %v6313 = vpack.c.b16 %v6297, %v6296
        %6330 = vmatprep.subr.bf16.mxu0 0
        %6331 = vmatpush1.bf16.msra.mxu0 %v6298
        %6332 = vmatprep.subr.bf16.mxu0 0
        %6333 = vmatpush1.bf16.msra.mxu0 %v6299
        %6334 = vmatprep.subr.bf16.mxu0 0
        %6335 = vmatpush1.bf16.msra.mxu0 %v6300
        %6336 = vmatprep.subr.bf16.mxu0 0
        %6337 = vmatpush1.bf16.msra.mxu0 %v6301
        %6338 = vmatprep.subr.bf16.mxu0 0
        %6339 = vmatpush1.bf16.msra.mxu0 %v6302
        %6340 = vmatprep.subr.bf16.mxu0 0
        %6341 = vmatpush1.bf16.msra.mxu0 %v6303
        %6342 = vmatprep.subr.bf16.mxu0 0
        %6343 = vmatpush1.bf16.msra.mxu0 %v6304
        %6344 = vmatprep.subr.bf16.mxu0 0
        %6345 = vmatpush1.bf16.msra.mxu0 %v6305
        %6346 = vmatprep.subr.bf16.mxu0 0
        %6347 = vmatpush1.bf16.msra.mxu0 %v6306
        %6348 = vmatprep.subr.bf16.mxu0 0
        %6349 = vmatpush1.bf16.msra.mxu0 %v6307
        %6350 = vmatprep.subr.bf16.mxu0 0
        %6351 = vmatpush1.bf16.msra.mxu0 %v6308
        %6352 = vmatprep.subr.bf16.mxu0 0
        %6353 = vmatpush1.bf16.msra.mxu0 %v6309
        %6354 = vmatprep.subr.bf16.mxu0 0
        %6355 = vmatpush1.bf16.msra.mxu0 %v6310
        %6356 = vmatprep.subr.bf16.mxu0 0
        %6357 = vmatpush1.bf16.msra.mxu0 %v6311
        %6358 = vmatprep.subr.bf16.mxu0 0
        %6359 = vmatpush1.bf16.msra.mxu0 %v6312
        %6360 = vmatprep.subr.bf16.mxu0 0
        %6361 = vmatpush1.bf16.msra.mxu0 %v6313
        %6362 = vmatprep.mubr.bf16.mxu0 %v6194
        %6363 = vmatmul.mubr.bf16.gmra.mrb[0].mxu0 %v6193
        %v6364 = vpop.f32.mrb[0].mxu0
        %v6365 = vadd.f32 %v6232, %v6364
        %v6366 = vpop.f32.mrb[0].mxu0
        %v6367 = vpop.f32.mrb[0].mxu0
        %v6368 = vpop.f32.mrb[0].mxu0
        %6369 = vdwg.mxu0
        %6370 = vst [vmem:[%s343] sm:$0xff] %v6365
        %s6371 = sand.u32 %s226, 1
        %s6372 = scalar_lea.sflag [#allocation4], %s6371
        %s6373 = sand.u32 %s226, 1
        %s6374 = smul.addr %s6373, 8
        %s6375 = scalar_lea.vmem [#allocation5], %s6374
        // Predicated region
        $region61: #{tpu_custom_call.1} parent=55 // pred_check
          %p6376 = pneg %p236
        $region62: #{tpu_custom_call.1} parent=55 // pred_check_branch
          %6378 = sbr.rel (%p6376) target = $region64
        $region63: #{tpu_custom_call.1} parent=55 // pred_region
          %s6380 = ssub.s32 128, 128
          %6381 = vsyncadd %s6372, %s6380
          %s6382 = smul.addr %s24, 128
          %s6383 = scalar_lea.hbm %s9, %s6382
          %s6385 = sshll.u32 %s6375, 4
          %s6386 = int_to_ptr.vmem [resolvable:$true] %s6385
          %6388 = dma.vmem_to_hbm [thread:$0]  %s6386, 128, %s6383, %s6372
        $region64: #{tpu_custom_call.1} parent=55 // pred_fallthru
          _
      $region56: #{tpu_custom_call.1} parent=5 // pred_fallthru
        _
      %p6389 = scmp.le.s32.totalorder 2, %s19
      // Predicated region
      $region65: #{tpu_custom_call.1} parent=5 // pred_check
        %p6390 = pneg %p6389
      $region66: #{tpu_custom_call.1} parent=5 // pred_check_branch
        %6392 = sbr.rel (%p6390) target = $region68
      $region67: #{tpu_custom_call.1} parent=5 // pred_region
        %s6393 = ssub.s32 %s19, 2
        // Predicated region
        $region69: #{tpu_custom_call.1} parent=67 // pred_check
          %p6394 = pneg %p242
        $region70: #{tpu_custom_call.1} parent=67 // pred_check_branch
          %6396 = sbr.rel (%p6394) target = $region72
        $region71: #{tpu_custom_call.1} parent=67 // pred_region
          %s6397 = sand.u32 %s227, 1
          %s6398 = scalar_lea.sflag [#allocation4], %s6397
          %s6399 = sand.u32 %s227, 1
          %s6400 = smul.addr %s6399, 8
          %s6401 = scalar_lea.vmem [#allocation5], %s6400
          %6402 = dma.done %s6398, 128
        $region72: #{tpu_custom_call.1} parent=67 // pred_fallthru
          _
      $region68: #{tpu_custom_call.1} parent=5 // pred_fallthru
        _
    $region6: #{tpu_custom_call.1} parent=1 // loop_footer
      %s23 = sadd.s32 1, %s19
    $region7: #{tpu_custom_call.1} parent=1 // loop_footer_branch
      %18 = sbr.rel target = $region3
    $region8: #{tpu_custom_call.1} parent=1 // loop_exit
      _
    %6403 = vsyncpa [#allocation3], 1
    %s6404 = scalar_lea.sflag [#allocation3], 1
    %6405 = vsyncpa %s6404, 1
    %6406 = vsyncpa [#allocation4], 1
    %s6407 = scalar_lea.sflag [#allocation4], 1
    %6408 = vsyncpa %s6407, 1

</llo_original>
